<compile_context>
chip_gen: v7x
topology: tpu7x:2x2x1
jax: 0.10.0
libtpu: 0.0.40
codegen_flags: <defaults>
</compile_context>

<pallas_src>
import functools
import math

import jax
import jax.numpy as jnp
from jax import lax
from jax.experimental import pallas as pl
from jax.experimental.pallas import tpu as pltpu


# ----------------------------------------------------------------------------
# Kernel 1: token-embedding gather (HBM table, scalar-prefetched ids) + pos add
# ----------------------------------------------------------------------------
def _embed_kernel(ids_ref, table_hbm, pos_ref, out_ref, row_buf, sem):
    b = pl.program_id(0)
    seq = out_ref.shape[1]

    def start_fetch(s, slot):
        pltpu.make_async_copy(
            table_hbm.at[pl.ds(ids_ref[b, s], 1), :],
            row_buf.at[pl.ds(slot, 1), :],
            sem.at[slot],
        ).start()

    # Prime the pipeline with row 0.
    start_fetch(0, 0)

    @pl.loop(0, seq)
    def _(s):
        slot = s % 2
        # Wait for the row we are about to consume.
        pltpu.make_async_copy(
            table_hbm.at[pl.ds(0, 1), :],
            row_buf.at[pl.ds(slot, 1), :],
            sem.at[slot],
        ).wait()

        # Prefetch the next row while we add the positional embedding.
        @pl.when(s + 1 < seq)
        def _():
            start_fetch(s + 1, 1 - slot)

        row = row_buf[pl.ds(slot, 1), :]
        out_ref[0, pl.ds(s, 1), :] = (
            row + pos_ref[pl.ds(s, 1), :]
        ).astype(out_ref.dtype)


def pallas_token_embed(token_ids, table, pos_emb):
    B, S = token_ids.shape
    _, D = table.shape
    return pl.pallas_call(
        _embed_kernel,
        out_shape=jax.ShapeDtypeStruct((B, S, D), table.dtype),
        grid_spec=pltpu.PrefetchScalarGridSpec(
            num_scalar_prefetch=1,
            grid=(B,),
            in_specs=[
                pl.BlockSpec(memory_space=pl.ANY),            # vocab table stays in HBM
                pl.BlockSpec((S, D), lambda b, ids: (0, 0)),  # positional table in VMEM
            ],
            out_specs=pl.BlockSpec((1, S, D), lambda b, ids: (b, 0, 0)),
            scratch_shapes=[
                pltpu.VMEM((2, D), table.dtype),              # double-buffered row
                pltpu.SemaphoreType.DMA((2,)),
            ],
        ),
        compiler_params=pltpu.CompilerParams(dimension_semantics=("parallel",)),
    )(token_ids.astype(jnp.int32), table, pos_emb)


# ----------------------------------------------------------------------------
# Kernel 2: LayerNorm (per-batch block)
# ----------------------------------------------------------------------------
def _layernorm_kernel(x_ref, g_ref, b_ref, o_ref, *, eps):
    x = x_ref[...].astype(jnp.float32)                 # (1, S, D)
    mu = jnp.mean(x, axis=-1, keepdims=True)
    var = jnp.mean(jnp.square(x - mu), axis=-1, keepdims=True)
    y = (x - mu) * lax.rsqrt(var + eps)
    y = y * g_ref[...].astype(jnp.float32) + b_ref[...].astype(jnp.float32)
    o_ref[...] = y.astype(o_ref.dtype)


def pallas_layer_norm(x, gamma, beta, eps=1e-5):
    B, S, D = x.shape
    g2 = gamma.reshape(1, D)
    b2 = beta.reshape(1, D)
    return pl.pallas_call(
        functools.partial(_layernorm_kernel, eps=eps),
        out_shape=jax.ShapeDtypeStruct((B, S, D), x.dtype),
        grid=(B,),
        in_specs=[
            pl.BlockSpec((1, S, D), lambda b: (b, 0, 0)),
            pl.BlockSpec((1, D), lambda b: (0, 0)),
            pl.BlockSpec((1, D), lambda b: (0, 0)),
        ],
        out_specs=pl.BlockSpec((1, S, D), lambda b: (b, 0, 0)),
        compiler_params=pltpu.CompilerParams(dimension_semantics=("parallel",)),
    )(x, g2, b2)


# ----------------------------------------------------------------------------
# Kernel 3: Linear (+ optional quickGELU, + optional residual), tiled over N
# ----------------------------------------------------------------------------
def _linear_kernel(x_ref, w_ref, b_ref, *rest, activation=None, has_residual=False):
    if has_residual:
        r_ref, o_ref = rest
    else:
        (o_ref,) = rest
    y = jnp.dot(
        x_ref[...].astype(jnp.float32),
        w_ref[...].astype(jnp.float32),
        preferred_element_type=jnp.float32,
    )
    y = y + b_ref[...].astype(jnp.float32)
    if activation == "quick_gelu":
        y = y * jax.nn.sigmoid(1.702 * y)
    if has_residual:
        y = y + r_ref[...].astype(jnp.float32)
    o_ref[...] = y.astype(o_ref.dtype)


def pallas_linear(x, w, b, residual=None, activation=None, tn=128):
    M, K = x.shape
    _, N = w.shape
    assert N % tn == 0, (N, tn)
    b2 = b.reshape(1, N)
    has_res = residual is not None

    in_specs = [
        pl.BlockSpec((M, K), lambda j: (0, 0)),
        pl.BlockSpec((K, tn), lambda j: (0, j)),
        pl.BlockSpec((1, tn), lambda j: (0, j)),
    ]
    args = [x, w, b2]
    if has_res:
        in_specs.append(pl.BlockSpec((M, tn), lambda j: (0, j)))
        args.append(residual)

    return pl.pallas_call(
        functools.partial(_linear_kernel, activation=activation, has_residual=has_res),
        out_shape=jax.ShapeDtypeStruct((M, N), x.dtype),
        grid=(N // tn,),
        in_specs=in_specs,
        out_specs=pl.BlockSpec((M, tn), lambda j: (0, j)),
        compiler_params=pltpu.CompilerParams(dimension_semantics=("parallel",)),
    )(*args)


# ----------------------------------------------------------------------------
# Kernel 4: causal self-attention, one (batch, head) per grid step
# ----------------------------------------------------------------------------
def _causal_attention_kernel(q_ref, k_ref, v_ref, o_ref, *, scale):
    q = q_ref[0, 0].astype(jnp.float32) * scale        # (S, hd)
    k = k_ref[0, 0].astype(jnp.float32)                # (S, hd)
    v = v_ref[0, 0].astype(jnp.float32)                # (S, hd)

    s = lax.dot_general(                               # (S, S) = q @ k^T
        q, k, (((1,), (1,)), ((), ())), preferred_element_type=jnp.float32
    )
    n = s.shape[0]
    row = lax.broadcasted_iota(jnp.int32, (n, n), 0)
    col = lax.broadcasted_iota(jnp.int32, (n, n), 1)
    s = jnp.where(col <= row, s, -1e30)                # causal mask (CLIP text)

    m = jnp.max(s, axis=-1, keepdims=True)
    p = jnp.exp(s - m)
    denom = jnp.sum(p, axis=-1, keepdims=True)
    out = jnp.dot(p, v, preferred_element_type=jnp.float32) / denom
    o_ref[0, 0] = out.astype(o_ref.dtype)


def pallas_causal_attention(q, k, v, *, scale):
    B, H, S, hd = q.shape
    spec = pl.BlockSpec((1, 1, S, hd), lambda b, h: (b, h, 0, 0))
    return pl.pallas_call(
        functools.partial(_causal_attention_kernel, scale=scale),
        out_shape=jax.ShapeDtypeStruct((B, H, S, hd), q.dtype),
        grid=(B, H),
        in_specs=[spec, spec, spec],
        out_specs=spec,
        compiler_params=pltpu.CompilerParams(
            dimension_semantics=("parallel", "parallel")
        ),
    )(q, k, v)


# ----------------------------------------------------------------------------
# Full CLIP text encoder forward (composition of the Pallas kernels above)
# ----------------------------------------------------------------------------
def _clip_text_forward(params, token_ids, *, num_heads):
    x = pallas_token_embed(
        token_ids, params["token_embedding"], params["position_embedding"]
    )
    B, S, D = x.shape
    hd = D // num_heads
    scale = 1.0 / math.sqrt(hd)

    for layer in params["layers"]:
        # --- self-attention block (pre-LN, causal) ---
        h = pallas_layer_norm(x, layer["ln1_scale"], layer["ln1_bias"])
        qkv = pallas_linear(h.reshape(B * S, D), layer["attn_qkv_w"], layer["attn_qkv_b"])
        q, k, v = jnp.split(qkv, 3, axis=-1)

        def heads(t):
            return t.reshape(B, S, num_heads, hd).transpose(0, 2, 1, 3)

        attn = pallas_causal_attention(heads(q), heads(k), heads(v), scale=scale)
        attn = attn.transpose(0, 2, 1, 3).reshape(B * S, D)
        x = pallas_linear(
            attn, layer["attn_out_w"], layer["attn_out_b"],
            residual=x.reshape(B * S, D),
        ).reshape(B, S, D)

        # --- MLP block (pre-LN, quickGELU) ---
        h = pallas_layer_norm(x, layer["ln2_scale"], layer["ln2_bias"])
        m = pallas_linear(
            h.reshape(B * S, D), layer["mlp_fc1_w"], layer["mlp_fc1_b"],
            activation="quick_gelu",
        )
        x = pallas_linear(
            m, layer["mlp_fc2_w"], layer["mlp_fc2_b"],
            residual=x.reshape(B * S, D),
        ).reshape(B, S, D)

    return pallas_layer_norm(x, params["ln_final_scale"], params["ln_final_bias"])


# ----------------------------------------------------------------------------
# Pure-jnp reference (for validation only)
# ----------------------------------------------------------------------------
def _reference_forward(params, token_ids, *, num_heads):
    x = params["token_embedding"][token_ids] + params["position_embedding"][None]
    B, S, D = x.shape
    hd = D // num_heads
    scale = 1.0 / math.sqrt(hd)

    def ln(t, g, b, eps=1e-5):
        mu = jnp.mean(t, axis=-1, keepdims=True)
        var = jnp.mean(jnp.square(t - mu), axis=-1, keepdims=True)
        return (t - mu) * lax.rsqrt(var + eps) * g + b

    mask = jnp.tril(jnp.ones((S, S), dtype=bool))
    for layer in params["layers"]:
        h = ln(x, layer["ln1_scale"], layer["ln1_bias"])
        qkv = h @ layer["attn_qkv_w"] + layer["attn_qkv_b"]
        q, k, v = jnp.split(qkv, 3, axis=-1)

        def heads(t):
            return t.reshape(B, S, num_heads, hd).transpose(0, 2, 1, 3)

        q, k, v = heads(q), heads(k), heads(v)
        s = jnp.einsum("bhqd,bhkd->bhqk", q, k) * scale
        s = jnp.where(mask[None, None], s, -1e30)
        p = jax.nn.softmax(s, axis=-1)
        o = jnp.einsum("bhqk,bhkd->bhqd", p, v)
        o = o.transpose(0, 2, 1, 3).reshape(B, S, D)
        x = o @ layer["attn_out_w"] + layer["attn_out_b"] + x

        h = ln(x, layer["ln2_scale"], layer["ln2_bias"])
        m = h @ layer["mlp_fc1_w"] + layer["mlp_fc1_b"]
        m = m * jax.nn.sigmoid(1.702 * m)
        x = m @ layer["mlp_fc2_w"] + layer["mlp_fc2_b"] + x

    return ln(x, params["ln_final_scale"], params["ln_final_bias"])


# ----------------------------------------------------------------------------
# Parameters (deterministic random init, CLIP text-model structure)
# ----------------------------------------------------------------------------
def _init_params(key, *, vocab_size, max_length, hidden, num_layers, mlp_dim):
    std = 0.02
    keys = jax.random.split(key, 2 + num_layers)
    params = {
        "token_embedding": std * jax.random.normal(keys[0], (vocab_size, hidden), jnp.float32),
        "position_embedding": std * jax.random.normal(keys[1], (max_length, hidden), jnp.float32),
        "ln_final_scale": jnp.ones((hidden,), jnp.float32),
        "ln_final_bias": jnp.zeros((hidden,), jnp.float32),
        "layers": [],
    }
    for i in range(num_layers):
        lk = jax.random.split(keys[2 + i], 4)
        params["layers"].append({
            "ln1_scale": jnp.ones((hidden,), jnp.float32),
            "ln1_bias": jnp.zeros((hidden,), jnp.float32),
            "attn_qkv_w": std * jax.random.normal(lk[0], (hidden, 3 * hidden), jnp.float32),
            "attn_qkv_b": jnp.zeros((3 * hidden,), jnp.float32),
            "attn_out_w": std * jax.random.normal(lk[1], (hidden, hidden), jnp.float32),
            "attn_out_b": jnp.zeros((hidden,), jnp.float32),
            "ln2_scale": jnp.ones((hidden,), jnp.float32),
            "ln2_bias": jnp.zeros((hidden,), jnp.float32),
            "mlp_fc1_w": std * jax.random.normal(lk[2], (hidden, mlp_dim), jnp.float32),
            "mlp_fc1_b": jnp.zeros((mlp_dim,), jnp.float32),
            "mlp_fc2_w": std * jax.random.normal(lk[3], (mlp_dim, hidden), jnp.float32),
            "mlp_fc2_b": jnp.zeros((hidden,), jnp.float32),
        })
    return params


# ----------------------------------------------------------------------------
# Module classes mirroring the PyTorch reference
# ----------------------------------------------------------------------------
class TextEmbedder:
    """Abstract base — mirrors the PyTorch TextEmbedder."""

    def __init__(self):
        pass

    def forward(self, *args, **kwargs):
        raise NotImplementedError

    def __call__(self, *args, **kwargs):
        return self.forward(*args, **kwargs)

    def encode(self, *args, **kwargs):
        raise NotImplementedError


class ClipTextEmbedder(TextEmbedder):
    """CLIP text embedder: returns the transformer's last_hidden_state."""

    def __init__(self, version="demo-clip", max_length=77, pretrained_weights=None,
                 vocab_size=1000, hidden=128, num_heads=2, num_layers=2, mlp_ratio=4):
        super().__init__()
        # TODO(synk): pretrained CLIP weights cannot be fetched in-script;
        # deterministic random init with identical parameter structure instead.
        del version, pretrained_weights
        self.max_length = max_length
        self.vocab_size = vocab_size
        self.num_heads = num_heads
        self.hidden = hidden
        self.params = _init_params(
            jax.random.PRNGKey(0),
            vocab_size=vocab_size, max_length=max_length, hidden=hidden,
            num_layers=num_layers, mlp_dim=mlp_ratio * hidden,
        )
        self.freeze()
        self._forward = jax.jit(functools.partial(_clip_text_forward, num_heads=num_heads))

    def freeze(self):
        # Inference-only port: no gradients are ever taken (mirrors requires_grad=False).
        self._frozen = True

    def forward(self, token_ids):
        # TODO(synk): CLIPTokenizer (raw text -> ids) has no Pallas/JAX equivalent;
        # forward takes already-tokenized, max_length-padded int32 ids of shape (B, 77).
        token_ids = jnp.asarray(token_ids, jnp.int32)
        return self._forward(self.params, token_ids)

    def encode(self, token_ids):
        return self(token_ids)


# ----------------------------------------------------------------------------
# Demo / self-test
# ----------------------------------------------------------------------------
if __name__ == "__main__":
    # Base-class interface parity (forward/encode raise, like the nn.Module).
    base = TextEmbedder()
    for fn in (base.forward, base.encode):
        try:
            fn()
            raise AssertionError("expected NotImplementedError")
        except NotImplementedError:
            pass

    embedder = ClipTextEmbedder("openai/clip-vit-base-patch32")

    B = 2
    key = jax.random.PRNGKey(0)
    token_ids = jax.random.randint(
        key, (B, embedder.max_length), 0, embedder.vocab_size, dtype=jnp.int32
    )

    z = embedder.encode(token_ids)            # last_hidden_state
    z = jax.block_until_ready(z)
    assert z.shape == (B, embedder.max_length, embedder.hidden)
    assert bool(jnp.isfinite(z).all())

    ref = _reference_forward(embedder.params, token_ids, num_heads=embedder.num_heads)
    ref = jax.block_until_ready(ref)
    max_err = float(jnp.max(jnp.abs(z - ref)))
    assert max_err < 5e-2, f"max abs error vs jnp reference: {max_err}"

    print("KERNEL_OK")
</pallas_src>

<mosaic_0001>
module attributes {stable_mosaic.version = 11 : i64} {
  func.func @_layernorm_kernel(%arg0: i32, %arg1: memref<1x77x128xf32, #tpu.memory_space<vmem>>, %arg2: memref<1x128xf32, #tpu.memory_space<vmem>>, %arg3: memref<1x128xf32, #tpu.memory_space<vmem>>, %arg4: memref<1x77x128xf32, #tpu.memory_space<vmem>>) attributes {dimension_semantics = [#tpu.dimension_semantics<parallel>], iteration_bounds = array<i64: 2>, scalar_prefetch = 0 : i64, scratch_operands = 0 : i64, tpu.core_type = #tpu.core_type<tc>, window_params = [{transform_indices = @transform_0, window_bounds = array<i64: 1, 77, 128>}, {pipeline_mode = #tpu.pipeline_mode<synchronous>, transform_indices = @transform_1, window_bounds = array<i64: 1, 128>}, {pipeline_mode = #tpu.pipeline_mode<synchronous>, transform_indices = @transform_2, window_bounds = array<i64: 1, 128>}, {transform_indices = @transform_3, window_bounds = array<i64: 1, 77, 128>}]} {
    %c0 = arith.constant 0 : index
    %c0_0 = arith.constant 0 : index
    %c0_1 = arith.constant 0 : index
    %0 = vector.load %arg1[%c0, %c0_0, %c0_1] : memref<1x77x128xf32, #tpu.memory_space<vmem>>, vector<1x77x128xf32>
    %cst = arith.constant dense<0.000000e+00> : vector<1x77xf32>
    %1 = vector.multi_reduction <add>, %0, %cst [2] : vector<1x77x128xf32> to vector<1x77xf32>
    %2 = vector.shape_cast %1 : vector<1x77xf32> to vector<1x77x1xf32>
    %cst_2 = arith.constant 1.280000e+02 : f32
    %3 = vector.broadcast %cst_2 : f32 to vector<1x77x1xf32>
    %4 = arith.divf %2, %3 : vector<1x77x1xf32>
    %5 = vector.broadcast %4 : vector<1x77x1xf32> to vector<1x77x128xf32>
    %6 = arith.subf %0, %5 : vector<1x77x128xf32>
    %7 = arith.mulf %6, %6 : vector<1x77x128xf32>
    %cst_3 = arith.constant dense<0.000000e+00> : vector<1x77xf32>
    %8 = vector.multi_reduction <add>, %7, %cst_3 [2] : vector<1x77x128xf32> to vector<1x77xf32>
    %9 = vector.shape_cast %8 : vector<1x77xf32> to vector<1x77x1xf32>
    %cst_4 = arith.constant 1.280000e+02 : f32
    %10 = vector.broadcast %cst_4 : f32 to vector<1x77x1xf32>
    %11 = arith.divf %9, %10 : vector<1x77x1xf32>
    %12 = vector.broadcast %4 : vector<1x77x1xf32> to vector<1x77x128xf32>
    %13 = arith.subf %0, %12 : vector<1x77x128xf32>
    %cst_5 = arith.constant 9.99999974E-6 : f32
    %14 = vector.broadcast %cst_5 : f32 to vector<1x77x1xf32>
    %15 = arith.addf %11, %14 : vector<1x77x1xf32>
    %16 = math.rsqrt %15 : vector<1x77x1xf32>
    %17 = vector.broadcast %16 : vector<1x77x1xf32> to vector<1x77x128xf32>
    %18 = arith.mulf %13, %17 : vector<1x77x128xf32>
    %c0_6 = arith.constant 0 : index
    %c0_7 = arith.constant 0 : index
    %19 = vector.load %arg2[%c0_6, %c0_7] : memref<1x128xf32, #tpu.memory_space<vmem>>, vector<1x128xf32>
    %20 = vector.shape_cast %19 : vector<1x128xf32> to vector<1x1x128xf32>
    %21 = vector.broadcast %20 : vector<1x1x128xf32> to vector<1x77x128xf32>
    %22 = arith.mulf %18, %21 : vector<1x77x128xf32>
    %c0_8 = arith.constant 0 : index
    %c0_9 = arith.constant 0 : index
    %23 = vector.load %arg3[%c0_8, %c0_9] : memref<1x128xf32, #tpu.memory_space<vmem>>, vector<1x128xf32>
    %24 = vector.shape_cast %23 : vector<1x128xf32> to vector<1x1x128xf32>
    %25 = vector.broadcast %24 : vector<1x1x128xf32> to vector<1x77x128xf32>
    %26 = arith.addf %22, %25 : vector<1x77x128xf32>
    %c0_10 = arith.constant 0 : index
    %c0_11 = arith.constant 0 : index
    %c0_12 = arith.constant 0 : index
    %27 = vector.load %arg4[%c0_10, %c0_11, %c0_12] : memref<1x77x128xf32, #tpu.memory_space<vmem>>, vector<1x77x128xf32>
    tpu.vector_store %arg4[%c0_10, %c0_11, %c0_12], %26 {strides = array<i32>} : memref<1x77x128xf32, #tpu.memory_space<vmem>>, vector<1x77x128xf32>,
    return
  }
  func.func @transform_0(%arg0: i32) -> (i32, i32, i32) {
    %c0_i32 = arith.constant 0 : i32
    %c0_i32_0 = arith.constant 0 : i32
    %c0_i32_1 = arith.constant 0 : i32
    return %arg0, %c0_i32, %c0_i32_0 : i32, i32, i32
  }
  func.func @transform_1(%arg0: i32) -> (i32, i32) {
    %c0_i32 = arith.constant 0 : i32
    %c0_i32_0 = arith.constant 0 : i32
    %c0_i32_1 = arith.constant 0 : i32
    return %c0_i32, %c0_i32_0 : i32, i32
  }
  func.func @transform_2(%arg0: i32) -> (i32, i32) {
    %c0_i32 = arith.constant 0 : i32
    %c0_i32_0 = arith.constant 0 : i32
    %c0_i32_1 = arith.constant 0 : i32
    return %c0_i32, %c0_i32_0 : i32, i32
  }
  func.func @transform_3(%arg0: i32) -> (i32, i32, i32) {
    %c0_i32 = arith.constant 0 : i32
    %c0_i32_0 = arith.constant 0 : i32
    %c0_i32_1 = arith.constant 0 : i32
    return %arg0, %c0_i32, %c0_i32_0 : i32, i32, i32
  }
}

module attributes {stable_mosaic.version = 11 : i64} {
  func.func @_embed_kernel(%arg0: i32, %arg1: memref<2x77xi32, #tpu.memory_space<smem>>, %arg2: memref<1000x128xf32, #tpu.memory_space<any>>, %arg3: memref<77x128xf32, #tpu.memory_space<vmem>>, %arg4: memref<1x77x128xf32, #tpu.memory_space<vmem>>, %arg5: memref<2x128xf32, #tpu.memory_space<vmem>>, %arg6: memref<2x!tpu.dma_semaphore, #tpu.memory_space<semaphore_mem>>) attributes {dimension_semantics = [#tpu.dimension_semantics<parallel>], iteration_bounds = array<i64: 2>, scalar_prefetch = 1 : i64, scratch_operands = 2 : i64, tpu.core_type = #tpu.core_type<tc>, window_params = [{}, {pipeline_mode = #tpu.pipeline_mode<synchronous>, transform_indices = @transform_1, window_bounds = array<i64: 77, 128>}, {transform_indices = @transform_2, window_bounds = array<i64: 1, 77, 128>}]} {
    %0 = arith.index_cast %arg0 : i32 to index
    %c0 = arith.constant 0 : index
    %1 = memref.load %arg1[%0, %c0] : memref<2x77xi32, #tpu.memory_space<smem>>
    %c0_i32 = arith.constant 0 : i32
    %c0_i32_0 = arith.constant 0 : i32
    %2 = tpu.memref_slice %arg2[%1, %c0_i32_0] : memref<1000x128xf32, #tpu.memory_space<any>> -> memref<1x128xf32, #tpu.memory_space<any>>
    %c0_i32_1 = arith.constant 0 : i32
    %c0_i32_2 = arith.constant 0 : i32
    %3 = tpu.memref_slice %arg5[%c0_i32_1, %c0_i32_2] : memref<2x128xf32, #tpu.memory_space<vmem>> -> memref<1x128xf32, #tpu.memory_space<vmem>>
    %4 = tpu.memref_slice %arg6[%c0_i32] : memref<2x!tpu.dma_semaphore, #tpu.memory_space<semaphore_mem>> -> memref<1x!tpu.dma_semaphore, #tpu.memory_space<semaphore_mem>>
    %5 = tpu.memref_squeeze %4 : memref<1x!tpu.dma_semaphore, #tpu.memory_space<semaphore_mem>> -> memref<!tpu.dma_semaphore, #tpu.memory_space<semaphore_mem>>
    tpu.enqueue_dma source(%2 : memref<1x128xf32, #tpu.memory_space<any>>) target(%3 : memref<1x128xf32, #tpu.memory_space<vmem>>) target_semaphore(%5 : memref<!tpu.dma_semaphore, #tpu.memory_space<semaphore_mem>>)
    %c0_i32_3 = arith.constant 0 : i32
    %c77_i32 = arith.constant 77 : i32
    %6 = arith.addi %c0_i32_3, %c77_i32 : i32
    %c1_i32 = arith.constant 1 : i32
    scf.for %arg7 = %c0_i32_3 to %6 step %c1_i32  : i32 {
      %c1_i32_5 = arith.constant 1 : i32
      %7 = arith.muli %arg7, %c1_i32_5 : i32
      %c0_i32_6 = arith.constant 0 : i32
      %8 = arith.addi %c0_i32_6, %7 : i32
      %c2_i32 = arith.constant 2 : i32
      %c0_i32_7 = arith.constant 0 : i32
      %9 = arith.cmpi eq, %c2_i32, %c0_i32_7 : i32
      %c1_i32_8 = arith.constant 1 : i32
      %10 = arith.select %9, %c1_i32_8, %c2_i32 : i32
      %11 = arith.remsi %8, %10 : i32
      %c0_i32_9 = arith.constant 0 : i32
      %12 = arith.cmpi ne, %11, %c0_i32_9 : i32
      %c0_i32_10 = arith.constant 0 : i32
      %13 = arith.cmpi slt, %11, %c0_i32_10 : i32
      %c0_i32_11 = arith.constant 0 : i32
      %14 = arith.cmpi slt, %10, %c0_i32_11 : i32
      %15 = arith.xori %13, %14 : i1
      %16 = arith.andi %15, %12 : i1
      %17 = arith.addi %11, %10 : i32
      %18 = arith.select %16, %17, %11 : i32
      %c0_i32_12 = arith.constant 0 : i32
      %c0_i32_13 = arith.constant 0 : i32
      %19 = tpu.memref_slice %arg2[%c0_i32_12, %c0_i32_13] : memref<1000x128xf32, #tpu.memory_space<any>> -> memref<1x128xf32, #tpu.memory_space<any>>
      %c0_i32_14 = arith.constant 0 : i32
      %20 = tpu.memref_slice %arg5[%18, %c0_i32_14] : memref<2x128xf32, #tpu.memory_space<vmem>> -> memref<1x128xf32, #tpu.memory_space<vmem>>
      %21 = tpu.memref_slice %arg6[%18] : memref<2x!tpu.dma_semaphore, #tpu.memory_space<semaphore_mem>> -> memref<1x!tpu.dma_semaphore, #tpu.memory_space<semaphore_mem>>
      %22 = tpu.memref_squeeze %21 : memref<1x!tpu.dma_semaphore, #tpu.memory_space<semaphore_mem>> -> memref<!tpu.dma_semaphore, #tpu.memory_space<semaphore_mem>>
      tpu.wait_dma2 semaphore(%22 : memref<!tpu.dma_semaphore, #tpu.memory_space<semaphore_mem>>) src(%19 : memref<1x128xf32, #tpu.memory_space<any>>) dst(%20 : memref<1x128xf32, #tpu.memory_space<vmem>>)
      %c1_i32_15 = arith.constant 1 : i32
      %23 = arith.addi %8, %c1_i32_15 : i32
      %c77_i32_16 = arith.constant 77 : i32
      %24 = arith.cmpi slt, %23, %c77_i32_16 : i32
      %25 = arith.extui %24 : i1 to i32
      %c0_i32_17 = arith.constant 0 : i32
      %26 = arith.cmpi ne, %25, %c0_i32_17 : i32
      scf.if %26 {
        %c1_i32_22 = arith.constant 1 : i32
        %36 = arith.addi %8, %c1_i32_22 : i32
        %c1_i32_23 = arith.constant 1 : i32
        %37 = arith.subi %c1_i32_23, %18 : i32
        %38 = arith.index_cast %arg0 : i32 to index
        %39 = arith.index_cast %36 : i32 to index
        %40 = memref.load %arg1[%38, %39] : memref<2x77xi32, #tpu.memory_space<smem>>
        %c0_i32_24 = arith.constant 0 : i32
        %41 = tpu.memref_slice %arg2[%40, %c0_i32_24] : memref<1000x128xf32, #tpu.memory_space<any>> -> memref<1x128xf32, #tpu.memory_space<any>>
        %c0_i32_25 = arith.constant 0 : i32
        %42 = tpu.memref_slice %arg5[%37, %c0_i32_25] : memref<2x128xf32, #tpu.memory_space<vmem>> -> memref<1x128xf32, #tpu.memory_space<vmem>>
        %43 = tpu.memref_slice %arg6[%37] : memref<2x!tpu.dma_semaphore, #tpu.memory_space<semaphore_mem>> -> memref<1x!tpu.dma_semaphore, #tpu.memory_space<semaphore_mem>>
        %44 = tpu.memref_squeeze %43 : memref<1x!tpu.dma_semaphore, #tpu.memory_space<semaphore_mem>> -> memref<!tpu.dma_semaphore, #tpu.memory_space<semaphore_mem>>
        tpu.enqueue_dma source(%41 : memref<1x128xf32, #tpu.memory_space<any>>) target(%42 : memref<1x128xf32, #tpu.memory_space<vmem>>) target_semaphore(%44 : memref<!tpu.dma_semaphore, #tpu.memory_space<semaphore_mem>>)
      } else {
      }
      %27 = arith.index_cast %18 : i32 to index
      %c0_18 = arith.constant 0 : index
      %28 = vector.load %arg5[%27, %c0_18] : memref<2x128xf32, #tpu.memory_space<vmem>>, vector<1x128xf32>
      %29 = arith.index_cast %8 : i32 to index
      %c0_19 = arith.constant 0 : index
      %30 = vector.load %arg3[%29, %c0_19] : memref<77x128xf32, #tpu.memory_space<vmem>>, vector<1x128xf32>
      %31 = arith.addf %28, %30 : vector<1x128xf32>
      %c0_20 = arith.constant 0 : index
      %32 = arith.index_cast %8 : i32 to index
      %c0_21 = arith.constant 0 : index
      %33 = vector.load %arg4[%c0_20, %32, %c0_21] : memref<1x77x128xf32, #tpu.memory_space<vmem>>, vector<1x1x128xf32>
      %34 = vector.shape_cast %33 : vector<1x1x128xf32> to vector<1x128xf32>
      %35 = vector.shape_cast %31 : vector<1x128xf32> to vector<1x1x128xf32>
      tpu.vector_store %arg4[%c0_20, %32, %c0_21], %35 {strides = array<i32>} : memref<1x77x128xf32, #tpu.memory_space<vmem>>, vector<1x1x128xf32>,
    }
    %c77_i32_4 = arith.constant 77 : i32
    return
  }
  func.func @transform_1(%arg0: i32, %arg1: memref<2x77xi32, #tpu.memory_space<smem>>) -> (i32, i32) {
    %c0_i32 = arith.constant 0 : i32
    %c0_i32_0 = arith.constant 0 : i32
    %c0_i32_1 = arith.constant 0 : i32
    return %c0_i32, %c0_i32_0 : i32, i32
  }
  func.func @transform_2(%arg0: i32, %arg1: memref<2x77xi32, #tpu.memory_space<smem>>) -> (i32, i32, i32) {
    %c0_i32 = arith.constant 0 : i32
    %c0_i32_0 = arith.constant 0 : i32
    %c0_i32_1 = arith.constant 0 : i32
    return %arg0, %c0_i32, %c0_i32_0 : i32, i32, i32
  }
}

module attributes {stable_mosaic.version = 11 : i64} {
  func.func @_linear_kernel(%arg0: i32, %arg1: memref<154x128xf32, #tpu.memory_space<vmem>>, %arg2: memref<128x128xf32, #tpu.memory_space<vmem>>, %arg3: memref<1x128xf32, #tpu.memory_space<vmem>>, %arg4: memref<154x128xf32, #tpu.memory_space<vmem>>) attributes {dimension_semantics = [#tpu.dimension_semantics<parallel>], iteration_bounds = array<i64: 3>, scalar_prefetch = 0 : i64, scratch_operands = 0 : i64, tpu.core_type = #tpu.core_type<tc>, window_params = [{pipeline_mode = #tpu.pipeline_mode<synchronous>, transform_indices = @transform_0, window_bounds = array<i64: 154, 128>}, {transform_indices = @transform_1, window_bounds = array<i64: 128, 128>}, {transform_indices = @transform_2, window_bounds = array<i64: 1, 128>}, {transform_indices = @transform_3, window_bounds = array<i64: 154, 128>}]} {
    %c0 = arith.constant 0 : index
    %c0_0 = arith.constant 0 : index
    %0 = vector.load %arg1[%c0, %c0_0] : memref<154x128xf32, #tpu.memory_space<vmem>>, vector<154x128xf32>
    %c0_1 = arith.constant 0 : index
    %c0_2 = arith.constant 0 : index
    %1 = vector.load %arg2[%c0_1, %c0_2] : memref<128x128xf32, #tpu.memory_space<vmem>>, vector<128x128xf32>
    %cst = arith.constant dense<0.000000e+00> : vector<154x128xf32>
    %2 = tpu.matmul %0, %1, %cst {dimension_numbers = #tpu.dot_dimension_numbers<[1], [0], [0], [1], [0, 0, 1, 1], [], []>} : vector<154x128xf32>, vector<128x128xf32>, vector<154x128xf32> -> vector<154x128xf32>
    %c0_3 = arith.constant 0 : index
    %c0_4 = arith.constant 0 : index
    %3 = vector.load %arg3[%c0_3, %c0_4] : memref<1x128xf32, #tpu.memory_space<vmem>>, vector<1x128xf32>
    %4 = vector.broadcast %3 : vector<1x128xf32> to vector<154x128xf32>
    %5 = arith.addf %2, %4 : vector<154x128xf32>
    %c0_5 = arith.constant 0 : index
    %c0_6 = arith.constant 0 : index
    %6 = vector.load %arg4[%c0_5, %c0_6] : memref<154x128xf32, #tpu.memory_space<vmem>>, vector<154x128xf32>
    tpu.vector_store %arg4[%c0_5, %c0_6], %5 {strides = array<i32>} : memref<154x128xf32, #tpu.memory_space<vmem>>, vector<154x128xf32>,
    return
  }
  func.func @transform_0(%arg0: i32) -> (i32, i32) {
    %c0_i32 = arith.constant 0 : i32
    %c0_i32_0 = arith.constant 0 : i32
    %c0_i32_1 = arith.constant 0 : i32
    return %c0_i32, %c0_i32_0 : i32, i32
  }
  func.func @transform_1(%arg0: i32) -> (i32, i32) {
    %c0_i32 = arith.constant 0 : i32
    %c0_i32_0 = arith.constant 0 : i32
    return %c0_i32, %arg0 : i32, i32
  }
  func.func @transform_2(%arg0: i32) -> (i32, i32) {
    %c0_i32 = arith.constant 0 : i32
    %c0_i32_0 = arith.constant 0 : i32
    return %c0_i32, %arg0 : i32, i32
  }
  func.func @transform_3(%arg0: i32) -> (i32, i32) {
    %c0_i32 = arith.constant 0 : i32
    %c0_i32_0 = arith.constant 0 : i32
    return %c0_i32, %arg0 : i32, i32
  }
}

module attributes {stable_mosaic.version = 11 : i64} {
  func.func @_causal_attention_kernel(%arg0: i32, %arg1: i32, %arg2: memref<1x1x77x64xf32, #tpu.memory_space<vmem>>, %arg3: memref<1x1x77x64xf32, #tpu.memory_space<vmem>>, %arg4: memref<1x1x77x64xf32, #tpu.memory_space<vmem>>, %arg5: memref<1x1x77x64xf32, #tpu.memory_space<vmem>>) attributes {dimension_semantics = [#tpu.dimension_semantics<parallel>, #tpu.dimension_semantics<parallel>], iteration_bounds = array<i64: 2, 2>, scalar_prefetch = 0 : i64, scratch_operands = 0 : i64, tpu.core_type = #tpu.core_type<tc>, window_params = [{transform_indices = @transform_0, window_bounds = array<i64: 1, 1, 77, 64>}, {transform_indices = @transform_1, window_bounds = array<i64: 1, 1, 77, 64>}, {transform_indices = @transform_2, window_bounds = array<i64: 1, 1, 77, 64>}, {transform_indices = @transform_3, window_bounds = array<i64: 1, 1, 77, 64>}]} {
    %c0 = arith.constant 0 : index
    %c0_0 = arith.constant 0 : index
    %c0_1 = arith.constant 0 : index
    %c0_2 = arith.constant 0 : index
    %0 = vector.load %arg2[%c0, %c0_0, %c0_1, %c0_2] : memref<1x1x77x64xf32, #tpu.memory_space<vmem>>, vector<1x1x77x64xf32>
    %1 = vector.shape_cast %0 : vector<1x1x77x64xf32> to vector<77x64xf32>
    %cst = arith.constant 1.250000e-01 : f32
    %2 = vector.broadcast %cst : f32 to vector<77x64xf32>
    %3 = arith.mulf %1, %2 : vector<77x64xf32>
    %c0_3 = arith.constant 0 : index
    %c0_4 = arith.constant 0 : index
    %c0_5 = arith.constant 0 : index
    %c0_6 = arith.constant 0 : index
    %4 = vector.load %arg3[%c0_3, %c0_4, %c0_5, %c0_6] : memref<1x1x77x64xf32, #tpu.memory_space<vmem>>, vector<1x1x77x64xf32>
    %5 = vector.shape_cast %4 : vector<1x1x77x64xf32> to vector<77x64xf32>
    %c0_7 = arith.constant 0 : index
    %c0_8 = arith.constant 0 : index
    %c0_9 = arith.constant 0 : index
    %c0_10 = arith.constant 0 : index
    %6 = vector.load %arg4[%c0_7, %c0_8, %c0_9, %c0_10] : memref<1x1x77x64xf32, #tpu.memory_space<vmem>>, vector<1x1x77x64xf32>
    %7 = vector.shape_cast %6 : vector<1x1x77x64xf32> to vector<77x64xf32>
    %cst_11 = arith.constant dense<0.000000e+00> : vector<77x77xf32>
    %8 = tpu.matmul %3, %5, %cst_11 {dimension_numbers = #tpu.dot_dimension_numbers<[1], [1], [0], [0], [0, 0, 1, 0], [], []>} : vector<77x64xf32>, vector<77x64xf32>, vector<77x77xf32> -> vector<77x77xf32>
    %9 = tpu.iota {dimensions = array<i32: 0>} : vector<77x77xi32>
    %10 = tpu.iota {dimensions = array<i32: 1>} : vector<77x77xi32>
    %11 = arith.cmpi sle, %10, %9 : vector<77x77xi32>
    %cst_12 = arith.constant -1.000000e+30 : f32
    %12 = vector.broadcast %cst_12 : f32 to vector<77x77xf32>
    %13 = arith.select %11, %8, %12 : vector<77x77xi1>, vector<77x77xf32>
    %cst_13 = arith.constant dense<0xFF800000> : vector<77xf32>
    %14 = vector.multi_reduction <maximumf>, %13, %cst_13 [1] : vector<77x77xf32> to vector<77xf32>
    %15 = vector.shape_cast %14 : vector<77xf32> to vector<77x1xf32>
    %16 = vector.broadcast %15 : vector<77x1xf32> to vector<77x77xf32>
    %17 = arith.subf %13, %16 : vector<77x77xf32>
    %18 = math.exp %17 : vector<77x77xf32>
    %cst_14 = arith.constant dense<0.000000e+00> : vector<77xf32>
    %19 = vector.multi_reduction <add>, %18, %cst_14 [1] : vector<77x77xf32> to vector<77xf32>
    %20 = vector.shape_cast %19 : vector<77xf32> to vector<77x1xf32>
    %cst_15 = arith.constant dense<0.000000e+00> : vector<77x64xf32>
    %21 = tpu.matmul %18, %7, %cst_15 {dimension_numbers = #tpu.dot_dimension_numbers<[1], [0], [0], [1], [0, 0, 1, 1], [], []>} : vector<77x77xf32>, vector<77x64xf32>, vector<77x64xf32> -> vector<77x64xf32>
    %22 = vector.broadcast %20 : vector<77x1xf32> to vector<77x64xf32>
    %23 = arith.divf %21, %22 : vector<77x64xf32>
    %c0_16 = arith.constant 0 : index
    %c0_17 = arith.constant 0 : index
    %c0_18 = arith.constant 0 : index
    %c0_19 = arith.constant 0 : index
    %24 = vector.load %arg5[%c0_16, %c0_17, %c0_18, %c0_19] : memref<1x1x77x64xf32, #tpu.memory_space<vmem>>, vector<1x1x77x64xf32>
    %25 = vector.shape_cast %24 : vector<1x1x77x64xf32> to vector<77x64xf32>
    %26 = vector.shape_cast %23 : vector<77x64xf32> to vector<1x1x77x64xf32>
    tpu.vector_store %arg5[%c0_16, %c0_17, %c0_18, %c0_19], %26 {strides = array<i32>} : memref<1x1x77x64xf32, #tpu.memory_space<vmem>>, vector<1x1x77x64xf32>,
    return
  }
  func.func @transform_0(%arg0: i32, %arg1: i32) -> (i32, i32, i32, i32) {
    %c0_i32 = arith.constant 0 : i32
    %c0_i32_0 = arith.constant 0 : i32
    %c0_i32_1 = arith.constant 0 : i32
    return %arg0, %arg1, %c0_i32, %c0_i32_0 : i32, i32, i32, i32
  }
  func.func @transform_1(%arg0: i32, %arg1: i32) -> (i32, i32, i32, i32) {
    %c0_i32 = arith.constant 0 : i32
    %c0_i32_0 = arith.constant 0 : i32
    %c0_i32_1 = arith.constant 0 : i32
    return %arg0, %arg1, %c0_i32, %c0_i32_0 : i32, i32, i32, i32
  }
  func.func @transform_2(%arg0: i32, %arg1: i32) -> (i32, i32, i32, i32) {
    %c0_i32 = arith.constant 0 : i32
    %c0_i32_0 = arith.constant 0 : i32
    %c0_i32_1 = arith.constant 0 : i32
    return %arg0, %arg1, %c0_i32, %c0_i32_0 : i32, i32, i32, i32
  }
  func.func @transform_3(%arg0: i32, %arg1: i32) -> (i32, i32, i32, i32) {
    %c0_i32 = arith.constant 0 : i32
    %c0_i32_0 = arith.constant 0 : i32
    %c0_i32_1 = arith.constant 0 : i32
    return %arg0, %arg1, %c0_i32, %c0_i32_0 : i32, i32, i32, i32
  }
}

module attributes {stable_mosaic.version = 11 : i64} {
  func.func @_linear_kernel(%arg0: i32, %arg1: memref<154x128xf32, #tpu.memory_space<vmem>>, %arg2: memref<128x128xf32, #tpu.memory_space<vmem>>, %arg3: memref<1x128xf32, #tpu.memory_space<vmem>>, %arg4: memref<154x128xf32, #tpu.memory_space<vmem>>, %arg5: memref<154x128xf32, #tpu.memory_space<vmem>>) attributes {dimension_semantics = [#tpu.dimension_semantics<parallel>], iteration_bounds = array<i64: 1>, scalar_prefetch = 0 : i64, scratch_operands = 0 : i64, tpu.core_type = #tpu.core_type<tc>, window_params = [{pipeline_mode = #tpu.pipeline_mode<synchronous>, transform_indices = @transform_0, window_bounds = array<i64: 154, 128>}, {transform_indices = @transform_1, window_bounds = array<i64: 128, 128>}, {transform_indices = @transform_2, window_bounds = array<i64: 1, 128>}, {transform_indices = @transform_3, window_bounds = array<i64: 154, 128>}, {transform_indices = @transform_4, window_bounds = array<i64: 154, 128>}]} {
    %c0 = arith.constant 0 : index
    %c0_0 = arith.constant 0 : index
    %0 = vector.load %arg1[%c0, %c0_0] : memref<154x128xf32, #tpu.memory_space<vmem>>, vector<154x128xf32>
    %c0_1 = arith.constant 0 : index
    %c0_2 = arith.constant 0 : index
    %1 = vector.load %arg2[%c0_1, %c0_2] : memref<128x128xf32, #tpu.memory_space<vmem>>, vector<128x128xf32>
    %cst = arith.constant dense<0.000000e+00> : vector<154x128xf32>
    %2 = tpu.matmul %0, %1, %cst {dimension_numbers = #tpu.dot_dimension_numbers<[1], [0], [0], [1], [0, 0, 1, 1], [], []>} : vector<154x128xf32>, vector<128x128xf32>, vector<154x128xf32> -> vector<154x128xf32>
    %c0_3 = arith.constant 0 : index
    %c0_4 = arith.constant 0 : index
    %3 = vector.load %arg3[%c0_3, %c0_4] : memref<1x128xf32, #tpu.memory_space<vmem>>, vector<1x128xf32>
    %4 = vector.broadcast %3 : vector<1x128xf32> to vector<154x128xf32>
    %5 = arith.addf %2, %4 : vector<154x128xf32>
    %c0_5 = arith.constant 0 : index
    %c0_6 = arith.constant 0 : index
    %6 = vector.load %arg4[%c0_5, %c0_6] : memref<154x128xf32, #tpu.memory_space<vmem>>, vector<154x128xf32>
    %7 = arith.addf %5, %6 : vector<154x128xf32>
    %c0_7 = arith.constant 0 : index
    %c0_8 = arith.constant 0 : index
    %8 = vector.load %arg5[%c0_7, %c0_8] : memref<154x128xf32, #tpu.memory_space<vmem>>, vector<154x128xf32>
    tpu.vector_store %arg5[%c0_7, %c0_8], %7 {strides = array<i32>} : memref<154x128xf32, #tpu.memory_space<vmem>>, vector<154x128xf32>,
    return
  }
  func.func @transform_0(%arg0: i32) -> (i32, i32) {
    %c0_i32 = arith.constant 0 : i32
    %c0_i32_0 = arith.constant 0 : i32
    %c0_i32_1 = arith.constant 0 : i32
    return %c0_i32, %c0_i32_0 : i32, i32
  }
  func.func @transform_1(%arg0: i32) -> (i32, i32) {
    %c0_i32 = arith.constant 0 : i32
    %c0_i32_0 = arith.constant 0 : i32
    return %c0_i32, %arg0 : i32, i32
  }
  func.func @transform_2(%arg0: i32) -> (i32, i32) {
    %c0_i32 = arith.constant 0 : i32
    %c0_i32_0 = arith.constant 0 : i32
    return %c0_i32, %arg0 : i32, i32
  }
  func.func @transform_3(%arg0: i32) -> (i32, i32) {
    %c0_i32 = arith.constant 0 : i32
    %c0_i32_0 = arith.constant 0 : i32
    return %c0_i32, %arg0 : i32, i32
  }
  func.func @transform_4(%arg0: i32) -> (i32, i32) {
    %c0_i32 = arith.constant 0 : i32
    %c0_i32_0 = arith.constant 0 : i32
    return %c0_i32, %arg0 : i32, i32
  }
}

module attributes {stable_mosaic.version = 11 : i64} {
  func.func @_linear_kernel(%arg0: i32, %arg1: memref<154x128xf32, #tpu.memory_space<vmem>>, %arg2: memref<128x128xf32, #tpu.memory_space<vmem>>, %arg3: memref<1x128xf32, #tpu.memory_space<vmem>>, %arg4: memref<154x128xf32, #tpu.memory_space<vmem>>) attributes {dimension_semantics = [#tpu.dimension_semantics<parallel>], iteration_bounds = array<i64: 4>, scalar_prefetch = 0 : i64, scratch_operands = 0 : i64, tpu.core_type = #tpu.core_type<tc>, window_params = [{pipeline_mode = #tpu.pipeline_mode<synchronous>, transform_indices = @transform_0, window_bounds = array<i64: 154, 128>}, {transform_indices = @transform_1, window_bounds = array<i64: 128, 128>}, {transform_indices = @transform_2, window_bounds = array<i64: 1, 128>}, {transform_indices = @transform_3, window_bounds = array<i64: 154, 128>}]} {
    %c0 = arith.constant 0 : index
    %c0_0 = arith.constant 0 : index
    %0 = vector.load %arg1[%c0, %c0_0] : memref<154x128xf32, #tpu.memory_space<vmem>>, vector<154x128xf32>
    %c0_1 = arith.constant 0 : index
    %c0_2 = arith.constant 0 : index
    %1 = vector.load %arg2[%c0_1, %c0_2] : memref<128x128xf32, #tpu.memory_space<vmem>>, vector<128x128xf32>
    %cst = arith.constant dense<0.000000e+00> : vector<154x128xf32>
    %2 = tpu.matmul %0, %1, %cst {dimension_numbers = #tpu.dot_dimension_numbers<[1], [0], [0], [1], [0, 0, 1, 1], [], []>} : vector<154x128xf32>, vector<128x128xf32>, vector<154x128xf32> -> vector<154x128xf32>
    %c0_3 = arith.constant 0 : index
    %c0_4 = arith.constant 0 : index
    %3 = vector.load %arg3[%c0_3, %c0_4] : memref<1x128xf32, #tpu.memory_space<vmem>>, vector<1x128xf32>
    %4 = vector.broadcast %3 : vector<1x128xf32> to vector<154x128xf32>
    %5 = arith.addf %2, %4 : vector<154x128xf32>
    %cst_5 = arith.constant 1.702000e+00 : f32
    %6 = vector.broadcast %cst_5 : f32 to vector<154x128xf32>
    %7 = arith.mulf %6, %5 : vector<154x128xf32>
    %8 = arith.negf %7 : vector<154x128xf32>
    %9 = math.exp %8 : vector<154x128xf32>
    %cst_6 = arith.constant 1.000000e+00 : f32
    %10 = vector.broadcast %cst_6 : f32 to vector<154x128xf32>
    %11 = arith.addf %10, %9 : vector<154x128xf32>
    %12 = arith.divf %10, %11 : vector<154x128xf32>
    %13 = arith.mulf %5, %12 : vector<154x128xf32>
    %c0_7 = arith.constant 0 : index
    %c0_8 = arith.constant 0 : index
    %14 = vector.load %arg4[%c0_7, %c0_8] : memref<154x128xf32, #tpu.memory_space<vmem>>, vector<154x128xf32>
    tpu.vector_store %arg4[%c0_7, %c0_8], %13 {strides = array<i32>} : memref<154x128xf32, #tpu.memory_space<vmem>>, vector<154x128xf32>,
    return
  }
  func.func @transform_0(%arg0: i32) -> (i32, i32) {
    %c0_i32 = arith.constant 0 : i32
    %c0_i32_0 = arith.constant 0 : i32
    %c0_i32_1 = arith.constant 0 : i32
    return %c0_i32, %c0_i32_0 : i32, i32
  }
  func.func @transform_1(%arg0: i32) -> (i32, i32) {
    %c0_i32 = arith.constant 0 : i32
    %c0_i32_0 = arith.constant 0 : i32
    return %c0_i32, %arg0 : i32, i32
  }
  func.func @transform_2(%arg0: i32) -> (i32, i32) {
    %c0_i32 = arith.constant 0 : i32
    %c0_i32_0 = arith.constant 0 : i32
    return %c0_i32, %arg0 : i32, i32
  }
  func.func @transform_3(%arg0: i32) -> (i32, i32) {
    %c0_i32 = arith.constant 0 : i32
    %c0_i32_0 = arith.constant 0 : i32
    return %c0_i32, %arg0 : i32, i32
  }
}

module attributes {stable_mosaic.version = 11 : i64} {
  func.func @_linear_kernel(%arg0: i32, %arg1: memref<154x512xf32, #tpu.memory_space<vmem>>, %arg2: memref<512x128xf32, #tpu.memory_space<vmem>>, %arg3: memref<1x128xf32, #tpu.memory_space<vmem>>, %arg4: memref<154x128xf32, #tpu.memory_space<vmem>>, %arg5: memref<154x128xf32, #tpu.memory_space<vmem>>) attributes {dimension_semantics = [#tpu.dimension_semantics<parallel>], iteration_bounds = array<i64: 1>, scalar_prefetch = 0 : i64, scratch_operands = 0 : i64, tpu.core_type = #tpu.core_type<tc>, window_params = [{pipeline_mode = #tpu.pipeline_mode<synchronous>, transform_indices = @transform_0, window_bounds = array<i64: 154, 512>}, {transform_indices = @transform_1, window_bounds = array<i64: 512, 128>}, {transform_indices = @transform_2, window_bounds = array<i64: 1, 128>}, {transform_indices = @transform_3, window_bounds = array<i64: 154, 128>}, {transform_indices = @transform_4, window_bounds = array<i64: 154, 128>}]} {
    %c0 = arith.constant 0 : index
    %c0_0 = arith.constant 0 : index
    %0 = vector.load %arg1[%c0, %c0_0] : memref<154x512xf32, #tpu.memory_space<vmem>>, vector<154x512xf32>
    %c0_1 = arith.constant 0 : index
    %c0_2 = arith.constant 0 : index
    %1 = vector.load %arg2[%c0_1, %c0_2] : memref<512x128xf32, #tpu.memory_space<vmem>>, vector<512x128xf32>
    %cst = arith.constant dense<0.000000e+00> : vector<154x128xf32>
    %2 = tpu.matmul %0, %1, %cst {dimension_numbers = #tpu.dot_dimension_numbers<[1], [0], [0], [1], [0, 0, 1, 1], [], []>} : vector<154x512xf32>, vector<512x128xf32>, vector<154x128xf32> -> vector<154x128xf32>
    %c0_3 = arith.constant 0 : index
    %c0_4 = arith.constant 0 : index
    %3 = vector.load %arg3[%c0_3, %c0_4] : memref<1x128xf32, #tpu.memory_space<vmem>>, vector<1x128xf32>
    %4 = vector.broadcast %3 : vector<1x128xf32> to vector<154x128xf32>
    %5 = arith.addf %2, %4 : vector<154x128xf32>
    %c0_5 = arith.constant 0 : index
    %c0_6 = arith.constant 0 : index
    %6 = vector.load %arg4[%c0_5, %c0_6] : memref<154x128xf32, #tpu.memory_space<vmem>>, vector<154x128xf32>
    %7 = arith.addf %5, %6 : vector<154x128xf32>
    %c0_7 = arith.constant 0 : index
    %c0_8 = arith.constant 0 : index
    %8 = vector.load %arg5[%c0_7, %c0_8] : memref<154x128xf32, #tpu.memory_space<vmem>>, vector<154x128xf32>
    tpu.vector_store %arg5[%c0_7, %c0_8], %7 {strides = array<i32>} : memref<154x128xf32, #tpu.memory_space<vmem>>, vector<154x128xf32>,
    return
  }
  func.func @transform_0(%arg0: i32) -> (i32, i32) {
    %c0_i32 = arith.constant 0 : i32
    %c0_i32_0 = arith.constant 0 : i32
    %c0_i32_1 = arith.constant 0 : i32
    return %c0_i32, %c0_i32_0 : i32, i32
  }
  func.func @transform_1(%arg0: i32) -> (i32, i32) {
    %c0_i32 = arith.constant 0 : i32
    %c0_i32_0 = arith.constant 0 : i32
    return %c0_i32, %arg0 : i32, i32
  }
  func.func @transform_2(%arg0: i32) -> (i32, i32) {
    %c0_i32 = arith.constant 0 : i32
    %c0_i32_0 = arith.constant 0 : i32
    return %c0_i32, %arg0 : i32, i32
  }
  func.func @transform_3(%arg0: i32) -> (i32, i32) {
    %c0_i32 = arith.constant 0 : i32
    %c0_i32_0 = arith.constant 0 : i32
    return %c0_i32, %arg0 : i32, i32
  }
  func.func @transform_4(%arg0: i32) -> (i32, i32) {
    %c0_i32 = arith.constant 0 : i32
    %c0_i32_0 = arith.constant 0 : i32
    return %c0_i32, %arg0 : i32, i32
  }
}

</mosaic_0001>

<llo_original>
// kernel: _clip_text_forward.16
$region0: #{_clip_text_forward.16}
  #allocation0 [shape = 'u32[]', space=smem, size = 0x4, offset = 0x4, fixed_abs, tag = 'smem constant byte address 0x4 - core index']
  #allocation1 [shape = 'u32[144,128]{1,0:T(1,128)}', space=vmem, size = 0x12000, scoped, tag = 'internal scratch']
  #allocation2 [shape = 'f32[2,128]{1,0:T(2,128)}', space=vmem, size = 0x400, scoped, tag = 'scratch operand']
  #allocation3 [shape = 's32[2]{0}', space=sflag, size = 0x8, scoped, tag = 'scratch operand']
  #allocation4 [shape = 's32[1]{0}', space=sflag, size = 0x4, scoped, tag = 'scoped memory for _clip_text_forward.16']
  #allocation5 [shape = 'u8[1024]{0}', space=smem, size = 0x400, scoped, tag = 'prefetched SMEM operand 0']
  #allocation6 [shape = 's32[]', space=sflag, size = 0x4, offset = 0, fixed_abs, tag = 'sflag constant byte address 0x0 - dummy sync flag']
  #allocation7 [shape = 's32[]', space=sflag, size = 0x4, offset = 0, fixed_abs, tag = 'sflag constant byte address 0x0 - dummy sync flag']
  #allocation8 [shape = 'u32[]', space=smem, size = 0x4, offset = 0x44, fixed_abs, tag = 'smem constant byte address 0x44 - assertion arg 0']
  #allocation9 [shape = 'u32[]', space=smem, size = 0x4, offset = 0x48, fixed_abs, tag = 'smem constant byte address 0x48 - assertion arg 1']
  #allocation10 [shape = 's32[]', space=sflag, size = 0x4, offset = 0, fixed_abs, tag = 'sflag constant byte address 0x0 - dummy sync flag']
  #allocation11 [shape = 's32[]', space=sflag, size = 0x4, offset = 0, fixed_abs, tag = 'sflag constant byte address 0x0 - dummy sync flag']
  %s0 = inlined_call_operand.vmem [shape: s32[2,77], index: 0, kind: input, shape index: {}]
  %s1 = inlined_call_operand.hbm [shape: f32[1000,128], index: 1, kind: input, shape index: {}]
  %s2 = inlined_call_operand.vmem [shape: f32[77,128], index: 2, kind: input, shape index: {}]
  %s3 = inlined_call_operand.vmem [shape: f32[2,77,128], index: 3, kind: output, shape index: {}]
  %s4 = sld [smem:[#allocation0]]
  $region56: #{_clip_text_forward.16} parent=0
    _
  %s6 = ssub.s32 1, %s4
  %s7 = scalar_select 0, %s6, %s4
  %s8 = sshll.u32 %s0, 4
  %s9 = int_to_ptr.vmem [resolvable:$true] %s8
  %11 = dma.vmem_to_smem %s9, 32, [#allocation5], [#allocation4]
  %12 = dma.done [#allocation4], 32
  %13 = sfence
  loop: start=0, step=1, limit=4
  $region2: #{_clip_text_forward.16} parent=0 // loop_pre_header
    _
  $region3: #{_clip_text_forward.16} parent=0 // loop_header
    %s15 = sphi 0, %s19
    %p16 = scmp.ge.s32.totalorder %s15, 4
    %s23 = sphi 0, %s23
    %s25 = sphi 0, %s23
    %s26 = sphi 0, %s25
    %s40 = sphi 0, %s26
    %s46 = sphi 0, %s48
    %s49 = sphi 0, %s46
    %s50 = sphi 0, %s49
    %s66 = sphi 0, %s50
  $region4: #{_clip_text_forward.16} parent=0 // loop_header_branch
    %18 = sbr.rel (%p16) target = $region8
  $region5: #{_clip_text_forward.16} parent=0 // loop_body
    %s20 = ssub.s32 %s15, 1
    %s21 = ssub.s32 %s15, 2
    %s22 = sadd.s32 %s15, 1
    %s24 = sadd.s32 %s23, 1
    %p27 = scmp.eq.s32.totalorder %s15, 1
    %p28 = scmp.ne.s32.totalorder %s23, %s25
    %p29 = scmp.eq.s32.totalorder %s15, 0
    %p30 = por %p28, %p29
    %p31 = scmp.ne.s32.totalorder %s23, %s25
    %p32 = scmp.eq.s32.totalorder %s20, 1
    %p33 = por %p31, %p32
    %p34 = scmp.ne.s32.totalorder %s25, %s26
    %p35 = scmp.eq.s32.totalorder %s20, 0
    %p36 = por %p34, %p35
    %p37 = scmp.ne.s32.totalorder %s25, %s26
    %p38 = scmp.eq.s32.totalorder %s21, 1
    %p39 = por %p37, %p38
    %p41 = scmp.ne.s32.totalorder %s26, %s40
    %p42 = scmp.eq.s32.totalorder %s21, 0
    %p43 = por %p41, %p42
    %s44 = ssub.s32 %s15, %s22
    %p45 = scmp.eq.s32.totalorder %s44, 0
    %s47 = sadd.s32 %s46, 1
    %s48 = scalar_select %p45, %s46, %s47
    %p51 = pneg %p45
    %p52 = scmp.eq.s32.totalorder %s15, 1
    %p53 = por %p51, %p52
    %p54 = scmp.ne.s32.totalorder %s46, %s49
    %p55 = scmp.eq.s32.totalorder %s15, 0
    %p56 = por %p54, %p55
    %p57 = scmp.ne.s32.totalorder %s46, %s49
    %p58 = scmp.eq.s32.totalorder %s20, 1
    %p59 = por %p57, %p58
    %p60 = scmp.ne.s32.totalorder %s49, %s50
    %p61 = scmp.eq.s32.totalorder %s20, 0
    %p62 = por %p60, %p61
    %p63 = scmp.ne.s32.totalorder %s49, %s50
    %p64 = scmp.eq.s32.totalorder %s21, 1
    %p65 = por %p63, %p64
    %p67 = scmp.ne.s32.totalorder %s50, %s66
    %p68 = scmp.eq.s32.totalorder %s21, 0
    %p69 = por %p67, %p68
    %p70 = scmp.le.s32.totalorder 1, %s15
    %p71 = scmp.lt.s32.totalorder %s15, 3
    %p72 = pnand %p70, %p71
    %p73 = pneg %p72
    // Predicated region
    $region9: #{_clip_text_forward.16} parent=5 // pred_check
      _
    $region10: #{_clip_text_forward.16} parent=5 // pred_check_branch
      %75 = sbr.rel (%p72) target = $region12
    $region11: #{_clip_text_forward.16} parent=5 // pred_region
      %s76 = ssub.s32 %s15, 1
      // Predicated region
      $region13: #{_clip_text_forward.16} parent=11 // pred_check
        %p77 = pneg %p36
      $region14: #{_clip_text_forward.16} parent=11 // pred_check_branch
        %79 = sbr.rel (%p77) target = $region16
      $region15: #{_clip_text_forward.16} parent=11 // pred_region
        _
      $region16: #{_clip_text_forward.16} parent=11 // pred_fallthru
        _
    $region12: #{_clip_text_forward.16} parent=5 // pred_fallthru
      _
    %p80 = scmp.lt.s32.totalorder %s15, 2
    // Predicated region
    $region17: #{_clip_text_forward.16} parent=5 // pred_check
      %p81 = pneg %p80
    $region18: #{_clip_text_forward.16} parent=5 // pred_check_branch
      %83 = sbr.rel (%p81) target = $region20
    $region19: #{_clip_text_forward.16} parent=5 // pred_region
      _
    $region20: #{_clip_text_forward.16} parent=5 // pred_fallthru
      _
    %p84 = scmp.le.s32.totalorder 1, %s15
    %p85 = scmp.lt.s32.totalorder %s15, 3
    %p86 = pnand %p84, %p85
    %p87 = pneg %p86
    // Predicated region
    $region21: #{_clip_text_forward.16} parent=5 // pred_check
      _
    $region22: #{_clip_text_forward.16} parent=5 // pred_check_branch
      %89 = sbr.rel (%p86) target = $region24
    $region23: #{_clip_text_forward.16} parent=5 // pred_region
      %s90 = ssub.s32 %s15, 1
      %p91 = pneg %p36
      %p92 = pneg %p33
      %p93 = pneg %p62
      %p94 = pneg %p59
      %p95 = scmp.lt.s32.totalorder %s20, 1
      %s96 = scalar_select %p95, %s20, 1
      %s97 = smul.addr %s96, 10
      %s98 = smul.addr %s97, 8
      %s99 = scalar_lea.vmem %s3, %s98
      %p100 = scmp.lt.s32.totalorder %s20, 1
      %s101 = scalar_select %p100, %s20, 1
      %s102 = smul.addr %s101, 10
      %s103 = smul.addr %s102, 8
      %s104 = scalar_lea.vmem %s3, %s103
      %s105 = smul.u32 %s20, 128
      %s106 = sld [smem:[#allocation5 + %s105]]
      %s107 = smul.addr %s106, 16
      %s108 = scalar_lea.hbm %s1, %s107
      // Predicated region
      $region25: #{_clip_text_forward.16} parent=23 // pred_check
        _
      $region26: #{_clip_text_forward.16} parent=23 // pred_check_branch
        %110 = sbr.rel target = $region28
      $region27: #{_clip_text_forward.16} parent=23 // pred_region
        %111 = sst [smem:[#allocation8]] [#allocation7]
        %112 = sst [smem:[#allocation9]] [#allocation6]
      $region28: #{_clip_text_forward.16} parent=23 // pred_fallthru
        _
      %114 = shalt.err (0)
      %s116 = sshll.u32 [#allocation2], 4
      %s117 = int_to_ptr.vmem [resolvable:$true] %s116
      %119 = dma.hbm_to_vmem [thread:$0]  %s108, 16, %s117, [#allocation3]
      loop: start=0, step=1, limit=77
      $region29: #{_clip_text_forward.16} parent=23 // loop_pre_header
        _
      $region30: #{_clip_text_forward.16} parent=23 // loop_header
        %s121 = sphi 0, %s125
        %p122 = scmp.ge.s32.totalorder %s121, 77
      $region31: #{_clip_text_forward.16} parent=23 // loop_header_branch
        %124 = sbr.rel (%p122) target = $region35
      $region32: #{_clip_text_forward.16} parent=23 // loop_body
        %p126 = scmp.lt.s32.totalorder %s121, 0
        %s127 = ssub.s32 0, %s121
        %s128 = scalar_select %p126, %s127, %s121
        %s129 = sand.u32 %s128, 1
        %s130 = ssub.s32 0, %s129
        %s131 = scalar_select %p126, %s130, %s129
        %p132 = scmp.ne.s32.totalorder %s131, 0
        %p133 = scmp.lt.s32.totalorder %s131, 0
        %p134 = pnand %p133, %p132
        %p135 = pneg %p134
        %s136 = sadd.s32 %s131, 2
        %s137 = scalar_select %p135, %s136, %s131
        %s138 = scalar_lea.vmem [#allocation2], %s137
        %s139 = scalar_lea.sflag [#allocation3], %s137
        %s140 = smul.u32 1, 1
        %s141 = sshll.u32 %s140, 4
        %142 = dma.done %s139, %s141
        %s143 = sadd.s32 %s121, 1
        %p144 = scmp.lt.s32.totalorder %s143, 77
        // Predicated region
        $region36: #{_clip_text_forward.16} parent=32 // pred_check
          %p145 = pneg %p144
        $region37: #{_clip_text_forward.16} parent=32 // pred_check_branch
          %147 = sbr.rel (%p145) target = $region39
        $region38: #{_clip_text_forward.16} parent=32 // pred_region
          %s148 = ssub.s32 1, %s137
          %s149 = sshra.s32 %s143, 7
          %s150 = sand.u32 %s143, 127
          %s151 = sadd.s32 %s149, %s20
          %s152 = smul.u32 %s151, 128
          %s153 = sshra.s32 %s143, 7
          %s154 = sand.u32 %s143, 127
          %s155 = sadd.s32 %s152, %s154
          %s156 = sld [smem:[#allocation5 + %s155]]
          %s157 = smul.addr %s156, 16
          %s158 = scalar_lea.hbm %s1, %s157
          %s159 = scalar_lea.vmem [#allocation2], %s148
          %s160 = scalar_lea.sflag [#allocation3], %s148
          // Predicated region
          $region40: #{_clip_text_forward.16} parent=38 // pred_check
            _
          $region41: #{_clip_text_forward.16} parent=38 // pred_check_branch
            %162 = sbr.rel target = $region43
          $region42: #{_clip_text_forward.16} parent=38 // pred_region
            %163 = sst [smem:[#allocation8]] [#allocation11]
            %164 = sst [smem:[#allocation9]] [#allocation10]
          $region43: #{_clip_text_forward.16} parent=38 // pred_fallthru
            _
          %166 = shalt.err (0)
          %s168 = sshll.u32 %s159, 4
          %s169 = int_to_ptr.vmem [resolvable:$true] %s168
          %171 = dma.hbm_to_vmem [thread:$0]  %s158, 16, %s169, %s160
        $region39: #{_clip_text_forward.16} parent=32 // pred_fallthru
          _
        %v172 = vld [vmem:[%s138] sm:$0x1]
        %s173 = scalar_lea.vmem %s2, %s121
        %v174 = vld [vmem:[%s173] sm:$0x1]
        %v175 = vadd.f32 %v172, %v174
        %s176 = scalar_lea.vmem %s104, %s121
        %177 = vst [vmem:[%s176] sm:$0x1] %v175
      $region33: #{_clip_text_forward.16} parent=23 // loop_footer
        %s125 = sadd.s32 1, %s121
      $region34: #{_clip_text_forward.16} parent=23 // loop_footer_branch
        %120 = sbr.rel target = $region30
      $region35: #{_clip_text_forward.16} parent=23 // loop_exit
        _
      %p178 = scmp.lt.s32.totalorder %s20, 1
      %s179 = scalar_select %p178, %s20, 1
      %s180 = smul.addr %s179, 10
      %s181 = smul.addr %s180, 8
      %s182 = scalar_lea.vmem %s3, %s181
      // Predicated region
      $region44: #{_clip_text_forward.16} parent=23 // pred_check
        %p183 = pneg %p59
      $region45: #{_clip_text_forward.16} parent=23 // pred_check_branch
        %185 = sbr.rel (%p183) target = $region47
      $region46: #{_clip_text_forward.16} parent=23 // pred_region
        _
      $region47: #{_clip_text_forward.16} parent=23 // pred_fallthru
        _
    $region24: #{_clip_text_forward.16} parent=5 // pred_fallthru
      _
    %p186 = scmp.le.s32.totalorder 2, %s15
    // Predicated region
    $region48: #{_clip_text_forward.16} parent=5 // pred_check
      %p187 = pneg %p186
    $region49: #{_clip_text_forward.16} parent=5 // pred_check_branch
      %189 = sbr.rel (%p187) target = $region51
    $region50: #{_clip_text_forward.16} parent=5 // pred_region
      %s190 = ssub.s32 %s15, 2
      // Predicated region
      $region52: #{_clip_text_forward.16} parent=50 // pred_check
        %p191 = pneg %p65
      $region53: #{_clip_text_forward.16} parent=50 // pred_check_branch
        %193 = sbr.rel (%p191) target = $region55
      $region54: #{_clip_text_forward.16} parent=50 // pred_region
        %p194 = scmp.lt.s32.totalorder %s21, 1
        %s195 = scalar_select %p194, %s21, 1
        %s196 = smul.addr %s195, 10
        %s197 = smul.addr %s196, 8
        %s198 = scalar_lea.vmem %s3, %s197
      $region55: #{_clip_text_forward.16} parent=50 // pred_fallthru
        _
    $region51: #{_clip_text_forward.16} parent=5 // pred_fallthru
      _
  $region6: #{_clip_text_forward.16} parent=0 // loop_footer
    %s19 = sadd.s32 1, %s15
  $region7: #{_clip_text_forward.16} parent=0 // loop_footer_branch
    %14 = sbr.rel target = $region3
  $region8: #{_clip_text_forward.16} parent=0 // loop_exit
    _
  %199 = vsyncmov [#allocation3]
  %s200 = vpop.sfrf %199
  %p201 = scmp.eq.s32.totalorder %s200, 0
  %p202 = pneg %p201
  %204 = shalt.err (%p202)
  %s205 = scalar_lea.sflag [#allocation3], 1
  %206 = vsyncmov %s205
  %s207 = vpop.sfrf %206
  %p208 = scmp.eq.s32.totalorder %s207, 0
  %p209 = pneg %p208
  %211 = shalt.err (%p209)

// kernel: _clip_text_forward.17
$region0: #{_clip_text_forward.17}
  #allocation0 [shape = 'u32[]', space=smem, size = 0x4, offset = 0x4, fixed_abs, tag = 'smem constant byte address 0x4 - core index']
  #allocation1 [shape = 'u32[144,128]{1,0:T(1,128)}', space=vmem, size = 0x12000, scoped, tag = 'internal scratch']
  %s0 = inlined_call_operand.vmem [shape: f32[2,77,128], index: 0, kind: input, shape index: {}]
  %s1 = inlined_call_operand.vmem [shape: f32[1,128], index: 1, kind: input, shape index: {}]
  %s2 = inlined_call_operand.vmem [shape: f32[1,128], index: 2, kind: input, shape index: {}]
  %s3 = inlined_call_operand.vmem [shape: f32[2,77,128], index: 3, kind: output, shape index: {}]
  %s4 = sld [smem:[#allocation0]]
  $region45: #{_clip_text_forward.17} parent=0
    _
  %s6 = ssub.s32 1, %s4
  %s7 = scalar_select 0, %s6, %s4
  loop: start=0, step=1, limit=4
  $region2: #{_clip_text_forward.17} parent=0 // loop_pre_header
    _
  $region3: #{_clip_text_forward.17} parent=0 // loop_header
    %s9 = sphi 0, %s13
    %p10 = scmp.ge.s32.totalorder %s9, 4
    %s19 = sphi 0, %s21
    %s22 = sphi 0, %s19
    %s23 = sphi 0, %s22
    %s39 = sphi 0, %s23
    %s43 = sphi 0, %s43
    %s45 = sphi 0, %s43
    %s46 = sphi 0, %s45
    %s60 = sphi 0, %s46
    %s64 = sphi 0, %s64
    %s66 = sphi 0, %s64
    %s67 = sphi 0, %s66
    %s81 = sphi 0, %s67
    %s87 = sphi 0, %s89
    %s90 = sphi 0, %s87
    %s91 = sphi 0, %s90
    %s107 = sphi 0, %s91
  $region4: #{_clip_text_forward.17} parent=0 // loop_header_branch
    %12 = sbr.rel (%p10) target = $region8
  $region5: #{_clip_text_forward.17} parent=0 // loop_body
    %s14 = ssub.s32 %s9, 1
    %s15 = ssub.s32 %s9, 2
    %s16 = sadd.s32 %s9, 1
    %s17 = ssub.s32 %s9, %s16
    %p18 = scmp.eq.s32.totalorder %s17, 0
    %s20 = sadd.s32 %s19, 1
    %s21 = scalar_select %p18, %s19, %s20
    %p24 = pneg %p18
    %p25 = scmp.eq.s32.totalorder %s9, 1
    %p26 = por %p24, %p25
    %p27 = scmp.ne.s32.totalorder %s19, %s22
    %p28 = scmp.eq.s32.totalorder %s9, 0
    %p29 = por %p27, %p28
    %p30 = scmp.ne.s32.totalorder %s19, %s22
    %p31 = scmp.eq.s32.totalorder %s14, 1
    %p32 = por %p30, %p31
    %p33 = scmp.ne.s32.totalorder %s22, %s23
    %p34 = scmp.eq.s32.totalorder %s14, 0
    %p35 = por %p33, %p34
    %p36 = scmp.ne.s32.totalorder %s22, %s23
    %p37 = scmp.eq.s32.totalorder %s15, 1
    %p38 = por %p36, %p37
    %p40 = scmp.ne.s32.totalorder %s23, %s39
    %p41 = scmp.eq.s32.totalorder %s15, 0
    %p42 = por %p40, %p41
    %s44 = sadd.s32 %s43, 1
    %p47 = scmp.eq.s32.totalorder %s9, 1
    %p48 = scmp.ne.s32.totalorder %s43, %s45
    %p49 = scmp.eq.s32.totalorder %s9, 0
    %p50 = por %p48, %p49
    %p51 = scmp.ne.s32.totalorder %s43, %s45
    %p52 = scmp.eq.s32.totalorder %s14, 1
    %p53 = por %p51, %p52
    %p54 = scmp.ne.s32.totalorder %s45, %s46
    %p55 = scmp.eq.s32.totalorder %s14, 0
    %p56 = por %p54, %p55
    %p57 = scmp.ne.s32.totalorder %s45, %s46
    %p58 = scmp.eq.s32.totalorder %s15, 1
    %p59 = por %p57, %p58
    %p61 = scmp.ne.s32.totalorder %s46, %s60
    %p62 = scmp.eq.s32.totalorder %s15, 0
    %p63 = por %p61, %p62
    %s65 = sadd.s32 %s64, 1
    %p68 = scmp.eq.s32.totalorder %s9, 1
    %p69 = scmp.ne.s32.totalorder %s64, %s66
    %p70 = scmp.eq.s32.totalorder %s9, 0
    %p71 = por %p69, %p70
    %p72 = scmp.ne.s32.totalorder %s64, %s66
    %p73 = scmp.eq.s32.totalorder %s14, 1
    %p74 = por %p72, %p73
    %p75 = scmp.ne.s32.totalorder %s66, %s67
    %p76 = scmp.eq.s32.totalorder %s14, 0
    %p77 = por %p75, %p76
    %p78 = scmp.ne.s32.totalorder %s66, %s67
    %p79 = scmp.eq.s32.totalorder %s15, 1
    %p80 = por %p78, %p79
    %p82 = scmp.ne.s32.totalorder %s67, %s81
    %p83 = scmp.eq.s32.totalorder %s15, 0
    %p84 = por %p82, %p83
    %s85 = ssub.s32 %s9, %s16
    %p86 = scmp.eq.s32.totalorder %s85, 0
    %s88 = sadd.s32 %s87, 1
    %s89 = scalar_select %p86, %s87, %s88
    %p92 = pneg %p86
    %p93 = scmp.eq.s32.totalorder %s9, 1
    %p94 = por %p92, %p93
    %p95 = scmp.ne.s32.totalorder %s87, %s90
    %p96 = scmp.eq.s32.totalorder %s9, 0
    %p97 = por %p95, %p96
    %p98 = scmp.ne.s32.totalorder %s87, %s90
    %p99 = scmp.eq.s32.totalorder %s14, 1
    %p100 = por %p98, %p99
    %p101 = scmp.ne.s32.totalorder %s90, %s91
    %p102 = scmp.eq.s32.totalorder %s14, 0
    %p103 = por %p101, %p102
    %p104 = scmp.ne.s32.totalorder %s90, %s91
    %p105 = scmp.eq.s32.totalorder %s15, 1
    %p106 = por %p104, %p105
    %p108 = scmp.ne.s32.totalorder %s91, %s107
    %p109 = scmp.eq.s32.totalorder %s15, 0
    %p110 = por %p108, %p109
    %p111 = scmp.le.s32.totalorder 1, %s9
    %p112 = scmp.lt.s32.totalorder %s9, 3
    %p113 = pnand %p111, %p112
    %p114 = pneg %p113
    // Predicated region
    $region9: #{_clip_text_forward.17} parent=5 // pred_check
      _
    $region10: #{_clip_text_forward.17} parent=5 // pred_check_branch
      %116 = sbr.rel (%p113) target = $region12
    $region11: #{_clip_text_forward.17} parent=5 // pred_region
      %s117 = ssub.s32 %s9, 1
      // Predicated region
      $region13: #{_clip_text_forward.17} parent=11 // pred_check
        %p118 = pneg %p56
      $region14: #{_clip_text_forward.17} parent=11 // pred_check_branch
        %120 = sbr.rel (%p118) target = $region16
      $region15: #{_clip_text_forward.17} parent=11 // pred_region
        _
      $region16: #{_clip_text_forward.17} parent=11 // pred_fallthru
        _
      // Predicated region
      $region17: #{_clip_text_forward.17} parent=11 // pred_check
        %p121 = pneg %p77
      $region18: #{_clip_text_forward.17} parent=11 // pred_check_branch
        %123 = sbr.rel (%p121) target = $region20
      $region19: #{_clip_text_forward.17} parent=11 // pred_region
        _
      $region20: #{_clip_text_forward.17} parent=11 // pred_fallthru
        _
    $region12: #{_clip_text_forward.17} parent=5 // pred_fallthru
      _
    %p124 = scmp.lt.s32.totalorder %s9, 2
    // Predicated region
    $region21: #{_clip_text_forward.17} parent=5 // pred_check
      %p125 = pneg %p124
    $region22: #{_clip_text_forward.17} parent=5 // pred_check_branch
      %127 = sbr.rel (%p125) target = $region24
    $region23: #{_clip_text_forward.17} parent=5 // pred_region
      // Predicated region
      $region25: #{_clip_text_forward.17} parent=23 // pred_check
        %p128 = pneg %p29
      $region26: #{_clip_text_forward.17} parent=23 // pred_check_branch
        %130 = sbr.rel (%p128) target = $region28
      $region27: #{_clip_text_forward.17} parent=23 // pred_region
        %p131 = scmp.lt.s32.totalorder %s9, 1
        %s132 = scalar_select %p131, %s9, 1
        %s133 = smul.addr %s132, 10
        %s134 = smul.addr %s133, 8
        %s135 = scalar_lea.vmem %s0, %s134
      $region28: #{_clip_text_forward.17} parent=23 // pred_fallthru
        _
    $region24: #{_clip_text_forward.17} parent=5 // pred_fallthru
      _
    %p136 = scmp.le.s32.totalorder 1, %s9
    %p137 = scmp.lt.s32.totalorder %s9, 3
    %p138 = pnand %p136, %p137
    %p139 = pneg %p138
    // Predicated region
    $region29: #{_clip_text_forward.17} parent=5 // pred_check
      _
    $region30: #{_clip_text_forward.17} parent=5 // pred_check_branch
      %141 = sbr.rel (%p138) target = $region32
    $region31: #{_clip_text_forward.17} parent=5 // pred_region
      %s142 = ssub.s32 %s9, 1
      %p143 = scmp.lt.s32.totalorder %s14, 1
      %s144 = scalar_select %p143, %s14, 1
      %s145 = smul.addr %s144, 10
      %s146 = smul.addr %s145, 8
      %s147 = scalar_lea.vmem %s0, %s146
      %p148 = pneg %p35
      %p149 = pneg %p32
      %p150 = pneg %p56
      %p151 = pneg %p53
      %p152 = pneg %p77
      %p153 = pneg %p74
      %p154 = pneg %p103
      %p155 = pneg %p100
      %p156 = scmp.lt.s32.totalorder %s14, 1
      %s157 = scalar_select %p156, %s14, 1
      %s158 = smul.addr %s157, 10
      %s159 = smul.addr %s158, 8
      %s160 = scalar_lea.vmem %s3, %s159
      %p161 = scmp.lt.s32.totalorder %s14, 1
      %s162 = scalar_select %p161, %s14, 1
      %s163 = smul.addr %s162, 10
      %s164 = smul.addr %s163, 8
      %s165 = scalar_lea.vmem %s0, %s164
      %p166 = scmp.lt.s32.totalorder %s14, 1
      %s167 = scalar_select %p166, %s14, 1
      %s168 = smul.addr %s167, 10
      %s169 = smul.addr %s168, 8
      %s170 = scalar_lea.vmem %s3, %s169
      %v171 = vld [vmem:[%s165] sm:$0xff]
      %v172 = vld [vmem:[%s165 + $0x8] sm:$0xff]
      %v173 = vld [vmem:[%s165 + $0x10] sm:$0xff]
      %v174 = vld [vmem:[%s165 + $0x18] sm:$0xff]
      %v175 = vld [vmem:[%s165 + $0x20] sm:$0xff]
      %v176 = vld [vmem:[%s165 + $0x28] sm:$0xff]
      %v177 = vld [vmem:[%s165 + $0x30] sm:$0xff]
      %v178 = vld [vmem:[%s165 + $0x38] sm:$0xff]
      %v179 = vld [vmem:[%s165 + $0x40] sm:$0xff]
      %v180 = vld [vmem:[%s165 + $0x48] sm:$0x1f]
      %181 = vadd.xlane.f32.xlu0 %v171
      %v182 = vpop.xlane.xlu0 %181
      %183 = vadd.xlane.f32.xlu0 %v172
      %v184 = vpop.xlane.xlu0 %183
      %185 = vadd.xlane.f32.xlu0 %v173
      %v186 = vpop.xlane.xlu0 %185
      %187 = vadd.xlane.f32.xlu0 %v174
      %v188 = vpop.xlane.xlu0 %187
      %189 = vadd.xlane.f32.xlu0 %v175
      %v190 = vpop.xlane.xlu0 %189
      %191 = vadd.xlane.f32.xlu0 %v176
      %v192 = vpop.xlane.xlu0 %191
      %193 = vadd.xlane.f32.xlu0 %v177
      %v194 = vpop.xlane.xlu0 %193
      %195 = vadd.xlane.f32.xlu0 %v178
      %v196 = vpop.xlane.xlu0 %195
      %197 = vadd.xlane.f32.xlu0 %v179
      %v198 = vpop.xlane.xlu0 %197
      %vm199 = vcmask 1044480
      %v200 = vsel %vm199, %v180, 0.0
      %201 = vadd.xlane.f32.xlu0 %v200
      %v202 = vpop.xlane.xlu0 %201
      %v203 = vrcp.pop 128.0
      %v204 = vmul.f32 %v182, %v203
      %v205 = vmul.f32 %v184, %v203
      %v206 = vmul.f32 %v186, %v203
      %v207 = vmul.f32 %v188, %v203
      %v208 = vmul.f32 %v190, %v203
      %v209 = vmul.f32 %v192, %v203
      %v210 = vmul.f32 %v194, %v203
      %v211 = vmul.f32 %v196, %v203
      %v212 = vmul.f32 %v198, %v203
      %v213 = vmul.f32 %v202, %v203
      %v214 = vsub.f32 %v171, %v204
      %v215 = vsub.f32 %v172, %v205
      %v216 = vsub.f32 %v173, %v206
      %v217 = vsub.f32 %v174, %v207
      %v218 = vsub.f32 %v175, %v208
      %v219 = vsub.f32 %v176, %v209
      %v220 = vsub.f32 %v177, %v210
      %v221 = vsub.f32 %v178, %v211
      %v222 = vsub.f32 %v179, %v212
      %v223 = vsub.f32 %v180, %v213
      %v224 = vmul.f32 %v214, %v214
      %v225 = vmul.f32 %v215, %v215
      %v226 = vmul.f32 %v216, %v216
      %v227 = vmul.f32 %v217, %v217
      %v228 = vmul.f32 %v218, %v218
      %v229 = vmul.f32 %v219, %v219
      %v230 = vmul.f32 %v220, %v220
      %v231 = vmul.f32 %v221, %v221
      %v232 = vmul.f32 %v222, %v222
      %v233 = vmul.f32 %v223, %v223
      %234 = vadd.xlane.f32.xlu0 %v224
      %v235 = vpop.xlane.xlu0 %234
      %236 = vadd.xlane.f32.xlu0 %v225
      %v237 = vpop.xlane.xlu0 %236
      %238 = vadd.xlane.f32.xlu0 %v226
      %v239 = vpop.xlane.xlu0 %238
      %240 = vadd.xlane.f32.xlu0 %v227
      %v241 = vpop.xlane.xlu0 %240
      %242 = vadd.xlane.f32.xlu0 %v228
      %v243 = vpop.xlane.xlu0 %242
      %244 = vadd.xlane.f32.xlu0 %v229
      %v245 = vpop.xlane.xlu0 %244
      %246 = vadd.xlane.f32.xlu0 %v230
      %v247 = vpop.xlane.xlu0 %246
      %248 = vadd.xlane.f32.xlu0 %v231
      %v249 = vpop.xlane.xlu0 %248
      %250 = vadd.xlane.f32.xlu0 %v232
      %v251 = vpop.xlane.xlu0 %250
      %v252 = vsel %vm199, %v233, 0.0
      %253 = vadd.xlane.f32.xlu0 %v252
      %v254 = vpop.xlane.xlu0 %253
      %v255 = vmul.f32 %v235, %v203
      %v256 = vmul.f32 %v237, %v203
      %v257 = vmul.f32 %v239, %v203
      %v258 = vmul.f32 %v241, %v203
      %v259 = vmul.f32 %v243, %v203
      %v260 = vmul.f32 %v245, %v203
      %v261 = vmul.f32 %v247, %v203
      %v262 = vmul.f32 %v249, %v203
      %v263 = vmul.f32 %v251, %v203
      %v264 = vmul.f32 %v254, %v203
      %v265 = vadd.f32 %v255, 1e-05
      %v266 = vadd.f32 %v256, 1e-05
      %v267 = vadd.f32 %v257, 1e-05
      %v268 = vadd.f32 %v258, 1e-05
      %v269 = vadd.f32 %v259, 1e-05
      %v270 = vadd.f32 %v260, 1e-05
      %v271 = vadd.f32 %v261, 1e-05
      %v272 = vadd.f32 %v262, 1e-05
      %v273 = vadd.f32 %v263, 1e-05
      %v274 = vadd.f32 %v264, 1e-05
      %v275 = vrsqrt.pop %v265
      %v276 = vrsqrt.pop %v266
      %v277 = vrsqrt.pop %v267
      %v278 = vrsqrt.pop %v268
      %v279 = vrsqrt.pop %v269
      %v280 = vrsqrt.pop %v270
      %v281 = vrsqrt.pop %v271
      %v282 = vrsqrt.pop %v272
      %v283 = vrsqrt.pop %v273
      %v284 = vrsqrt.pop %v274
      %v285 = vmul.f32 %v214, %v275
      %v286 = vmul.f32 %v215, %v276
      %v287 = vmul.f32 %v216, %v277
      %v288 = vmul.f32 %v217, %v278
      %v289 = vmul.f32 %v218, %v279
      %v290 = vmul.f32 %v219, %v280
      %v291 = vmul.f32 %v220, %v281
      %v292 = vmul.f32 %v221, %v282
      %v293 = vmul.f32 %v222, %v283
      %v294 = vmul.f32 %v223, %v284
      %v295 = vld [vmem:[%s1] sm:$0x1]
      %v297 = vlaneseq
      %v298 = vshrl.u32 %v297, 7
      %v299 = vsub.s32 0, %v298
      %v300 = vrot.slane %v295, %v299
      %v302 = vmul.f32 %v285, %v300
      %v303 = vmul.f32 %v286, %v300
      %v304 = vmul.f32 %v287, %v300
      %v305 = vmul.f32 %v288, %v300
      %v306 = vmul.f32 %v289, %v300
      %v307 = vmul.f32 %v290, %v300
      %v308 = vmul.f32 %v291, %v300
      %v309 = vmul.f32 %v292, %v300
      %v310 = vmul.f32 %v293, %v300
      %v311 = vmul.f32 %v294, %v300
      %v312 = vld [vmem:[%s2] sm:$0x1]
      %v314 = vlaneseq
      %v315 = vshrl.u32 %v314, 7
      %v316 = vsub.s32 0, %v315
      %v317 = vrot.slane %v312, %v316
      %v319 = vadd.f32 %v302, %v317
      %v320 = vadd.f32 %v303, %v317
      %v321 = vadd.f32 %v304, %v317
      %v322 = vadd.f32 %v305, %v317
      %v323 = vadd.f32 %v306, %v317
      %v324 = vadd.f32 %v307, %v317
      %v325 = vadd.f32 %v308, %v317
      %v326 = vadd.f32 %v309, %v317
      %v327 = vadd.f32 %v310, %v317
      %v328 = vadd.f32 %v311, %v317
      %329 = vst [vmem:[%s170] sm:$0xff] %v319
      %330 = vst [vmem:[%s170 + $0x8] sm:$0xff] %v320
      %331 = vst [vmem:[%s170 + $0x10] sm:$0xff] %v321
      %332 = vst [vmem:[%s170 + $0x18] sm:$0xff] %v322
      %333 = vst [vmem:[%s170 + $0x20] sm:$0xff] %v323
      %334 = vst [vmem:[%s170 + $0x28] sm:$0xff] %v324
      %335 = vst [vmem:[%s170 + $0x30] sm:$0xff] %v325
      %336 = vst [vmem:[%s170 + $0x38] sm:$0xff] %v326
      %337 = vst [vmem:[%s170 + $0x40] sm:$0xff] %v327
      %338 = vst [vmem:[%s170 + $0x48] sm:$0x1f] %v328
      %p339 = scmp.lt.s32.totalorder %s14, 1
      %s340 = scalar_select %p339, %s14, 1
      %s341 = smul.addr %s340, 10
      %s342 = smul.addr %s341, 8
      %s343 = scalar_lea.vmem %s3, %s342
      // Predicated region
      $region33: #{_clip_text_forward.17} parent=31 // pred_check
        %p344 = pneg %p100
      $region34: #{_clip_text_forward.17} parent=31 // pred_check_branch
        %346 = sbr.rel (%p344) target = $region36
      $region35: #{_clip_text_forward.17} parent=31 // pred_region
        _
      $region36: #{_clip_text_forward.17} parent=31 // pred_fallthru
        _
    $region32: #{_clip_text_forward.17} parent=5 // pred_fallthru
      _
    %p347 = scmp.le.s32.totalorder 2, %s9
    // Predicated region
    $region37: #{_clip_text_forward.17} parent=5 // pred_check
      %p348 = pneg %p347
    $region38: #{_clip_text_forward.17} parent=5 // pred_check_branch
      %350 = sbr.rel (%p348) target = $region40
    $region39: #{_clip_text_forward.17} parent=5 // pred_region
      %s351 = ssub.s32 %s9, 2
      // Predicated region
      $region41: #{_clip_text_forward.17} parent=39 // pred_check
        %p352 = pneg %p106
      $region42: #{_clip_text_forward.17} parent=39 // pred_check_branch
        %354 = sbr.rel (%p352) target = $region44
      $region43: #{_clip_text_forward.17} parent=39 // pred_region
        %p355 = scmp.lt.s32.totalorder %s15, 1
        %s356 = scalar_select %p355, %s15, 1
        %s357 = smul.addr %s356, 10
        %s358 = smul.addr %s357, 8
        %s359 = scalar_lea.vmem %s3, %s358
      $region44: #{_clip_text_forward.17} parent=39 // pred_fallthru
        _
    $region40: #{_clip_text_forward.17} parent=5 // pred_fallthru
      _
  $region6: #{_clip_text_forward.17} parent=0 // loop_footer
    %s13 = sadd.s32 1, %s9
  $region7: #{_clip_text_forward.17} parent=0 // loop_footer_branch
    %8 = sbr.rel target = $region3
  $region8: #{_clip_text_forward.17} parent=0 // loop_exit
    _

// kernel: _clip_text_forward.18
$region0: #{_clip_text_forward.18}
  #allocation0 [shape = 'u32[]', space=smem, size = 0x4, offset = 0x4, fixed_abs, tag = 'smem constant byte address 0x4 - core index']
  #allocation1 [shape = 'u32[144,128]{1,0:T(1,128)}', space=vmem, size = 0x12000, scoped, tag = 'internal scratch']
  %s0 = inlined_call_operand.vmem [shape: f32[154,128], index: 0, kind: input, shape index: {}]
  %s1 = inlined_call_operand.vmem [shape: f32[128,384], index: 1, kind: input, shape index: {}]
  %s2 = inlined_call_operand.vmem [shape: f32[1,384], index: 2, kind: input, shape index: {}]
  %s3 = inlined_call_operand.vmem [shape: f32[154,384], index: 3, kind: output, shape index: {}]
  %s4 = sld [smem:[#allocation0]]
  $region117: #{_clip_text_forward.18} parent=0
    _
  %s6 = ssub.s32 1, %s4
  %s7 = scalar_select 0, %s6, %s4
  $region1: #{_clip_text_forward.18} parent=0
    #allocation2 [shape = 'u8[131072]{0}', space=vmem, size = 0x20000, scoped, tag = 'input window, operand 1']
    #allocation3 [shape = 'u8[163840]{0}', space=vmem, size = 0x28000, scoped, tag = 'output window, operand 0']
    loop: start=0, step=1, limit=5
    $region2: #{_clip_text_forward.18} parent=1 // loop_pre_header
      _
    $region3: #{_clip_text_forward.18} parent=1 // loop_header
      %s9 = sphi 0, %s13
      %p10 = scmp.ge.s32.totalorder %s9, 5
      %s17 = sphi 0, %s17
      %s19 = sphi 0, %s17
      %s20 = sphi 0, %s19
      %s34 = sphi 0, %s20
      %s40 = sphi 0, %s42
      %s43 = sphi 0, %s40
      %s44 = sphi 0, %s43
      %s60 = sphi 0, %s44
      %s66 = sphi 0, %s68
      %s69 = sphi 0, %s66
      %s70 = sphi 0, %s69
      %s86 = sphi 0, %s70
      %s92 = sphi 0, %s94
      %s95 = sphi 0, %s92
      %s96 = sphi 0, %s95
      %s112 = sphi 0, %s96
    $region4: #{_clip_text_forward.18} parent=1 // loop_header_branch
      %12 = sbr.rel (%p10) target = $region8
    $region5: #{_clip_text_forward.18} parent=1 // loop_body
      %s14 = ssub.s32 %s9, 1
      %s15 = ssub.s32 %s9, 2
      %s16 = sadd.s32 %s9, 1
      %s18 = sadd.s32 %s17, 1
      %p21 = scmp.eq.s32.totalorder %s9, 2
      %p22 = scmp.ne.s32.totalorder %s17, %s19
      %p23 = scmp.eq.s32.totalorder %s9, 0
      %p24 = por %p22, %p23
      %p25 = scmp.ne.s32.totalorder %s17, %s19
      %p26 = scmp.eq.s32.totalorder %s14, 2
      %p27 = por %p25, %p26
      %p28 = scmp.ne.s32.totalorder %s19, %s20
      %p29 = scmp.eq.s32.totalorder %s14, 0
      %p30 = por %p28, %p29
      %p31 = scmp.ne.s32.totalorder %s19, %s20
      %p32 = scmp.eq.s32.totalorder %s15, 2
      %p33 = por %p31, %p32
      %p35 = scmp.ne.s32.totalorder %s20, %s34
      %p36 = scmp.eq.s32.totalorder %s15, 0
      %p37 = por %p35, %p36
      %s38 = ssub.s32 %s9, %s16
      %p39 = scmp.eq.s32.totalorder %s38, 0
      %s41 = sadd.s32 %s40, 1
      %s42 = scalar_select %p39, %s40, %s41
      %p45 = pneg %p39
      %p46 = scmp.eq.s32.totalorder %s9, 2
      %p47 = por %p45, %p46
      %p48 = scmp.ne.s32.totalorder %s40, %s43
      %p49 = scmp.eq.s32.totalorder %s9, 0
      %p50 = por %p48, %p49
      %p51 = scmp.ne.s32.totalorder %s40, %s43
      %p52 = scmp.eq.s32.totalorder %s14, 2
      %p53 = por %p51, %p52
      %p54 = scmp.ne.s32.totalorder %s43, %s44
      %p55 = scmp.eq.s32.totalorder %s14, 0
      %p56 = por %p54, %p55
      %p57 = scmp.ne.s32.totalorder %s43, %s44
      %p58 = scmp.eq.s32.totalorder %s15, 2
      %p59 = por %p57, %p58
      %p61 = scmp.ne.s32.totalorder %s44, %s60
      %p62 = scmp.eq.s32.totalorder %s15, 0
      %p63 = por %p61, %p62
      %s64 = ssub.s32 %s9, %s16
      %p65 = scmp.eq.s32.totalorder %s64, 0
      %s67 = sadd.s32 %s66, 1
      %s68 = scalar_select %p65, %s66, %s67
      %p71 = pneg %p65
      %p72 = scmp.eq.s32.totalorder %s9, 2
      %p73 = por %p71, %p72
      %p74 = scmp.ne.s32.totalorder %s66, %s69
      %p75 = scmp.eq.s32.totalorder %s9, 0
      %p76 = por %p74, %p75
      %p77 = scmp.ne.s32.totalorder %s66, %s69
      %p78 = scmp.eq.s32.totalorder %s14, 2
      %p79 = por %p77, %p78
      %p80 = scmp.ne.s32.totalorder %s69, %s70
      %p81 = scmp.eq.s32.totalorder %s14, 0
      %p82 = por %p80, %p81
      %p83 = scmp.ne.s32.totalorder %s69, %s70
      %p84 = scmp.eq.s32.totalorder %s15, 2
      %p85 = por %p83, %p84
      %p87 = scmp.ne.s32.totalorder %s70, %s86
      %p88 = scmp.eq.s32.totalorder %s15, 0
      %p89 = por %p87, %p88
      %s90 = ssub.s32 %s9, %s16
      %p91 = scmp.eq.s32.totalorder %s90, 0
      %s93 = sadd.s32 %s92, 1
      %s94 = scalar_select %p91, %s92, %s93
      %p97 = pneg %p91
      %p98 = scmp.eq.s32.totalorder %s9, 2
      %p99 = por %p97, %p98
      %p100 = scmp.ne.s32.totalorder %s92, %s95
      %p101 = scmp.eq.s32.totalorder %s9, 0
      %p102 = por %p100, %p101
      %p103 = scmp.ne.s32.totalorder %s92, %s95
      %p104 = scmp.eq.s32.totalorder %s14, 2
      %p105 = por %p103, %p104
      %p106 = scmp.ne.s32.totalorder %s95, %s96
      %p107 = scmp.eq.s32.totalorder %s14, 0
      %p108 = por %p106, %p107
      %p109 = scmp.ne.s32.totalorder %s95, %s96
      %p110 = scmp.eq.s32.totalorder %s15, 2
      %p111 = por %p109, %p110
      %p113 = scmp.ne.s32.totalorder %s96, %s112
      %p114 = scmp.eq.s32.totalorder %s15, 0
      %p115 = por %p113, %p114
      %p116 = scmp.le.s32.totalorder 1, %s9
      %p117 = scmp.lt.s32.totalorder %s9, 4
      %p118 = pnand %p116, %p117
      %p119 = pneg %p118
      // Predicated region
      $region9: #{_clip_text_forward.18} parent=5 // pred_check
        _
      $region10: #{_clip_text_forward.18} parent=5 // pred_check_branch
        %121 = sbr.rel (%p118) target = $region12
      $region11: #{_clip_text_forward.18} parent=5 // pred_region
        %s122 = ssub.s32 %s9, 1
        // Predicated region
        $region13: #{_clip_text_forward.18} parent=11 // pred_check
          %p123 = pneg %p30
        $region14: #{_clip_text_forward.18} parent=11 // pred_check_branch
          %125 = sbr.rel (%p123) target = $region16
        $region15: #{_clip_text_forward.18} parent=11 // pred_region
          _
        $region16: #{_clip_text_forward.18} parent=11 // pred_fallthru
          _
      $region12: #{_clip_text_forward.18} parent=5 // pred_fallthru
        _
      %p126 = scmp.lt.s32.totalorder %s9, 3
      // Predicated region
      $region17: #{_clip_text_forward.18} parent=5 // pred_check
        %p127 = pneg %p126
      $region18: #{_clip_text_forward.18} parent=5 // pred_check_branch
        %129 = sbr.rel (%p127) target = $region20
      $region19: #{_clip_text_forward.18} parent=5 // pred_region
        // Predicated region
        $region21: #{_clip_text_forward.18} parent=19 // pred_check
          %p130 = pneg %p50
        $region22: #{_clip_text_forward.18} parent=19 // pred_check_branch
          %132 = sbr.rel (%p130) target = $region24
        $region23: #{_clip_text_forward.18} parent=19 // pred_region
          %s133 = sand.u32 %s40, 1
          %s134 = sand.u32 %s40, 1
          %s135 = smul.addr %s134, 128
          %s136 = scalar_lea.vmem [#allocation2], %s135
          %s137 = smul.addr %s9, 8
          %s138 = scalar_lea.vmem %s1, %s137
          // Predicated region
          $region25: #{_clip_text_forward.18} parent=23 // pred_check
            _
          $region26: #{_clip_text_forward.18} parent=23 // pred_check_branch
            %140 = sbr.rel (0) target = $region28
          $region27: #{_clip_text_forward.18} parent=23 // pred_region
            // Predicated region
            $region29: #{_clip_text_forward.18} parent=27 // pred_check
              _
            $region30: #{_clip_text_forward.18} parent=27 // pred_check_branch
              %142 = sbr.rel (0) target = $region32
            $region31: #{_clip_text_forward.18} parent=27 // pred_region
              // Predicated region
              $region44: #{_clip_text_forward.18} parent=31 // pred_check
                _
              $region45: #{_clip_text_forward.18} parent=31 // pred_check_branch
                %187 = sbr.rel (0) target = $region47
              $region46: #{_clip_text_forward.18} parent=31 // pred_region
                loop: start=0, step=1, limit=1
                $region48: #{_clip_text_forward.18} parent=46 // loop_pre_header
                  _
                $region49: #{_clip_text_forward.18} parent=46 // loop_header
                  %s189 = sphi 0, %s193
                  %p190 = scmp.ge.s32.totalorder %s189, 1
                  %s194 = sphi %s138, %s138
                  %s195 = sphi %s136, %s136
                $region50: #{_clip_text_forward.18} parent=46 // loop_header_branch
                  %192 = sbr.rel (%p190) target = $region54
                $region51: #{_clip_text_forward.18} parent=46 // loop_body
                  %v196 = vld [vmem:[%s194] sm:$0xff]
                  %197 = vst [vmem:[%s195] sm:$0xff] %v196
                  %v198 = vld [vmem:[%s194 + $0x18] sm:$0xff]
                  %199 = vst [vmem:[%s195 + $0x8] sm:$0xff] %v198
                  %v200 = vld [vmem:[%s194 + $0x30] sm:$0xff]
                  %201 = vst [vmem:[%s195 + $0x10] sm:$0xff] %v200
                  %v202 = vld [vmem:[%s194 + $0x48] sm:$0xff]
                  %203 = vst [vmem:[%s195 + $0x18] sm:$0xff] %v202
                  %v204 = vld [vmem:[%s194 + $0x60] sm:$0xff]
                  %205 = vst [vmem:[%s195 + $0x20] sm:$0xff] %v204
                  %v206 = vld [vmem:[%s194 + $0x78] sm:$0xff]
                  %207 = vst [vmem:[%s195 + $0x28] sm:$0xff] %v206
                  %v208 = vld [vmem:[%s194 + $0x90] sm:$0xff]
                  %209 = vst [vmem:[%s195 + $0x30] sm:$0xff] %v208
                  %v210 = vld [vmem:[%s194 + $0xa8] sm:$0xff]
                  %211 = vst [vmem:[%s195 + $0x38] sm:$0xff] %v210
                  %v212 = vld [vmem:[%s194 + $0xc0] sm:$0xff]
                  %213 = vst [vmem:[%s195 + $0x40] sm:$0xff] %v212
                  %v214 = vld [vmem:[%s194 + $0xd8] sm:$0xff]
                  %215 = vst [vmem:[%s195 + $0x48] sm:$0xff] %v214
                  %v216 = vld [vmem:[%s194 + $0xf0] sm:$0xff]
                  %217 = vst [vmem:[%s195 + $0x50] sm:$0xff] %v216
                  %v218 = vld [vmem:[%s194 + $0x108] sm:$0xff]
                  %219 = vst [vmem:[%s195 + $0x58] sm:$0xff] %v218
                  %v220 = vld [vmem:[%s194 + $0x120] sm:$0xff]
                  %221 = vst [vmem:[%s195 + $0x60] sm:$0xff] %v220
                  %v222 = vld [vmem:[%s194 + $0x138] sm:$0xff]
                  %223 = vst [vmem:[%s195 + $0x68] sm:$0xff] %v222
                  %v224 = vld [vmem:[%s194 + $0x150] sm:$0xff]
                  %225 = vst [vmem:[%s195 + $0x70] sm:$0xff] %v224
                  %v226 = vld [vmem:[%s194 + $0x168] sm:$0xff]
                  %227 = vst [vmem:[%s195 + $0x78] sm:$0xff] %v226
                $region52: #{_clip_text_forward.18} parent=46 // loop_footer
                  %s193 = sadd.s32 1, %s189
                $region53: #{_clip_text_forward.18} parent=46 // loop_footer_branch
                  %188 = sbr.rel target = $region49
                $region54: #{_clip_text_forward.18} parent=46 // loop_exit
                  _
              $region47: #{_clip_text_forward.18} parent=31 // pred_fallthru
                _
              // Predicated region
              $region55: #{_clip_text_forward.18} parent=31 // pred_check
                _
              $region56: #{_clip_text_forward.18} parent=31 // pred_check_branch
                %229 = sbr.rel target = $region58
              $region57: #{_clip_text_forward.18} parent=31 // pred_region
                _
              $region58: #{_clip_text_forward.18} parent=31 // pred_fallthru
                _
            $region32: #{_clip_text_forward.18} parent=27 // pred_fallthru
              _
            // Predicated region
            $region33: #{_clip_text_forward.18} parent=27 // pred_check
              _
            $region34: #{_clip_text_forward.18} parent=27 // pred_check_branch
              %144 = sbr.rel target = $region36
            $region35: #{_clip_text_forward.18} parent=27 // pred_region
              loop: start=0, step=1, limit=1
              $region37: #{_clip_text_forward.18} parent=35 // loop_pre_header
                _
              $region38: #{_clip_text_forward.18} parent=35 // loop_header
                %s147 = sphi 0, %s151
                %p148 = scmp.ge.s32.totalorder %s147, 1
                %s152 = sphi %s138, %s138
                %s153 = sphi %s136, %s136
              $region39: #{_clip_text_forward.18} parent=35 // loop_header_branch
                %150 = sbr.rel (%p148) target = $region43
              $region40: #{_clip_text_forward.18} parent=35 // loop_body
                %v154 = vld [vmem:[%s152] sm:$0xff]
                %155 = vst [vmem:[%s153] sm:$0xff] %v154
                %v156 = vld [vmem:[%s152 + $0x18] sm:$0xff]
                %157 = vst [vmem:[%s153 + $0x8] sm:$0xff] %v156
                %v158 = vld [vmem:[%s152 + $0x30] sm:$0xff]
                %159 = vst [vmem:[%s153 + $0x10] sm:$0xff] %v158
                %v160 = vld [vmem:[%s152 + $0x48] sm:$0xff]
                %161 = vst [vmem:[%s153 + $0x18] sm:$0xff] %v160
                %v162 = vld [vmem:[%s152 + $0x60] sm:$0xff]
                %163 = vst [vmem:[%s153 + $0x20] sm:$0xff] %v162
                %v164 = vld [vmem:[%s152 + $0x78] sm:$0xff]
                %165 = vst [vmem:[%s153 + $0x28] sm:$0xff] %v164
                %v166 = vld [vmem:[%s152 + $0x90] sm:$0xff]
                %167 = vst [vmem:[%s153 + $0x30] sm:$0xff] %v166
                %v168 = vld [vmem:[%s152 + $0xa8] sm:$0xff]
                %169 = vst [vmem:[%s153 + $0x38] sm:$0xff] %v168
                %v170 = vld [vmem:[%s152 + $0xc0] sm:$0xff]
                %171 = vst [vmem:[%s153 + $0x40] sm:$0xff] %v170
                %v172 = vld [vmem:[%s152 + $0xd8] sm:$0xff]
                %173 = vst [vmem:[%s153 + $0x48] sm:$0xff] %v172
                %v174 = vld [vmem:[%s152 + $0xf0] sm:$0xff]
                %175 = vst [vmem:[%s153 + $0x50] sm:$0xff] %v174
                %v176 = vld [vmem:[%s152 + $0x108] sm:$0xff]
                %177 = vst [vmem:[%s153 + $0x58] sm:$0xff] %v176
                %v178 = vld [vmem:[%s152 + $0x120] sm:$0xff]
                %179 = vst [vmem:[%s153 + $0x60] sm:$0xff] %v178
                %v180 = vld [vmem:[%s152 + $0x138] sm:$0xff]
                %181 = vst [vmem:[%s153 + $0x68] sm:$0xff] %v180
                %v182 = vld [vmem:[%s152 + $0x150] sm:$0xff]
                %183 = vst [vmem:[%s153 + $0x70] sm:$0xff] %v182
                %v184 = vld [vmem:[%s152 + $0x168] sm:$0xff]
                %185 = vst [vmem:[%s153 + $0x78] sm:$0xff] %v184
              $region41: #{_clip_text_forward.18} parent=35 // loop_footer
                %s151 = sadd.s32 1, %s147
              $region42: #{_clip_text_forward.18} parent=35 // loop_footer_branch
                %146 = sbr.rel target = $region38
              $region43: #{_clip_text_forward.18} parent=35 // loop_exit
                _
            $region36: #{_clip_text_forward.18} parent=27 // pred_fallthru
              _
          $region28: #{_clip_text_forward.18} parent=23 // pred_fallthru
            _
          %230 = vnop
        $region24: #{_clip_text_forward.18} parent=19 // pred_fallthru
          _
        // Predicated region
        $region59: #{_clip_text_forward.18} parent=19 // pred_check
          %p231 = pneg %p76
        $region60: #{_clip_text_forward.18} parent=19 // pred_check_branch
          %233 = sbr.rel (%p231) target = $region62
        $region61: #{_clip_text_forward.18} parent=19 // pred_region
          %p234 = scmp.lt.s32.totalorder %s9, 2
          %s235 = scalar_select %p234, %s9, 2
          %s236 = scalar_lea.vmem %s2, %s235
        $region62: #{_clip_text_forward.18} parent=19 // pred_fallthru
          _
      $region20: #{_clip_text_forward.18} parent=5 // pred_fallthru
        _
      %p237 = scmp.le.s32.totalorder 1, %s9
      %p238 = scmp.lt.s32.totalorder %s9, 4
      %p239 = pnand %p237, %p238
      %p240 = pneg %p239
      // Predicated region
      $region63: #{_clip_text_forward.18} parent=5 // pred_check
        _
      $region64: #{_clip_text_forward.18} parent=5 // pred_check_branch
        %242 = sbr.rel (%p239) target = $region66
      $region65: #{_clip_text_forward.18} parent=5 // pred_region
        %s243 = ssub.s32 %s9, 1
        %s244 = sand.u32 %s43, 1
        %s245 = sand.u32 %s43, 1
        %s246 = smul.addr %s245, 128
        %s247 = scalar_lea.vmem [#allocation2], %s246
        // Predicated region
        $region67: #{_clip_text_forward.18} parent=65 // pred_check
          %p248 = pneg %p56
        $region68: #{_clip_text_forward.18} parent=65 // pred_check_branch
          %250 = sbr.rel (%p248) target = $region70
        $region69: #{_clip_text_forward.18} parent=65 // pred_region
          _
        $region70: #{_clip_text_forward.18} parent=65 // pred_fallthru
          _
        %p251 = pneg %p30
        %p252 = pneg %p27
        %s253 = sand.u32 %s43, 1
        %s254 = sand.u32 %s43, 1
        %s255 = smul.addr %s254, 128
        %s256 = scalar_lea.vmem [#allocation2], %s255
        %p257 = pneg %p56
        %p258 = pneg %p53
        %p259 = scmp.lt.s32.totalorder %s14, 2
        %s260 = scalar_select %p259, %s14, 2
        %s261 = scalar_lea.vmem %s2, %s260
        %p262 = pneg %p82
        %p263 = pneg %p79
        %p264 = pneg %p108
        %p265 = pneg %p105
        %s266 = sand.u32 %s95, 1
        %s267 = sand.u32 %s95, 1
        %s268 = smul.addr %s267, 160
        %s269 = scalar_lea.vmem [#allocation3], %s268
        %p270 = scmp.lt.s32.totalorder %s14, 2
        %s271 = scalar_select %p270, %s14, 2
        %s272 = scalar_lea.vmem %s2, %s271
        %v273 = vld [vmem:[%s0] sm:$0xff]
        %v274 = vld [vmem:[%s0 + $0x8] sm:$0xff]
        %v275 = vld [vmem:[%s0 + $0x10] sm:$0xff]
        %v276 = vld [vmem:[%s0 + $0x18] sm:$0xff]
        %v277 = vld [vmem:[%s0 + $0x20] sm:$0xff]
        %v278 = vld [vmem:[%s0 + $0x28] sm:$0xff]
        %v279 = vld [vmem:[%s0 + $0x30] sm:$0xff]
        %v280 = vld [vmem:[%s0 + $0x38] sm:$0xff]
        %v281 = vld [vmem:[%s0 + $0x40] sm:$0xff]
        %v282 = vld [vmem:[%s0 + $0x48] sm:$0xff]
        %v283 = vld [vmem:[%s0 + $0x50] sm:$0xff]
        %v284 = vld [vmem:[%s0 + $0x58] sm:$0xff]
        %v285 = vld [vmem:[%s0 + $0x60] sm:$0xff]
        %v286 = vld [vmem:[%s0 + $0x68] sm:$0xff]
        %v287 = vld [vmem:[%s0 + $0x70] sm:$0xff]
        %v288 = vld [vmem:[%s0 + $0x78] sm:$0xff]
        %v289 = vld [vmem:[%s0 + $0x80] sm:$0xff]
        %v290 = vld [vmem:[%s0 + $0x88] sm:$0xff]
        %v291 = vld [vmem:[%s0 + $0x90] sm:$0xff]
        %v292 = vld [vmem:[%s0 + $0x98] sm:$0x3]
        %v293 = vld [vmem:[%s247] sm:$0xff]
        %v294 = vld [vmem:[%s247 + $0x8] sm:$0xff]
        %v295 = vld [vmem:[%s247 + $0x10] sm:$0xff]
        %v296 = vld [vmem:[%s247 + $0x18] sm:$0xff]
        %v297 = vld [vmem:[%s247 + $0x20] sm:$0xff]
        %v298 = vld [vmem:[%s247 + $0x28] sm:$0xff]
        %v299 = vld [vmem:[%s247 + $0x30] sm:$0xff]
        %v300 = vld [vmem:[%s247 + $0x38] sm:$0xff]
        %v301 = vld [vmem:[%s247 + $0x40] sm:$0xff]
        %v302 = vld [vmem:[%s247 + $0x48] sm:$0xff]
        %v303 = vld [vmem:[%s247 + $0x50] sm:$0xff]
        %v304 = vld [vmem:[%s247 + $0x58] sm:$0xff]
        %v305 = vld [vmem:[%s247 + $0x60] sm:$0xff]
        %v306 = vld [vmem:[%s247 + $0x68] sm:$0xff]
        %v307 = vld [vmem:[%s247 + $0x70] sm:$0xff]
        %v308 = vld [vmem:[%s247 + $0x78] sm:$0xff]
        %v309 = vld [vmem:[%s272] sm:$0x1]
        %v311 = vlaneseq
        %v312 = vshrl.u32 %v311, 7
        %v313 = vsub.s32 0, %v312
        %v314 = vrot.slane %v309, %v313
        %316 = vmatprep.subr.mxu0 0.0
        %317 = vmatpush1.msra.mxu0 %v293
        %318 = vmatprep.subr.mxu0 0.0
        %319 = vmatpush1.msra.mxu0 %v294
        %320 = vmatprep.subr.mxu0 0.0
        %321 = vmatpush1.msra.mxu0 %v295
        %322 = vmatprep.subr.mxu0 0.0
        %323 = vmatpush1.msra.mxu0 %v296
        %324 = vmatprep.subr.mxu0 0.0
        %325 = vmatpush1.msra.mxu0 %v297
        %326 = vmatprep.subr.mxu0 0.0
        %327 = vmatpush1.msra.mxu0 %v298
        %328 = vmatprep.subr.mxu0 0.0
        %329 = vmatpush1.msra.mxu0 %v299
        %330 = vmatprep.subr.mxu0 0.0
        %331 = vmatpush1.msra.mxu0 %v300
        %332 = vmatprep.subr.mxu0 0.0
        %333 = vmatpush1.msra.mxu0 %v301
        %334 = vmatprep.subr.mxu0 0.0
        %335 = vmatpush1.msra.mxu0 %v302
        %336 = vmatprep.subr.mxu0 0.0
        %337 = vmatpush1.msra.mxu0 %v303
        %338 = vmatprep.subr.mxu0 0.0
        %339 = vmatpush1.msra.mxu0 %v304
        %340 = vmatprep.subr.mxu0 0.0
        %341 = vmatpush1.msra.mxu0 %v305
        %342 = vmatprep.subr.mxu0 0.0
        %343 = vmatpush1.msra.mxu0 %v306
        %344 = vmatprep.subr.mxu0 0.0
        %345 = vmatpush1.msra.mxu0 %v307
        %346 = vmatprep.subr.mxu0 0.0
        %347 = vmatpush1.msra.mxu0 %v308
        %348 = vmatprep.subr.mxu0 0.0
        %349 = vmatpush1.msra.mxu0 0.0
        %350 = vmatprep.subr.mxu0 0.0
        %351 = vmatpush1.msra.mxu0 0.0
        %352 = vmatprep.subr.mxu0 0.0
        %353 = vmatpush1.msra.mxu0 0.0
        %354 = vmatprep.subr.mxu0 0.0
        %355 = vmatpush1.msra.mxu0 0.0
        %356 = vmatprep.subr.mxu0 0.0
        %357 = vmatpush1.msra.mxu0 0.0
        %358 = vmatprep.subr.mxu0 0.0
        %359 = vmatpush1.msra.mxu0 0.0
        %360 = vmatprep.subr.mxu0 0.0
        %361 = vmatpush1.msra.mxu0 0.0
        %362 = vmatprep.subr.mxu0 0.0
        %363 = vmatpush1.msra.mxu0 0.0
        %364 = vmatprep.subr.mxu0 0.0
        %365 = vmatpush1.msra.mxu0 0.0
        %366 = vmatprep.subr.mxu0 0.0
        %367 = vmatpush1.msra.mxu0 0.0
        %368 = vmatprep.subr.mxu0 0.0
        %369 = vmatpush1.msra.mxu0 0.0
        %370 = vmatprep.subr.mxu0 0.0
        %371 = vmatpush1.msra.mxu0 0.0
        %372 = vmatprep.subr.mxu0 0.0
        %373 = vmatpush1.msra.mxu0 0.0
        %374 = vmatprep.subr.mxu0 0.0
        %375 = vmatpush1.msra.mxu0 0.0
        %376 = vmatprep.subr.mxu0 0.0
        %377 = vmatpush1.msra.mxu0 0.0
        %378 = vmatprep.subr.mxu0 0.0
        %379 = vmatpush1.msra.mxu0 0.0
        %380 = vmatprep.mubr.f32.mxu0 0.0
        %381 = vmatmul.mubr.f32.gmra.mrb[0].mxu0 %v273
        %v382 = vpop.f32.mrb[0].mxu0
        %v383 = vadd.f32 %v314, %v382
        %v384 = vpop.f32.mrb[0].mxu0
        %385 = vmatprep.mubr.f32.mxu0 0.0
        %386 = vmatmul.mubr.f32.gmra.mrb[0].mxu0 %v274
        %v387 = vpop.f32.mrb[0].mxu0
        %v388 = vadd.f32 %v314, %v387
        %v389 = vpop.f32.mrb[0].mxu0
        %390 = vmatprep.mubr.f32.mxu0 0.0
        %391 = vmatmul.mubr.f32.gmra.mrb[0].mxu0 %v275
        %v392 = vpop.f32.mrb[0].mxu0
        %v393 = vadd.f32 %v314, %v392
        %v394 = vpop.f32.mrb[0].mxu0
        %395 = vmatprep.mubr.f32.mxu0 0.0
        %396 = vmatmul.mubr.f32.gmra.mrb[0].mxu0 %v276
        %v397 = vpop.f32.mrb[0].mxu0
        %v398 = vadd.f32 %v314, %v397
        %v399 = vpop.f32.mrb[0].mxu0
        %400 = vmatprep.mubr.f32.mxu0 0.0
        %401 = vmatmul.mubr.f32.gmra.mrb[0].mxu0 %v277
        %v402 = vpop.f32.mrb[0].mxu0
        %v403 = vadd.f32 %v314, %v402
        %v404 = vpop.f32.mrb[0].mxu0
        %405 = vmatprep.mubr.f32.mxu0 0.0
        %406 = vmatmul.mubr.f32.gmra.mrb[0].mxu0 %v278
        %v407 = vpop.f32.mrb[0].mxu0
        %v408 = vadd.f32 %v314, %v407
        %v409 = vpop.f32.mrb[0].mxu0
        %410 = vmatprep.mubr.f32.mxu0 0.0
        %411 = vmatmul.mubr.f32.gmra.mrb[0].mxu0 %v279
        %v412 = vpop.f32.mrb[0].mxu0
        %v413 = vadd.f32 %v314, %v412
        %v414 = vpop.f32.mrb[0].mxu0
        %415 = vmatprep.mubr.f32.mxu0 0.0
        %416 = vmatmul.mubr.f32.gmra.mrb[0].mxu0 %v280
        %v417 = vpop.f32.mrb[0].mxu0
        %v418 = vadd.f32 %v314, %v417
        %v419 = vpop.f32.mrb[0].mxu0
        %420 = vmatprep.mubr.f32.mxu0 0.0
        %421 = vmatmul.mubr.f32.gmra.mrb[0].mxu0 %v281
        %v422 = vpop.f32.mrb[0].mxu0
        %v423 = vadd.f32 %v314, %v422
        %v424 = vpop.f32.mrb[0].mxu0
        %425 = vmatprep.mubr.f32.mxu0 0.0
        %426 = vmatmul.mubr.f32.gmra.mrb[0].mxu0 %v282
        %v427 = vpop.f32.mrb[0].mxu0
        %v428 = vadd.f32 %v314, %v427
        %v429 = vpop.f32.mrb[0].mxu0
        %430 = vmatprep.mubr.f32.mxu0 0.0
        %431 = vmatmul.mubr.f32.gmra.mrb[0].mxu0 %v283
        %v432 = vpop.f32.mrb[0].mxu0
        %v433 = vadd.f32 %v314, %v432
        %v434 = vpop.f32.mrb[0].mxu0
        %435 = vmatprep.mubr.f32.mxu0 0.0
        %436 = vmatmul.mubr.f32.gmra.mrb[0].mxu0 %v284
        %v437 = vpop.f32.mrb[0].mxu0
        %v438 = vadd.f32 %v314, %v437
        %v439 = vpop.f32.mrb[0].mxu0
        %440 = vmatprep.mubr.f32.mxu0 0.0
        %441 = vmatmul.mubr.f32.gmra.mrb[0].mxu0 %v285
        %v442 = vpop.f32.mrb[0].mxu0
        %v443 = vadd.f32 %v314, %v442
        %v444 = vpop.f32.mrb[0].mxu0
        %445 = vmatprep.mubr.f32.mxu0 0.0
        %446 = vmatmul.mubr.f32.gmra.mrb[0].mxu0 %v286
        %v447 = vpop.f32.mrb[0].mxu0
        %v448 = vadd.f32 %v314, %v447
        %v449 = vpop.f32.mrb[0].mxu0
        %450 = vmatprep.mubr.f32.mxu0 0.0
        %451 = vmatmul.mubr.f32.gmra.mrb[0].mxu0 %v287
        %v452 = vpop.f32.mrb[0].mxu0
        %v453 = vadd.f32 %v314, %v452
        %v454 = vpop.f32.mrb[0].mxu0
        %455 = vmatprep.mubr.f32.mxu0 0.0
        %456 = vmatmul.mubr.f32.gmra.mrb[0].mxu0 %v288
        %v457 = vpop.f32.mrb[0].mxu0
        %v458 = vadd.f32 %v314, %v457
        %v459 = vpop.f32.mrb[0].mxu0
        %460 = vmatprep.mubr.f32.mxu0 0.0
        %461 = vmatmul.mubr.f32.gmra.mrb[0].mxu0 %v289
        %v462 = vpop.f32.mrb[0].mxu0
        %v463 = vadd.f32 %v314, %v462
        %v464 = vpop.f32.mrb[0].mxu0
        %465 = vmatprep.mubr.f32.mxu0 0.0
        %466 = vmatmul.mubr.f32.gmra.mrb[0].mxu0 %v290
        %v467 = vpop.f32.mrb[0].mxu0
        %v468 = vadd.f32 %v314, %v467
        %v469 = vpop.f32.mrb[0].mxu0
        %470 = vmatprep.mubr.f32.mxu0 0.0
        %471 = vmatmul.mubr.f32.gmra.mrb[0].mxu0 %v291
        %v472 = vpop.f32.mrb[0].mxu0
        %v473 = vadd.f32 %v314, %v472
        %v474 = vpop.f32.mrb[0].mxu0
        %475 = vmatprep.mubr.f32.mxu0 0.0
        %476 = vmatmul.mubr.f32.gmra.mrb[0].mxu0 %v292
        %v477 = vpop.f32.mrb[0].mxu0
        %v478 = vadd.f32 %v314, %v477
        %v479 = vpop.f32.mrb[0].mxu0
        %480 = vdwg.mxu0
        %481 = vst [vmem:[%s269] sm:$0xff] %v383
        %482 = vst [vmem:[%s269 + $0x8] sm:$0xff] %v388
        %483 = vst [vmem:[%s269 + $0x10] sm:$0xff] %v393
        %484 = vst [vmem:[%s269 + $0x18] sm:$0xff] %v398
        %485 = vst [vmem:[%s269 + $0x20] sm:$0xff] %v403
        %486 = vst [vmem:[%s269 + $0x28] sm:$0xff] %v408
        %487 = vst [vmem:[%s269 + $0x30] sm:$0xff] %v413
        %488 = vst [vmem:[%s269 + $0x38] sm:$0xff] %v418
        %489 = vst [vmem:[%s269 + $0x40] sm:$0xff] %v423
        %490 = vst [vmem:[%s269 + $0x48] sm:$0xff] %v428
        %491 = vst [vmem:[%s269 + $0x50] sm:$0xff] %v433
        %492 = vst [vmem:[%s269 + $0x58] sm:$0xff] %v438
        %493 = vst [vmem:[%s269 + $0x60] sm:$0xff] %v443
        %494 = vst [vmem:[%s269 + $0x68] sm:$0xff] %v448
        %495 = vst [vmem:[%s269 + $0x70] sm:$0xff] %v453
        %496 = vst [vmem:[%s269 + $0x78] sm:$0xff] %v458
        %497 = vst [vmem:[%s269 + $0x80] sm:$0xff] %v463
        %498 = vst [vmem:[%s269 + $0x88] sm:$0xff] %v468
        %499 = vst [vmem:[%s269 + $0x90] sm:$0xff] %v473
        %500 = vst [vmem:[%s269 + $0x98] sm:$0x3] %v478
        %s501 = sand.u32 %s95, 1
        %s502 = sand.u32 %s95, 1
        %s503 = smul.addr %s502, 160
        %s504 = scalar_lea.vmem [#allocation3], %s503
        // Predicated region
        $region71: #{_clip_text_forward.18} parent=65 // pred_check
          %p505 = pneg %p105
        $region72: #{_clip_text_forward.18} parent=65 // pred_check_branch
          %507 = sbr.rel (%p505) target = $region74
        $region73: #{_clip_text_forward.18} parent=65 // pred_region
          %s508 = smul.addr %s14, 8
          %s509 = scalar_lea.vmem %s3, %s508
          // Predicated region
          $region75: #{_clip_text_forward.18} parent=73 // pred_check
            _
          $region76: #{_clip_text_forward.18} parent=73 // pred_check_branch
            %511 = sbr.rel (0) target = $region78
          $region77: #{_clip_text_forward.18} parent=73 // pred_region
            // Predicated region
            $region79: #{_clip_text_forward.18} parent=77 // pred_check
              _
            $region80: #{_clip_text_forward.18} parent=77 // pred_check_branch
              %513 = sbr.rel (0) target = $region82
            $region81: #{_clip_text_forward.18} parent=77 // pred_region
              // Predicated region
              $region94: #{_clip_text_forward.18} parent=81 // pred_check
                _
              $region95: #{_clip_text_forward.18} parent=81 // pred_check_branch
                %566 = sbr.rel (0) target = $region97
              $region96: #{_clip_text_forward.18} parent=81 // pred_region
                loop: start=0, step=1, limit=1
                $region98: #{_clip_text_forward.18} parent=96 // loop_pre_header
                  _
                $region99: #{_clip_text_forward.18} parent=96 // loop_header
                  %s568 = sphi 0, %s572
                  %p569 = scmp.ge.s32.totalorder %s568, 1
                  %s573 = sphi %s504, %s504
                  %s574 = sphi %s509, %s509
                $region100: #{_clip_text_forward.18} parent=96 // loop_header_branch
                  %571 = sbr.rel (%p569) target = $region104
                $region101: #{_clip_text_forward.18} parent=96 // loop_body
                  %v575 = vld [vmem:[%s573] sm:$0xff]
                  %576 = vst [vmem:[%s574] sm:$0xff] %v575
                  %v577 = vld [vmem:[%s573 + $0x8] sm:$0xff]
                  %578 = vst [vmem:[%s574 + $0x18] sm:$0xff] %v577
                  %v579 = vld [vmem:[%s573 + $0x10] sm:$0xff]
                  %580 = vst [vmem:[%s574 + $0x30] sm:$0xff] %v579
                  %v581 = vld [vmem:[%s573 + $0x18] sm:$0xff]
                  %582 = vst [vmem:[%s574 + $0x48] sm:$0xff] %v581
                  %v583 = vld [vmem:[%s573 + $0x20] sm:$0xff]
                  %584 = vst [vmem:[%s574 + $0x60] sm:$0xff] %v583
                  %v585 = vld [vmem:[%s573 + $0x28] sm:$0xff]
                  %586 = vst [vmem:[%s574 + $0x78] sm:$0xff] %v585
                  %v587 = vld [vmem:[%s573 + $0x30] sm:$0xff]
                  %588 = vst [vmem:[%s574 + $0x90] sm:$0xff] %v587
                  %v589 = vld [vmem:[%s573 + $0x38] sm:$0xff]
                  %590 = vst [vmem:[%s574 + $0xa8] sm:$0xff] %v589
                  %v591 = vld [vmem:[%s573 + $0x40] sm:$0xff]
                  %592 = vst [vmem:[%s574 + $0xc0] sm:$0xff] %v591
                  %v593 = vld [vmem:[%s573 + $0x48] sm:$0xff]
                  %594 = vst [vmem:[%s574 + $0xd8] sm:$0xff] %v593
                  %v595 = vld [vmem:[%s573 + $0x50] sm:$0xff]
                  %596 = vst [vmem:[%s574 + $0xf0] sm:$0xff] %v595
                  %v597 = vld [vmem:[%s573 + $0x58] sm:$0xff]
                  %598 = vst [vmem:[%s574 + $0x108] sm:$0xff] %v597
                  %v599 = vld [vmem:[%s573 + $0x60] sm:$0xff]
                  %600 = vst [vmem:[%s574 + $0x120] sm:$0xff] %v599
                  %v601 = vld [vmem:[%s573 + $0x68] sm:$0xff]
                  %602 = vst [vmem:[%s574 + $0x138] sm:$0xff] %v601
                  %v603 = vld [vmem:[%s573 + $0x70] sm:$0xff]
                  %604 = vst [vmem:[%s574 + $0x150] sm:$0xff] %v603
                  %v605 = vld [vmem:[%s573 + $0x78] sm:$0xff]
                  %606 = vst [vmem:[%s574 + $0x168] sm:$0xff] %v605
                  %v607 = vld [vmem:[%s573 + $0x80] sm:$0xff]
                  %608 = vst [vmem:[%s574 + $0x180] sm:$0xff] %v607
                  %v609 = vld [vmem:[%s573 + $0x88] sm:$0xff]
                  %610 = vst [vmem:[%s574 + $0x198] sm:$0xff] %v609
                  %v611 = vld [vmem:[%s573 + $0x90] sm:$0xff]
                  %612 = vst [vmem:[%s574 + $0x1b0] sm:$0xff] %v611
                  %v613 = vld [vmem:[%s573 + $0x98] sm:$0xff]
                  %614 = vst [vmem:[%s574 + $0x1c8] sm:$0xff] %v613
                $region102: #{_clip_text_forward.18} parent=96 // loop_footer
                  %s572 = sadd.s32 1, %s568
                $region103: #{_clip_text_forward.18} parent=96 // loop_footer_branch
                  %567 = sbr.rel target = $region99
                $region104: #{_clip_text_forward.18} parent=96 // loop_exit
                  _
              $region97: #{_clip_text_forward.18} parent=81 // pred_fallthru
                _
              // Predicated region
              $region105: #{_clip_text_forward.18} parent=81 // pred_check
                _
              $region106: #{_clip_text_forward.18} parent=81 // pred_check_branch
                %616 = sbr.rel target = $region108
              $region107: #{_clip_text_forward.18} parent=81 // pred_region
                _
              $region108: #{_clip_text_forward.18} parent=81 // pred_fallthru
                _
            $region82: #{_clip_text_forward.18} parent=77 // pred_fallthru
              _
            // Predicated region
            $region83: #{_clip_text_forward.18} parent=77 // pred_check
              _
            $region84: #{_clip_text_forward.18} parent=77 // pred_check_branch
              %515 = sbr.rel target = $region86
            $region85: #{_clip_text_forward.18} parent=77 // pred_region
              loop: start=0, step=1, limit=1
              $region87: #{_clip_text_forward.18} parent=85 // loop_pre_header
                _
              $region88: #{_clip_text_forward.18} parent=85 // loop_header
                %s518 = sphi 0, %s522
                %p519 = scmp.ge.s32.totalorder %s518, 1
                %s523 = sphi %s504, %s504
                %s524 = sphi %s509, %s509
              $region89: #{_clip_text_forward.18} parent=85 // loop_header_branch
                %521 = sbr.rel (%p519) target = $region93
              $region90: #{_clip_text_forward.18} parent=85 // loop_body
                %v525 = vld [vmem:[%s523] sm:$0xff]
                %526 = vst [vmem:[%s524] sm:$0xff] %v525
                %v527 = vld [vmem:[%s523 + $0x8] sm:$0xff]
                %528 = vst [vmem:[%s524 + $0x18] sm:$0xff] %v527
                %v529 = vld [vmem:[%s523 + $0x10] sm:$0xff]
                %530 = vst [vmem:[%s524 + $0x30] sm:$0xff] %v529
                %v531 = vld [vmem:[%s523 + $0x18] sm:$0xff]
                %532 = vst [vmem:[%s524 + $0x48] sm:$0xff] %v531
                %v533 = vld [vmem:[%s523 + $0x20] sm:$0xff]
                %534 = vst [vmem:[%s524 + $0x60] sm:$0xff] %v533
                %v535 = vld [vmem:[%s523 + $0x28] sm:$0xff]
                %536 = vst [vmem:[%s524 + $0x78] sm:$0xff] %v535
                %v537 = vld [vmem:[%s523 + $0x30] sm:$0xff]
                %538 = vst [vmem:[%s524 + $0x90] sm:$0xff] %v537
                %v539 = vld [vmem:[%s523 + $0x38] sm:$0xff]
                %540 = vst [vmem:[%s524 + $0xa8] sm:$0xff] %v539
                %v541 = vld [vmem:[%s523 + $0x40] sm:$0xff]
                %542 = vst [vmem:[%s524 + $0xc0] sm:$0xff] %v541
                %v543 = vld [vmem:[%s523 + $0x48] sm:$0xff]
                %544 = vst [vmem:[%s524 + $0xd8] sm:$0xff] %v543
                %v545 = vld [vmem:[%s523 + $0x50] sm:$0xff]
                %546 = vst [vmem:[%s524 + $0xf0] sm:$0xff] %v545
                %v547 = vld [vmem:[%s523 + $0x58] sm:$0xff]
                %548 = vst [vmem:[%s524 + $0x108] sm:$0xff] %v547
                %v549 = vld [vmem:[%s523 + $0x60] sm:$0xff]
                %550 = vst [vmem:[%s524 + $0x120] sm:$0xff] %v549
                %v551 = vld [vmem:[%s523 + $0x68] sm:$0xff]
                %552 = vst [vmem:[%s524 + $0x138] sm:$0xff] %v551
                %v553 = vld [vmem:[%s523 + $0x70] sm:$0xff]
                %554 = vst [vmem:[%s524 + $0x150] sm:$0xff] %v553
                %v555 = vld [vmem:[%s523 + $0x78] sm:$0xff]
                %556 = vst [vmem:[%s524 + $0x168] sm:$0xff] %v555
                %v557 = vld [vmem:[%s523 + $0x80] sm:$0xff]
                %558 = vst [vmem:[%s524 + $0x180] sm:$0xff] %v557
                %v559 = vld [vmem:[%s523 + $0x88] sm:$0xff]
                %560 = vst [vmem:[%s524 + $0x198] sm:$0xff] %v559
                %v561 = vld [vmem:[%s523 + $0x90] sm:$0xff]
                %562 = vst [vmem:[%s524 + $0x1b0] sm:$0xff] %v561
                %v563 = vld [vmem:[%s523 + $0x98] sm:$0xff]
                %564 = vst [vmem:[%s524 + $0x1c8] sm:$0xff] %v563
              $region91: #{_clip_text_forward.18} parent=85 // loop_footer
                %s522 = sadd.s32 1, %s518
              $region92: #{_clip_text_forward.18} parent=85 // loop_footer_branch
                %517 = sbr.rel target = $region88
              $region93: #{_clip_text_forward.18} parent=85 // loop_exit
                _
            $region86: #{_clip_text_forward.18} parent=77 // pred_fallthru
              _
          $region78: #{_clip_text_forward.18} parent=73 // pred_fallthru
            _
          %617 = vnop
        $region74: #{_clip_text_forward.18} parent=65 // pred_fallthru
          _
      $region66: #{_clip_text_forward.18} parent=5 // pred_fallthru
        _
      %p618 = scmp.le.s32.totalorder 2, %s9
      // Predicated region
      $region109: #{_clip_text_forward.18} parent=5 // pred_check
        %p619 = pneg %p618
      $region110: #{_clip_text_forward.18} parent=5 // pred_check_branch
        %621 = sbr.rel (%p619) target = $region112
      $region111: #{_clip_text_forward.18} parent=5 // pred_region
        %s622 = ssub.s32 %s9, 2
        // Predicated region
        $region113: #{_clip_text_forward.18} parent=111 // pred_check
          %p623 = pneg %p111
        $region114: #{_clip_text_forward.18} parent=111 // pred_check_branch
          %625 = sbr.rel (%p623) target = $region116
        $region115: #{_clip_text_forward.18} parent=111 // pred_region
          %s626 = sand.u32 %s96, 1
          %s627 = sand.u32 %s96, 1
          %s628 = smul.addr %s627, 160
          %s629 = scalar_lea.vmem [#allocation3], %s628
        $region116: #{_clip_text_forward.18} parent=111 // pred_fallthru
          _
      $region112: #{_clip_text_forward.18} parent=5 // pred_fallthru
        _
    $region6: #{_clip_text_forward.18} parent=1 // loop_footer
      %s13 = sadd.s32 1, %s9
    $region7: #{_clip_text_forward.18} parent=1 // loop_footer_branch
      %8 = sbr.rel target = $region3
    $region8: #{_clip_text_forward.18} parent=1 // loop_exit
      _

// kernel: _clip_text_forward.19
$region0: #{_clip_text_forward.19}
  #allocation0 [shape = 'u32[]', space=smem, size = 0x4, offset = 0x4, fixed_abs, tag = 'smem constant byte address 0x4 - core index']
  #allocation1 [shape = 'u32[144,128]{1,0:T(1,128)}', space=vmem, size = 0x12000, scoped, tag = 'internal scratch']
  %s0 = inlined_call_operand.vmem [shape: f32[2,2,77,64], index: 0, kind: input, shape index: {}]
  %s1 = inlined_call_operand.vmem [shape: f32[2,2,77,64], index: 1, kind: input, shape index: {}]
  %s2 = inlined_call_operand.vmem [shape: f32[2,2,77,64], index: 2, kind: input, shape index: {}]
  %s3 = inlined_call_operand.vmem [shape: f32[2,2,77,64], index: 3, kind: output, shape index: {}]
  %s4 = sld [smem:[#allocation0]]
  $region45: #{_clip_text_forward.19} parent=0
    _
  %s6 = ssub.s32 1, %s4
  %s7 = scalar_select 0, %s6, %s4
  loop: start=0, step=1, limit=6
  $region2: #{_clip_text_forward.19} parent=0 // loop_pre_header
    _
  $region3: #{_clip_text_forward.19} parent=0 // loop_header
    %s9 = sphi 0, %s13
    %p10 = scmp.ge.s32.totalorder %s9, 6
    %s16 = sphi 0, %s28
    %s17 = sphi 0, %s24
    %s18 = sphi 0, %s16
    %s19 = sphi 0, %s17
    %s20 = sphi 0, %s18
    %s21 = sphi 0, %s19
    %s33 = sphi 0, %s35
    %s36 = sphi 0, %s33
    %s37 = sphi 0, %s36
    %s53 = sphi 0, %s37
    %s61 = sphi 0, %s63
    %s64 = sphi 0, %s61
    %s65 = sphi 0, %s64
    %s81 = sphi 0, %s65
    %s89 = sphi 0, %s91
    %s92 = sphi 0, %s89
    %s93 = sphi 0, %s92
    %s109 = sphi 0, %s93
    %s117 = sphi 0, %s119
    %s120 = sphi 0, %s117
    %s121 = sphi 0, %s120
    %s137 = sphi 0, %s121
  $region4: #{_clip_text_forward.19} parent=0 // loop_header_branch
    %12 = sbr.rel (%p10) target = $region8
  $region5: #{_clip_text_forward.19} parent=0 // loop_body
    %s14 = ssub.s32 %s9, 1
    %s15 = ssub.s32 %s9, 2
    %s22 = sadd.s32 1, %s17
    %p23 = scmp.ge.s32.totalorder %s22, 2
    %s24 = scalar_select %p23, 0, %s22
    %s25 = sadd.s32 1, %s16
    %s26 = scalar_select %p23, %s25, %s16
    %p27 = scmp.ge.s32.totalorder %s26, 2
    %s28 = scalar_select %p27, 0, %s26
    %s29 = ssub.s32 %s16, %s28
    %s30 = ssub.s32 %s17, %s24
    %s31 = sor.u32 %s29, %s30
    %p32 = scmp.eq.s32.totalorder %s31, 0
    %s34 = sadd.s32 %s33, 1
    %s35 = scalar_select %p32, %s33, %s34
    %p38 = pneg %p32
    %p39 = scmp.eq.s32.totalorder %s9, 3
    %p40 = por %p38, %p39
    %p41 = scmp.ne.s32.totalorder %s33, %s36
    %p42 = scmp.eq.s32.totalorder %s9, 0
    %p43 = por %p41, %p42
    %p44 = scmp.ne.s32.totalorder %s33, %s36
    %p45 = scmp.eq.s32.totalorder %s14, 3
    %p46 = por %p44, %p45
    %p47 = scmp.ne.s32.totalorder %s36, %s37
    %p48 = scmp.eq.s32.totalorder %s14, 0
    %p49 = por %p47, %p48
    %p50 = scmp.ne.s32.totalorder %s36, %s37
    %p51 = scmp.eq.s32.totalorder %s15, 3
    %p52 = por %p50, %p51
    %p54 = scmp.ne.s32.totalorder %s37, %s53
    %p55 = scmp.eq.s32.totalorder %s15, 0
    %p56 = por %p54, %p55
    %s57 = ssub.s32 %s16, %s28
    %s58 = ssub.s32 %s17, %s24
    %s59 = sor.u32 %s57, %s58
    %p60 = scmp.eq.s32.totalorder %s59, 0
    %s62 = sadd.s32 %s61, 1
    %s63 = scalar_select %p60, %s61, %s62
    %p66 = pneg %p60
    %p67 = scmp.eq.s32.totalorder %s9, 3
    %p68 = por %p66, %p67
    %p69 = scmp.ne.s32.totalorder %s61, %s64
    %p70 = scmp.eq.s32.totalorder %s9, 0
    %p71 = por %p69, %p70
    %p72 = scmp.ne.s32.totalorder %s61, %s64
    %p73 = scmp.eq.s32.totalorder %s14, 3
    %p74 = por %p72, %p73
    %p75 = scmp.ne.s32.totalorder %s64, %s65
    %p76 = scmp.eq.s32.totalorder %s14, 0
    %p77 = por %p75, %p76
    %p78 = scmp.ne.s32.totalorder %s64, %s65
    %p79 = scmp.eq.s32.totalorder %s15, 3
    %p80 = por %p78, %p79
    %p82 = scmp.ne.s32.totalorder %s65, %s81
    %p83 = scmp.eq.s32.totalorder %s15, 0
    %p84 = por %p82, %p83
    %s85 = ssub.s32 %s16, %s28
    %s86 = ssub.s32 %s17, %s24
    %s87 = sor.u32 %s85, %s86
    %p88 = scmp.eq.s32.totalorder %s87, 0
    %s90 = sadd.s32 %s89, 1
    %s91 = scalar_select %p88, %s89, %s90
    %p94 = pneg %p88
    %p95 = scmp.eq.s32.totalorder %s9, 3
    %p96 = por %p94, %p95
    %p97 = scmp.ne.s32.totalorder %s89, %s92
    %p98 = scmp.eq.s32.totalorder %s9, 0
    %p99 = por %p97, %p98
    %p100 = scmp.ne.s32.totalorder %s89, %s92
    %p101 = scmp.eq.s32.totalorder %s14, 3
    %p102 = por %p100, %p101
    %p103 = scmp.ne.s32.totalorder %s92, %s93
    %p104 = scmp.eq.s32.totalorder %s14, 0
    %p105 = por %p103, %p104
    %p106 = scmp.ne.s32.totalorder %s92, %s93
    %p107 = scmp.eq.s32.totalorder %s15, 3
    %p108 = por %p106, %p107
    %p110 = scmp.ne.s32.totalorder %s93, %s109
    %p111 = scmp.eq.s32.totalorder %s15, 0
    %p112 = por %p110, %p111
    %s113 = ssub.s32 %s16, %s28
    %s114 = ssub.s32 %s17, %s24
    %s115 = sor.u32 %s113, %s114
    %p116 = scmp.eq.s32.totalorder %s115, 0
    %s118 = sadd.s32 %s117, 1
    %s119 = scalar_select %p116, %s117, %s118
    %p122 = pneg %p116
    %p123 = scmp.eq.s32.totalorder %s9, 3
    %p124 = por %p122, %p123
    %p125 = scmp.ne.s32.totalorder %s117, %s120
    %p126 = scmp.eq.s32.totalorder %s9, 0
    %p127 = por %p125, %p126
    %p128 = scmp.ne.s32.totalorder %s117, %s120
    %p129 = scmp.eq.s32.totalorder %s14, 3
    %p130 = por %p128, %p129
    %p131 = scmp.ne.s32.totalorder %s120, %s121
    %p132 = scmp.eq.s32.totalorder %s14, 0
    %p133 = por %p131, %p132
    %p134 = scmp.ne.s32.totalorder %s120, %s121
    %p135 = scmp.eq.s32.totalorder %s15, 3
    %p136 = por %p134, %p135
    %p138 = scmp.ne.s32.totalorder %s121, %s137
    %p139 = scmp.eq.s32.totalorder %s15, 0
    %p140 = por %p138, %p139
    %p141 = scmp.le.s32.totalorder 1, %s9
    %p142 = scmp.lt.s32.totalorder %s9, 5
    %p143 = pnand %p141, %p142
    %p144 = pneg %p143
    // Predicated region
    $region9: #{_clip_text_forward.19} parent=5 // pred_check
      _
    $region10: #{_clip_text_forward.19} parent=5 // pred_check_branch
      %146 = sbr.rel (%p143) target = $region12
    $region11: #{_clip_text_forward.19} parent=5 // pred_region
      %s147 = ssub.s32 %s9, 1
    $region12: #{_clip_text_forward.19} parent=5 // pred_fallthru
      _
    %p148 = scmp.lt.s32.totalorder %s9, 4
    // Predicated region
    $region13: #{_clip_text_forward.19} parent=5 // pred_check
      %p149 = pneg %p148
    $region14: #{_clip_text_forward.19} parent=5 // pred_check_branch
      %151 = sbr.rel (%p149) target = $region16
    $region15: #{_clip_text_forward.19} parent=5 // pred_region
      // Predicated region
      $region17: #{_clip_text_forward.19} parent=15 // pred_check
        %p152 = pneg %p43
      $region18: #{_clip_text_forward.19} parent=15 // pred_check_branch
        %154 = sbr.rel (%p152) target = $region20
      $region19: #{_clip_text_forward.19} parent=15 // pred_region
        %p155 = scmp.lt.s32.totalorder %s16, 1
        %s156 = scalar_select %p155, %s16, 1
        %p157 = scmp.lt.s32.totalorder %s17, 1
        %s158 = scalar_select %p157, %s17, 1
        %s159 = smul.addr %s158, 10
        %s160 = smul.addr %s156, 20
        %s161 = sadd.s32 %s159, %s160
        %s162 = smul.addr %s161, 8
        %s163 = scalar_lea.vmem %s0, %s162
      $region20: #{_clip_text_forward.19} parent=15 // pred_fallthru
        _
      // Predicated region
      $region21: #{_clip_text_forward.19} parent=15 // pred_check
        %p164 = pneg %p71
      $region22: #{_clip_text_forward.19} parent=15 // pred_check_branch
        %166 = sbr.rel (%p164) target = $region24
      $region23: #{_clip_text_forward.19} parent=15 // pred_region
        %p167 = scmp.lt.s32.totalorder %s16, 1
        %s168 = scalar_select %p167, %s16, 1
        %p169 = scmp.lt.s32.totalorder %s17, 1
        %s170 = scalar_select %p169, %s17, 1
        %s171 = smul.addr %s170, 10
        %s172 = smul.addr %s168, 20
        %s173 = sadd.s32 %s171, %s172
        %s174 = smul.addr %s173, 8
        %s175 = scalar_lea.vmem %s1, %s174
      $region24: #{_clip_text_forward.19} parent=15 // pred_fallthru
        _
      // Predicated region
      $region25: #{_clip_text_forward.19} parent=15 // pred_check
        %p176 = pneg %p99
      $region26: #{_clip_text_forward.19} parent=15 // pred_check_branch
        %178 = sbr.rel (%p176) target = $region28
      $region27: #{_clip_text_forward.19} parent=15 // pred_region
        %p179 = scmp.lt.s32.totalorder %s16, 1
        %s180 = scalar_select %p179, %s16, 1
        %p181 = scmp.lt.s32.totalorder %s17, 1
        %s182 = scalar_select %p181, %s17, 1
        %s183 = smul.addr %s182, 10
        %s184 = smul.addr %s180, 20
        %s185 = sadd.s32 %s183, %s184
        %s186 = smul.addr %s185, 8
        %s187 = scalar_lea.vmem %s2, %s186
      $region28: #{_clip_text_forward.19} parent=15 // pred_fallthru
        _
    $region16: #{_clip_text_forward.19} parent=5 // pred_fallthru
      _
    %p188 = scmp.le.s32.totalorder 1, %s9
    %p189 = scmp.lt.s32.totalorder %s9, 5
    %p190 = pnand %p188, %p189
    %p191 = pneg %p190
    // Predicated region
    $region29: #{_clip_text_forward.19} parent=5 // pred_check
      _
    $region30: #{_clip_text_forward.19} parent=5 // pred_check_branch
      %193 = sbr.rel (%p190) target = $region32
    $region31: #{_clip_text_forward.19} parent=5 // pred_region
      %s194 = ssub.s32 %s9, 1
      %p195 = scmp.lt.s32.totalorder %s18, 1
      %s196 = scalar_select %p195, %s18, 1
      %p197 = scmp.lt.s32.totalorder %s19, 1
      %s198 = scalar_select %p197, %s19, 1
      %s199 = smul.addr %s198, 10
      %s200 = smul.addr %s196, 20
      %s201 = sadd.s32 %s199, %s200
      %s202 = smul.addr %s201, 8
      %s203 = scalar_lea.vmem %s0, %s202
      %p204 = pneg %p49
      %p205 = pneg %p46
      %p206 = scmp.lt.s32.totalorder %s18, 1
      %s207 = scalar_select %p206, %s18, 1
      %p208 = scmp.lt.s32.totalorder %s19, 1
      %s209 = scalar_select %p208, %s19, 1
      %s210 = smul.addr %s209, 10
      %s211 = smul.addr %s207, 20
      %s212 = sadd.s32 %s210, %s211
      %s213 = smul.addr %s212, 8
      %s214 = scalar_lea.vmem %s1, %s213
      %p215 = pneg %p77
      %p216 = pneg %p74
      %p217 = scmp.lt.s32.totalorder %s18, 1
      %s218 = scalar_select %p217, %s18, 1
      %p219 = scmp.lt.s32.totalorder %s19, 1
      %s220 = scalar_select %p219, %s19, 1
      %s221 = smul.addr %s220, 10
      %s222 = smul.addr %s218, 20
      %s223 = sadd.s32 %s221, %s222
      %s224 = smul.addr %s223, 8
      %s225 = scalar_lea.vmem %s2, %s224
      %p226 = pneg %p105
      %p227 = pneg %p102
      %p228 = pneg %p133
      %p229 = pneg %p130
      %p230 = scmp.lt.s32.totalorder %s18, 1
      %s231 = scalar_select %p230, %s18, 1
      %p232 = scmp.lt.s32.totalorder %s19, 1
      %s233 = scalar_select %p232, %s19, 1
      %s234 = smul.addr %s233, 10
      %s235 = smul.addr %s231, 20
      %s236 = sadd.s32 %s234, %s235
      %s237 = smul.addr %s236, 8
      %s238 = scalar_lea.vmem %s3, %s237
      %p239 = scmp.lt.s32.totalorder %s18, 1
      %s240 = scalar_select %p239, %s18, 1
      %p241 = scmp.lt.s32.totalorder %s19, 1
      %s242 = scalar_select %p241, %s19, 1
      %s243 = smul.addr %s242, 10
      %s244 = smul.addr %s240, 20
      %s245 = sadd.s32 %s243, %s244
      %s246 = smul.addr %s245, 8
      %s247 = scalar_lea.vmem %s0, %s246
      %p248 = scmp.lt.s32.totalorder %s18, 1
      %s249 = scalar_select %p248, %s18, 1
      %p250 = scmp.lt.s32.totalorder %s19, 1
      %s251 = scalar_select %p250, %s19, 1
      %s252 = smul.addr %s251, 10
      %s253 = smul.addr %s249, 20
      %s254 = sadd.s32 %s252, %s253
      %s255 = smul.addr %s254, 8
      %s256 = scalar_lea.vmem %s1, %s255
      %p257 = scmp.lt.s32.totalorder %s18, 1
      %s258 = scalar_select %p257, %s18, 1
      %p259 = scmp.lt.s32.totalorder %s19, 1
      %s260 = scalar_select %p259, %s19, 1
      %s261 = smul.addr %s260, 10
      %s262 = smul.addr %s258, 20
      %s263 = sadd.s32 %s261, %s262
      %s264 = smul.addr %s263, 8
      %s265 = scalar_lea.vmem %s2, %s264
      %p266 = scmp.lt.s32.totalorder %s18, 1
      %s267 = scalar_select %p266, %s18, 1
      %p268 = scmp.lt.s32.totalorder %s19, 1
      %s269 = scalar_select %p268, %s19, 1
      %s270 = smul.addr %s269, 10
      %s271 = smul.addr %s267, 20
      %s272 = sadd.s32 %s270, %s271
      %s273 = smul.addr %s272, 8
      %s274 = scalar_lea.vmem %s3, %s273
      %v275 = vld [vmem:[%s247] sm:$0xff]
      %v276 = vld [vmem:[%s247 + $0x8] sm:$0xff]
      %v277 = vld [vmem:[%s247 + $0x10] sm:$0xff]
      %v278 = vld [vmem:[%s247 + $0x18] sm:$0xff]
      %v279 = vld [vmem:[%s247 + $0x20] sm:$0xff]
      %v280 = vld [vmem:[%s247 + $0x28] sm:$0xff]
      %v281 = vld [vmem:[%s247 + $0x30] sm:$0xff]
      %v282 = vld [vmem:[%s247 + $0x38] sm:$0xff]
      %v283 = vld [vmem:[%s247 + $0x40] sm:$0xff]
      %v284 = vld [vmem:[%s247 + $0x48] sm:$0x1f]
      %v285 = vmul.f32 %v275, 0.125
      %v286 = vmul.f32 %v276, 0.125
      %v287 = vmul.f32 %v277, 0.125
      %v288 = vmul.f32 %v278, 0.125
      %v289 = vmul.f32 %v279, 0.125
      %v290 = vmul.f32 %v280, 0.125
      %v291 = vmul.f32 %v281, 0.125
      %v292 = vmul.f32 %v282, 0.125
      %v293 = vmul.f32 %v283, 0.125
      %v294 = vmul.f32 %v284, 0.125
      %v295 = vld [vmem:[%s256] sm:$0xff]
      %v296 = vld [vmem:[%s256 + $0x8] sm:$0xff]
      %v297 = vld [vmem:[%s256 + $0x10] sm:$0xff]
      %v298 = vld [vmem:[%s256 + $0x18] sm:$0xff]
      %v299 = vld [vmem:[%s256 + $0x20] sm:$0xff]
      %v300 = vld [vmem:[%s256 + $0x28] sm:$0xff]
      %v301 = vld [vmem:[%s256 + $0x30] sm:$0xff]
      %v302 = vld [vmem:[%s256 + $0x38] sm:$0xff]
      %v303 = vld [vmem:[%s256 + $0x40] sm:$0xff]
      %v304 = vld [vmem:[%s256 + $0x48] sm:$0x1f]
      %v305 = vld [vmem:[%s265] sm:$0xff]
      %v306 = vld [vmem:[%s265 + $0x8] sm:$0xff]
      %v307 = vld [vmem:[%s265 + $0x10] sm:$0xff]
      %v308 = vld [vmem:[%s265 + $0x18] sm:$0xff]
      %v309 = vld [vmem:[%s265 + $0x20] sm:$0xff]
      %v310 = vld [vmem:[%s265 + $0x28] sm:$0xff]
      %v311 = vld [vmem:[%s265 + $0x30] sm:$0xff]
      %v312 = vld [vmem:[%s265 + $0x38] sm:$0xff]
      %v313 = vld [vmem:[%s265 + $0x40] sm:$0xff]
      %v314 = vld [vmem:[%s265 + $0x48] sm:$0x1f]
      %vm315 = vcmask 523264
      %v317 = vsel %vm315, %v285, 0
      %v320 = vsel %vm315, %v286, 0
      %v323 = vsel %vm315, %v287, 0
      %v326 = vsel %vm315, %v288, 0
      %v329 = vsel %vm315, %v289, 0
      %v332 = vsel %vm315, %v290, 0
      %v335 = vsel %vm315, %v291, 0
      %v338 = vsel %vm315, %v292, 0
      %v341 = vsel %vm315, %v293, 0
      %v344 = vsel %vm315, %v294, 0
      %v347 = vsel %vm315, %v295, 0
      %v350 = vsel %vm315, %v296, 0
      %v353 = vsel %vm315, %v297, 0
      %v356 = vsel %vm315, %v298, 0
      %v359 = vsel %vm315, %v299, 0
      %v362 = vsel %vm315, %v300, 0
      %v365 = vsel %vm315, %v301, 0
      %v368 = vsel %vm315, %v302, 0
      %v371 = vsel %vm315, %v303, 0
      %v374 = vsel %vm315, %v304, 0
      %376 = vmatprep.subr.mxu0 0.0
      %377 = vmatpush1.xpose.msra.mxu0 %v347
      %378 = vmatprep.subr.mxu0 0.0
      %379 = vmatpush1.xpose.msra.mxu0 %v350
      %380 = vmatprep.subr.mxu0 0.0
      %381 = vmatpush1.xpose.msra.mxu0 %v353
      %382 = vmatprep.subr.mxu0 0.0
      %383 = vmatpush1.xpose.msra.mxu0 %v356
      %384 = vmatprep.subr.mxu0 0.0
      %385 = vmatpush1.xpose.msra.mxu0 %v359
      %386 = vmatprep.subr.mxu0 0.0
      %387 = vmatpush1.xpose.msra.mxu0 %v362
      %388 = vmatprep.subr.mxu0 0.0
      %389 = vmatpush1.xpose.msra.mxu0 %v365
      %390 = vmatprep.subr.mxu0 0.0
      %391 = vmatpush1.xpose.msra.mxu0 %v368
      %392 = vmatprep.subr.mxu0 0.0
      %393 = vmatpush1.xpose.msra.mxu0 %v371
      %394 = vmatprep.subr.mxu0 0.0
      %395 = vmatpush1.xpose.msra.mxu0 %v374
      %396 = vmatprep.subr.mxu0 0.0
      %397 = vmatpush1.xpose.msra.mxu0 0.0
      %398 = vmatprep.subr.mxu0 0.0
      %399 = vmatpush1.xpose.msra.mxu0 0.0
      %400 = vmatprep.subr.mxu0 0.0
      %401 = vmatpush1.xpose.msra.mxu0 0.0
      %402 = vmatprep.subr.mxu0 0.0
      %403 = vmatpush1.xpose.msra.mxu0 0.0
      %404 = vmatprep.subr.mxu0 0.0
      %405 = vmatpush1.xpose.msra.mxu0 0.0
      %406 = vmatprep.subr.mxu0 0.0
      %407 = vmatpush1.xpose.msra.mxu0 0.0
      %408 = vmatprep.subr.mxu0 0.0
      %409 = vmatpush1.xpose.msra.mxu0 0.0
      %410 = vmatprep.subr.mxu0 0.0
      %411 = vmatpush1.xpose.msra.mxu0 0.0
      %412 = vmatprep.subr.mxu0 0.0
      %413 = vmatpush1.xpose.msra.mxu0 0.0
      %414 = vmatprep.subr.mxu0 0.0
      %415 = vmatpush1.xpose.msra.mxu0 0.0
      %416 = vmatprep.subr.mxu0 0.0
      %417 = vmatpush1.xpose.msra.mxu0 0.0
      %418 = vmatprep.subr.mxu0 0.0
      %419 = vmatpush1.xpose.msra.mxu0 0.0
      %420 = vmatprep.subr.mxu0 0.0
      %421 = vmatpush1.xpose.msra.mxu0 0.0
      %422 = vmatprep.subr.mxu0 0.0
      %423 = vmatpush1.xpose.msra.mxu0 0.0
      %424 = vmatprep.subr.mxu0 0.0
      %425 = vmatpush1.xpose.msra.mxu0 0.0
      %426 = vmatprep.subr.mxu0 0.0
      %427 = vmatpush1.xpose.msra.mxu0 0.0
      %428 = vmatprep.subr.mxu0 0.0
      %429 = vmatpush1.xpose.msra.mxu0 0.0
      %430 = vmatprep.subr.mxu0 0.0
      %431 = vmatpush1.xpose.msra.mxu0 0.0
      %432 = vmatprep.subr.mxu0 0.0
      %433 = vmatpush1.xpose.msra.mxu0 0.0
      %434 = vmatprep.subr.mxu0 0.0
      %435 = vmatpush1.xpose.msra.mxu0 0.0
      %436 = vmatprep.subr.mxu0 0.0
      %437 = vmatpush1.xpose.msra.mxu0 0.0
      %438 = vmatprep.subr.mxu0 0.0
      %439 = vmatpush1.xpose.msra.mxu0 0.0
      %440 = vmatprep.mubr.f32.mxu0 0.0
      %441 = vmatmul.mubr.f32.gmra.mrb[0].mxu0 %v317
      %v442 = vpop.f32.mrb[0].mxu0
      %v443 = vadd.f32 0.0, %v442
      %v444 = vpop.f32.mrb[0].mxu0
      %445 = vmatprep.mubr.f32.mxu0 0.0
      %446 = vmatmul.mubr.f32.gmra.mrb[0].mxu0 %v320
      %v447 = vpop.f32.mrb[0].mxu0
      %v448 = vadd.f32 0.0, %v447
      %v449 = vpop.f32.mrb[0].mxu0
      %450 = vmatprep.mubr.f32.mxu0 0.0
      %451 = vmatmul.mubr.f32.gmra.mrb[0].mxu0 %v323
      %v452 = vpop.f32.mrb[0].mxu0
      %v453 = vadd.f32 0.0, %v452
      %v454 = vpop.f32.mrb[0].mxu0
      %455 = vmatprep.mubr.f32.mxu0 0.0
      %456 = vmatmul.mubr.f32.gmra.mrb[0].mxu0 %v326
      %v457 = vpop.f32.mrb[0].mxu0
      %v458 = vadd.f32 0.0, %v457
      %v459 = vpop.f32.mrb[0].mxu0
      %460 = vmatprep.mubr.f32.mxu0 0.0
      %461 = vmatmul.mubr.f32.gmra.mrb[0].mxu0 %v329
      %v462 = vpop.f32.mrb[0].mxu0
      %v463 = vadd.f32 0.0, %v462
      %v464 = vpop.f32.mrb[0].mxu0
      %465 = vmatprep.mubr.f32.mxu0 0.0
      %466 = vmatmul.mubr.f32.gmra.mrb[0].mxu0 %v332
      %v467 = vpop.f32.mrb[0].mxu0
      %v468 = vadd.f32 0.0, %v467
      %v469 = vpop.f32.mrb[0].mxu0
      %470 = vmatprep.mubr.f32.mxu0 0.0
      %471 = vmatmul.mubr.f32.gmra.mrb[0].mxu0 %v335
      %v472 = vpop.f32.mrb[0].mxu0
      %v473 = vadd.f32 0.0, %v472
      %v474 = vpop.f32.mrb[0].mxu0
      %475 = vmatprep.mubr.f32.mxu0 0.0
      %476 = vmatmul.mubr.f32.gmra.mrb[0].mxu0 %v338
      %v477 = vpop.f32.mrb[0].mxu0
      %v478 = vadd.f32 0.0, %v477
      %v479 = vpop.f32.mrb[0].mxu0
      %480 = vmatprep.mubr.f32.mxu0 0.0
      %481 = vmatmul.mubr.f32.gmra.mrb[0].mxu0 %v341
      %v482 = vpop.f32.mrb[0].mxu0
      %v483 = vadd.f32 0.0, %v482
      %v484 = vpop.f32.mrb[0].mxu0
      %485 = vmatprep.mubr.f32.mxu0 0.0
      %486 = vmatmul.mubr.f32.gmra.mrb[0].mxu0 %v344
      %v487 = vpop.f32.mrb[0].mxu0
      %v488 = vadd.f32 0.0, %v487
      %v489 = vpop.f32.mrb[0].mxu0
      %490 = vdwg.mxu0
      %v491 = vlaneseq
      %v492 = vshrl.u32 %v491, 7
      %v493 = vadd.s32 %v492, 8
      %v494 = vadd.s32 %v492, 16
      %v495 = vadd.s32 %v492, 24
      %v496 = vadd.s32 %v492, 32
      %v497 = vadd.s32 %v492, 40
      %v498 = vadd.s32 %v492, 48
      %v499 = vadd.s32 %v492, 56
      %v500 = vadd.s32 %v492, 64
      %v501 = vadd.s32 %v492, 72
      %v502 = vlaneseq
      %v503 = vand.u32 %v502, 127
      %vm504 = vcmp.le.s32.totalorder %v503, %v492
      %vm505 = vcmp.le.s32.totalorder %v503, %v493
      %vm506 = vcmp.le.s32.totalorder %v503, %v494
      %vm507 = vcmp.le.s32.totalorder %v503, %v495
      %vm508 = vcmp.le.s32.totalorder %v503, %v496
      %vm509 = vcmp.le.s32.totalorder %v503, %v497
      %vm510 = vcmp.le.s32.totalorder %v503, %v498
      %vm511 = vcmp.le.s32.totalorder %v503, %v499
      %vm512 = vcmp.le.s32.totalorder %v503, %v500
      %vm513 = vcmp.le.s32.totalorder %v503, %v501
      %v514 = vsel %vm504, %v443, -1e+30
      %v515 = vsel %vm505, %v448, -1e+30
      %v516 = vsel %vm506, %v453, -1e+30
      %v517 = vsel %vm507, %v458, -1e+30
      %v518 = vsel %vm508, %v463, -1e+30
      %v519 = vsel %vm509, %v468, -1e+30
      %v520 = vsel %vm510, %v473, -1e+30
      %v521 = vsel %vm511, %v478, -1e+30
      %v522 = vsel %vm512, %v483, -1e+30
      %v523 = vsel %vm513, %v488, -1e+30
      %vm524 = vcmask 629760
      %v525 = vsel %vm524, %v514, -inf
      %526 = vmax.xlane.f32.xlu0 %v525
      %v527 = vpop.xlane.xlu0 %526
      %v528 = vsel %vm524, %v515, -inf
      %529 = vmax.xlane.f32.xlu0 %v528
      %v530 = vpop.xlane.xlu0 %529
      %v531 = vsel %vm524, %v516, -inf
      %532 = vmax.xlane.f32.xlu0 %v531
      %v533 = vpop.xlane.xlu0 %532
      %v534 = vsel %vm524, %v517, -inf
      %535 = vmax.xlane.f32.xlu0 %v534
      %v536 = vpop.xlane.xlu0 %535
      %v537 = vsel %vm524, %v518, -inf
      %538 = vmax.xlane.f32.xlu0 %v537
      %v539 = vpop.xlane.xlu0 %538
      %v540 = vsel %vm524, %v519, -inf
      %541 = vmax.xlane.f32.xlu0 %v540
      %v542 = vpop.xlane.xlu0 %541
      %v543 = vsel %vm524, %v520, -inf
      %544 = vmax.xlane.f32.xlu0 %v543
      %v545 = vpop.xlane.xlu0 %544
      %v546 = vsel %vm524, %v521, -inf
      %547 = vmax.xlane.f32.xlu0 %v546
      %v548 = vpop.xlane.xlu0 %547
      %v549 = vsel %vm524, %v522, -inf
      %550 = vmax.xlane.f32.xlu0 %v549
      %v551 = vpop.xlane.xlu0 %550
      %vm552 = vcmask 626688
      %v553 = vsel %vm552, %v523, -inf
      %554 = vmax.xlane.f32.xlu0 %v553
      %v555 = vpop.xlane.xlu0 %554
      %v556 = vsub.f32 %v514, %v527
      %v557 = vsub.f32 %v515, %v530
      %v558 = vsub.f32 %v516, %v533
      %v559 = vsub.f32 %v517, %v536
      %v560 = vsub.f32 %v518, %v539
      %v561 = vsub.f32 %v519, %v542
      %v562 = vsub.f32 %v520, %v545
      %v563 = vsub.f32 %v521, %v548
      %v564 = vsub.f32 %v522, %v551
      %v565 = vsub.f32 %v523, %v555
      %v566 = vmul.f32 %v556, 1.442695
      %v567 = vpow.pop %v566
      %v568 = vmul.f32 %v557, 1.442695
      %v569 = vpow.pop %v568
      %v570 = vmul.f32 %v558, 1.442695
      %v571 = vpow.pop %v570
      %v572 = vmul.f32 %v559, 1.442695
      %v573 = vpow.pop %v572
      %v574 = vmul.f32 %v560, 1.442695
      %v575 = vpow.pop %v574
      %v576 = vmul.f32 %v561, 1.442695
      %v577 = vpow.pop %v576
      %v578 = vmul.f32 %v562, 1.442695
      %v579 = vpow.pop %v578
      %v580 = vmul.f32 %v563, 1.442695
      %v581 = vpow.pop %v580
      %v582 = vmul.f32 %v564, 1.442695
      %v583 = vpow.pop %v582
      %v584 = vmul.f32 %v565, 1.442695
      %v585 = vpow.pop %v584
      %v586 = vsel %vm524, %v567, 0.0
      %587 = vadd.xlane.f32.xlu0 %v586
      %v588 = vpop.xlane.xlu0 %587
      %v589 = vsel %vm524, %v569, 0.0
      %590 = vadd.xlane.f32.xlu0 %v589
      %v591 = vpop.xlane.xlu0 %590
      %v592 = vsel %vm524, %v571, 0.0
      %593 = vadd.xlane.f32.xlu0 %v592
      %v594 = vpop.xlane.xlu0 %593
      %v595 = vsel %vm524, %v573, 0.0
      %596 = vadd.xlane.f32.xlu0 %v595
      %v597 = vpop.xlane.xlu0 %596
      %v598 = vsel %vm524, %v575, 0.0
      %599 = vadd.xlane.f32.xlu0 %v598
      %v600 = vpop.xlane.xlu0 %599
      %v601 = vsel %vm524, %v577, 0.0
      %602 = vadd.xlane.f32.xlu0 %v601
      %v603 = vpop.xlane.xlu0 %602
      %v604 = vsel %vm524, %v579, 0.0
      %605 = vadd.xlane.f32.xlu0 %v604
      %v606 = vpop.xlane.xlu0 %605
      %v607 = vsel %vm524, %v581, 0.0
      %608 = vadd.xlane.f32.xlu0 %v607
      %v609 = vpop.xlane.xlu0 %608
      %v610 = vsel %vm524, %v583, 0.0
      %611 = vadd.xlane.f32.xlu0 %v610
      %v612 = vpop.xlane.xlu0 %611
      %v613 = vsel %vm552, %v585, 0.0
      %614 = vadd.xlane.f32.xlu0 %v613
      %v615 = vpop.xlane.xlu0 %614
      %v617 = vsel %vm524, %v567, 0
      %v620 = vsel %vm524, %v569, 0
      %v623 = vsel %vm524, %v571, 0
      %v626 = vsel %vm524, %v573, 0
      %v629 = vsel %vm524, %v575, 0
      %v632 = vsel %vm524, %v577, 0
      %v635 = vsel %vm524, %v579, 0
      %v638 = vsel %vm524, %v581, 0
      %v641 = vsel %vm524, %v583, 0
      %v644 = vsel %vm524, %v585, 0
      %vm646 = vcmask 1044480
      %v648 = vsel %vm646, %v314, 0
      %650 = vmatprep.subr.mxu0 0.0
      %651 = vmatpush1.msra.mxu0 %v305
      %652 = vmatprep.subr.mxu0 0.0
      %653 = vmatpush1.msra.mxu0 %v306
      %654 = vmatprep.subr.mxu0 0.0
      %655 = vmatpush1.msra.mxu0 %v307
      %656 = vmatprep.subr.mxu0 0.0
      %657 = vmatpush1.msra.mxu0 %v308
      %658 = vmatprep.subr.mxu0 0.0
      %659 = vmatpush1.msra.mxu0 %v309
      %660 = vmatprep.subr.mxu0 0.0
      %661 = vmatpush1.msra.mxu0 %v310
      %662 = vmatprep.subr.mxu0 0.0
      %663 = vmatpush1.msra.mxu0 %v311
      %664 = vmatprep.subr.mxu0 0.0
      %665 = vmatpush1.msra.mxu0 %v312
      %666 = vmatprep.subr.mxu0 0.0
      %667 = vmatpush1.msra.mxu0 %v313
      %668 = vmatprep.subr.mxu0 0.0
      %669 = vmatpush1.msra.mxu0 %v648
      %670 = vmatprep.subr.mxu0 0.0
      %671 = vmatpush1.msra.mxu0 0.0
      %672 = vmatprep.subr.mxu0 0.0
      %673 = vmatpush1.msra.mxu0 0.0
      %674 = vmatprep.subr.mxu0 0.0
      %675 = vmatpush1.msra.mxu0 0.0
      %676 = vmatprep.subr.mxu0 0.0
      %677 = vmatpush1.msra.mxu0 0.0
      %678 = vmatprep.subr.mxu0 0.0
      %679 = vmatpush1.msra.mxu0 0.0
      %680 = vmatprep.subr.mxu0 0.0
      %681 = vmatpush1.msra.mxu0 0.0
      %682 = vmatprep.subr.mxu0 0.0
      %683 = vmatpush1.msra.mxu0 0.0
      %684 = vmatprep.subr.mxu0 0.0
      %685 = vmatpush1.msra.mxu0 0.0
      %686 = vmatprep.subr.mxu0 0.0
      %687 = vmatpush1.msra.mxu0 0.0
      %688 = vmatprep.subr.mxu0 0.0
      %689 = vmatpush1.msra.mxu0 0.0
      %690 = vmatprep.subr.mxu0 0.0
      %691 = vmatpush1.msra.mxu0 0.0
      %692 = vmatprep.subr.mxu0 0.0
      %693 = vmatpush1.msra.mxu0 0.0
      %694 = vmatprep.subr.mxu0 0.0
      %695 = vmatpush1.msra.mxu0 0.0
      %696 = vmatprep.subr.mxu0 0.0
      %697 = vmatpush1.msra.mxu0 0.0
      %698 = vmatprep.subr.mxu0 0.0
      %699 = vmatpush1.msra.mxu0 0.0
      %700 = vmatprep.subr.mxu0 0.0
      %701 = vmatpush1.msra.mxu0 0.0
      %702 = vmatprep.subr.mxu0 0.0
      %703 = vmatpush1.msra.mxu0 0.0
      %704 = vmatprep.subr.mxu0 0.0
      %705 = vmatpush1.msra.mxu0 0.0
      %706 = vmatprep.subr.mxu0 0.0
      %707 = vmatpush1.msra.mxu0 0.0
      %708 = vmatprep.subr.mxu0 0.0
      %709 = vmatpush1.msra.mxu0 0.0
      %710 = vmatprep.subr.mxu0 0.0
      %711 = vmatpush1.msra.mxu0 0.0
      %712 = vmatprep.subr.mxu0 0.0
      %713 = vmatpush1.msra.mxu0 0.0
      %714 = vmatprep.mubr.f32.mxu0 0.0
      %715 = vmatmul.mubr.f32.gmra.mrb[0].mxu0 %v617
      %v716 = vpop.f32.mrb[0].mxu0
      %v717 = vadd.f32 0.0, %v716
      %v718 = vpop.f32.mrb[0].mxu0
      %719 = vmatprep.mubr.f32.mxu0 0.0
      %720 = vmatmul.mubr.f32.gmra.mrb[0].mxu0 %v620
      %v721 = vpop.f32.mrb[0].mxu0
      %v722 = vadd.f32 0.0, %v721
      %v723 = vpop.f32.mrb[0].mxu0
      %724 = vmatprep.mubr.f32.mxu0 0.0
      %725 = vmatmul.mubr.f32.gmra.mrb[0].mxu0 %v623
      %v726 = vpop.f32.mrb[0].mxu0
      %v727 = vadd.f32 0.0, %v726
      %v728 = vpop.f32.mrb[0].mxu0
      %729 = vmatprep.mubr.f32.mxu0 0.0
      %730 = vmatmul.mubr.f32.gmra.mrb[0].mxu0 %v626
      %v731 = vpop.f32.mrb[0].mxu0
      %v732 = vadd.f32 0.0, %v731
      %v733 = vpop.f32.mrb[0].mxu0
      %734 = vmatprep.mubr.f32.mxu0 0.0
      %735 = vmatmul.mubr.f32.gmra.mrb[0].mxu0 %v629
      %v736 = vpop.f32.mrb[0].mxu0
      %v737 = vadd.f32 0.0, %v736
      %v738 = vpop.f32.mrb[0].mxu0
      %739 = vmatprep.mubr.f32.mxu0 0.0
      %740 = vmatmul.mubr.f32.gmra.mrb[0].mxu0 %v632
      %v741 = vpop.f32.mrb[0].mxu0
      %v742 = vadd.f32 0.0, %v741
      %v743 = vpop.f32.mrb[0].mxu0
      %744 = vmatprep.mubr.f32.mxu0 0.0
      %745 = vmatmul.mubr.f32.gmra.mrb[0].mxu0 %v635
      %v746 = vpop.f32.mrb[0].mxu0
      %v747 = vadd.f32 0.0, %v746
      %v748 = vpop.f32.mrb[0].mxu0
      %749 = vmatprep.mubr.f32.mxu0 0.0
      %750 = vmatmul.mubr.f32.gmra.mrb[0].mxu0 %v638
      %v751 = vpop.f32.mrb[0].mxu0
      %v752 = vadd.f32 0.0, %v751
      %v753 = vpop.f32.mrb[0].mxu0
      %754 = vmatprep.mubr.f32.mxu0 0.0
      %755 = vmatmul.mubr.f32.gmra.mrb[0].mxu0 %v641
      %v756 = vpop.f32.mrb[0].mxu0
      %v757 = vadd.f32 0.0, %v756
      %v758 = vpop.f32.mrb[0].mxu0
      %759 = vmatprep.mubr.f32.mxu0 0.0
      %760 = vmatmul.mubr.f32.gmra.mrb[0].mxu0 %v644
      %v761 = vpop.f32.mrb[0].mxu0
      %v762 = vadd.f32 0.0, %v761
      %v763 = vpop.f32.mrb[0].mxu0
      %764 = vdwg.mxu0
      %v765 = vrcp.pop %v588
      %v766 = vmul.f32 %v717, %v765
      %v767 = vrcp.pop %v591
      %v768 = vmul.f32 %v722, %v767
      %v769 = vrcp.pop %v594
      %v770 = vmul.f32 %v727, %v769
      %v771 = vrcp.pop %v597
      %v772 = vmul.f32 %v732, %v771
      %v773 = vrcp.pop %v600
      %v774 = vmul.f32 %v737, %v773
      %v775 = vrcp.pop %v603
      %v776 = vmul.f32 %v742, %v775
      %v777 = vrcp.pop %v606
      %v778 = vmul.f32 %v747, %v777
      %v779 = vrcp.pop %v609
      %v780 = vmul.f32 %v752, %v779
      %v781 = vrcp.pop %v612
      %v782 = vmul.f32 %v757, %v781
      %v783 = vrcp.pop %v615
      %v784 = vmul.f32 %v762, %v783
      %785 = vst.msk [vmem:[%s274] sm:$0xff] %vm315, %v766
      %786 = vst.msk [vmem:[%s274 + $0x8] sm:$0xff] %vm315, %v768
      %787 = vst.msk [vmem:[%s274 + $0x10] sm:$0xff] %vm315, %v770
      %788 = vst.msk [vmem:[%s274 + $0x18] sm:$0xff] %vm315, %v772
      %789 = vst.msk [vmem:[%s274 + $0x20] sm:$0xff] %vm315, %v774
      %790 = vst.msk [vmem:[%s274 + $0x28] sm:$0xff] %vm315, %v776
      %791 = vst.msk [vmem:[%s274 + $0x30] sm:$0xff] %vm315, %v778
      %792 = vst.msk [vmem:[%s274 + $0x38] sm:$0xff] %vm315, %v780
      %793 = vst.msk [vmem:[%s274 + $0x40] sm:$0xff] %vm315, %v782
      %vm794 = vcmask 520192
      %795 = vst.msk [vmem:[%s274 + $0x48] sm:$0x1f] %vm794, %v784
      %p796 = scmp.lt.s32.totalorder %s18, 1
      %s797 = scalar_select %p796, %s18, 1
      %p798 = scmp.lt.s32.totalorder %s19, 1
      %s799 = scalar_select %p798, %s19, 1
      %s800 = smul.addr %s799, 10
      %s801 = smul.addr %s797, 20
      %s802 = sadd.s32 %s800, %s801
      %s803 = smul.addr %s802, 8
      %s804 = scalar_lea.vmem %s3, %s803
      // Predicated region
      $region33: #{_clip_text_forward.19} parent=31 // pred_check
        %p805 = pneg %p130
      $region34: #{_clip_text_forward.19} parent=31 // pred_check_branch
        %807 = sbr.rel (%p805) target = $region36
      $region35: #{_clip_text_forward.19} parent=31 // pred_region
        _
      $region36: #{_clip_text_forward.19} parent=31 // pred_fallthru
        _
    $region32: #{_clip_text_forward.19} parent=5 // pred_fallthru
      _
    %p808 = scmp.le.s32.totalorder 2, %s9
    // Predicated region
    $region37: #{_clip_text_forward.19} parent=5 // pred_check
      %p809 = pneg %p808
    $region38: #{_clip_text_forward.19} parent=5 // pred_check_branch
      %811 = sbr.rel (%p809) target = $region40
    $region39: #{_clip_text_forward.19} parent=5 // pred_region
      %s812 = ssub.s32 %s9, 2
      // Predicated region
      $region41: #{_clip_text_forward.19} parent=39 // pred_check
        %p813 = pneg %p136
      $region42: #{_clip_text_forward.19} parent=39 // pred_check_branch
        %815 = sbr.rel (%p813) target = $region44
      $region43: #{_clip_text_forward.19} parent=39 // pred_region
        %p816 = scmp.lt.s32.totalorder %s20, 1
        %s817 = scalar_select %p816, %s20, 1
        %p818 = scmp.lt.s32.totalorder %s21, 1
        %s819 = scalar_select %p818, %s21, 1
        %s820 = smul.addr %s819, 10
        %s821 = smul.addr %s817, 20
        %s822 = sadd.s32 %s820, %s821
        %s823 = smul.addr %s822, 8
        %s824 = scalar_lea.vmem %s3, %s823
      $region44: #{_clip_text_forward.19} parent=39 // pred_fallthru
        _
    $region40: #{_clip_text_forward.19} parent=5 // pred_fallthru
      _
  $region6: #{_clip_text_forward.19} parent=0 // loop_footer
    %s13 = sadd.s32 1, %s9
  $region7: #{_clip_text_forward.19} parent=0 // loop_footer_branch
    %8 = sbr.rel target = $region3
  $region8: #{_clip_text_forward.19} parent=0 // loop_exit
    _

// kernel: _clip_text_forward.20
$region0: #{_clip_text_forward.20}
  #allocation0 [shape = 'u32[]', space=smem, size = 0x4, offset = 0x4, fixed_abs, tag = 'smem constant byte address 0x4 - core index']
  #allocation1 [shape = 'u32[144,128]{1,0:T(1,128)}', space=vmem, size = 0x12000, scoped, tag = 'internal scratch']
  %s0 = inlined_call_operand.vmem [shape: f32[154,128], index: 0, kind: input, shape index: {}]
  %s1 = inlined_call_operand.vmem [shape: f32[128,128], index: 1, kind: input, shape index: {}]
  %s2 = inlined_call_operand.vmem [shape: f32[1,128], index: 2, kind: input, shape index: {}]
  %s3 = inlined_call_operand.vmem [shape: f32[154,128], index: 3, kind: input, shape index: {}]
  %s4 = inlined_call_operand.vmem [shape: f32[154,128], index: 4, kind: output, shape index: {}]
  %s5 = sld [smem:[#allocation0]]
  $region26: #{_clip_text_forward.20} parent=0
    _
  %s7 = ssub.s32 1, %s5
  %s8 = scalar_select 0, %s7, %s5
  // Predicated region
  $region2: #{_clip_text_forward.20} parent=0 // pred_check
    _
  $region3: #{_clip_text_forward.20} parent=0 // pred_check_branch
    %10 = sbr.rel (0) target = $region5
  $region4: #{_clip_text_forward.20} parent=0 // pred_region
    _
  $region5: #{_clip_text_forward.20} parent=0 // pred_fallthru
    _
  // Predicated region
  $region6: #{_clip_text_forward.20} parent=0 // pred_check
    _
  $region7: #{_clip_text_forward.20} parent=0 // pred_check_branch
    %12 = sbr.rel (0) target = $region9
  $region8: #{_clip_text_forward.20} parent=0 // pred_region
    _
  $region9: #{_clip_text_forward.20} parent=0 // pred_fallthru
    _
  // Predicated region
  $region10: #{_clip_text_forward.20} parent=0 // pred_check
    _
  $region11: #{_clip_text_forward.20} parent=0 // pred_check_branch
    %14 = sbr.rel (0) target = $region13
  $region12: #{_clip_text_forward.20} parent=0 // pred_region
    _
  $region13: #{_clip_text_forward.20} parent=0 // pred_fallthru
    _
  // Predicated region
  $region14: #{_clip_text_forward.20} parent=0 // pred_check
    _
  $region15: #{_clip_text_forward.20} parent=0 // pred_check_branch
    %16 = sbr.rel (0) target = $region17
  $region16: #{_clip_text_forward.20} parent=0 // pred_region
    _
  $region17: #{_clip_text_forward.20} parent=0 // pred_fallthru
    _
  %v17 = vld [vmem:[%s0] sm:$0xff]
  %v18 = vld [vmem:[%s0 + $0x8] sm:$0xff]
  %v19 = vld [vmem:[%s0 + $0x10] sm:$0xff]
  %v20 = vld [vmem:[%s0 + $0x18] sm:$0xff]
  %v21 = vld [vmem:[%s0 + $0x20] sm:$0xff]
  %v22 = vld [vmem:[%s0 + $0x28] sm:$0xff]
  %v23 = vld [vmem:[%s0 + $0x30] sm:$0xff]
  %v24 = vld [vmem:[%s0 + $0x38] sm:$0xff]
  %v25 = vld [vmem:[%s0 + $0x40] sm:$0xff]
  %v26 = vld [vmem:[%s0 + $0x48] sm:$0xff]
  %v27 = vld [vmem:[%s0 + $0x50] sm:$0xff]
  %v28 = vld [vmem:[%s0 + $0x58] sm:$0xff]
  %v29 = vld [vmem:[%s0 + $0x60] sm:$0xff]
  %v30 = vld [vmem:[%s0 + $0x68] sm:$0xff]
  %v31 = vld [vmem:[%s0 + $0x70] sm:$0xff]
  %v32 = vld [vmem:[%s0 + $0x78] sm:$0xff]
  %v33 = vld [vmem:[%s0 + $0x80] sm:$0xff]
  %v34 = vld [vmem:[%s0 + $0x88] sm:$0xff]
  %v35 = vld [vmem:[%s0 + $0x90] sm:$0xff]
  %v36 = vld [vmem:[%s0 + $0x98] sm:$0x3]
  %v37 = vld [vmem:[%s1] sm:$0xff]
  %v38 = vld [vmem:[%s1 + $0x8] sm:$0xff]
  %v39 = vld [vmem:[%s1 + $0x10] sm:$0xff]
  %v40 = vld [vmem:[%s1 + $0x18] sm:$0xff]
  %v41 = vld [vmem:[%s1 + $0x20] sm:$0xff]
  %v42 = vld [vmem:[%s1 + $0x28] sm:$0xff]
  %v43 = vld [vmem:[%s1 + $0x30] sm:$0xff]
  %v44 = vld [vmem:[%s1 + $0x38] sm:$0xff]
  %v45 = vld [vmem:[%s1 + $0x40] sm:$0xff]
  %v46 = vld [vmem:[%s1 + $0x48] sm:$0xff]
  %v47 = vld [vmem:[%s1 + $0x50] sm:$0xff]
  %v48 = vld [vmem:[%s1 + $0x58] sm:$0xff]
  %v49 = vld [vmem:[%s1 + $0x60] sm:$0xff]
  %v50 = vld [vmem:[%s1 + $0x68] sm:$0xff]
  %v51 = vld [vmem:[%s1 + $0x70] sm:$0xff]
  %v52 = vld [vmem:[%s1 + $0x78] sm:$0xff]
  %v53 = vld [vmem:[%s2] sm:$0x1]
  %v55 = vlaneseq
  %v56 = vshrl.u32 %v55, 7
  %v57 = vsub.s32 0, %v56
  %v58 = vrot.slane %v53, %v57
  %60 = vmatprep.subr.mxu0 0.0
  %61 = vmatpush1.msra.mxu0 %v37
  %62 = vmatprep.subr.mxu0 0.0
  %63 = vmatpush1.msra.mxu0 %v38
  %64 = vmatprep.subr.mxu0 0.0
  %65 = vmatpush1.msra.mxu0 %v39
  %66 = vmatprep.subr.mxu0 0.0
  %67 = vmatpush1.msra.mxu0 %v40
  %68 = vmatprep.subr.mxu0 0.0
  %69 = vmatpush1.msra.mxu0 %v41
  %70 = vmatprep.subr.mxu0 0.0
  %71 = vmatpush1.msra.mxu0 %v42
  %72 = vmatprep.subr.mxu0 0.0
  %73 = vmatpush1.msra.mxu0 %v43
  %74 = vmatprep.subr.mxu0 0.0
  %75 = vmatpush1.msra.mxu0 %v44
  %76 = vmatprep.subr.mxu0 0.0
  %77 = vmatpush1.msra.mxu0 %v45
  %78 = vmatprep.subr.mxu0 0.0
  %79 = vmatpush1.msra.mxu0 %v46
  %80 = vmatprep.subr.mxu0 0.0
  %81 = vmatpush1.msra.mxu0 %v47
  %82 = vmatprep.subr.mxu0 0.0
  %83 = vmatpush1.msra.mxu0 %v48
  %84 = vmatprep.subr.mxu0 0.0
  %85 = vmatpush1.msra.mxu0 %v49
  %86 = vmatprep.subr.mxu0 0.0
  %87 = vmatpush1.msra.mxu0 %v50
  %88 = vmatprep.subr.mxu0 0.0
  %89 = vmatpush1.msra.mxu0 %v51
  %90 = vmatprep.subr.mxu0 0.0
  %91 = vmatpush1.msra.mxu0 %v52
  %92 = vmatprep.subr.mxu0 0.0
  %93 = vmatpush1.msra.mxu0 0.0
  %94 = vmatprep.subr.mxu0 0.0
  %95 = vmatpush1.msra.mxu0 0.0
  %96 = vmatprep.subr.mxu0 0.0
  %97 = vmatpush1.msra.mxu0 0.0
  %98 = vmatprep.subr.mxu0 0.0
  %99 = vmatpush1.msra.mxu0 0.0
  %100 = vmatprep.subr.mxu0 0.0
  %101 = vmatpush1.msra.mxu0 0.0
  %102 = vmatprep.subr.mxu0 0.0
  %103 = vmatpush1.msra.mxu0 0.0
  %104 = vmatprep.subr.mxu0 0.0
  %105 = vmatpush1.msra.mxu0 0.0
  %106 = vmatprep.subr.mxu0 0.0
  %107 = vmatpush1.msra.mxu0 0.0
  %108 = vmatprep.subr.mxu0 0.0
  %109 = vmatpush1.msra.mxu0 0.0
  %110 = vmatprep.subr.mxu0 0.0
  %111 = vmatpush1.msra.mxu0 0.0
  %112 = vmatprep.subr.mxu0 0.0
  %113 = vmatpush1.msra.mxu0 0.0
  %114 = vmatprep.subr.mxu0 0.0
  %115 = vmatpush1.msra.mxu0 0.0
  %116 = vmatprep.subr.mxu0 0.0
  %117 = vmatpush1.msra.mxu0 0.0
  %118 = vmatprep.subr.mxu0 0.0
  %119 = vmatpush1.msra.mxu0 0.0
  %120 = vmatprep.subr.mxu0 0.0
  %121 = vmatpush1.msra.mxu0 0.0
  %122 = vmatprep.subr.mxu0 0.0
  %123 = vmatpush1.msra.mxu0 0.0
  %124 = vmatprep.mubr.f32.mxu0 0.0
  %125 = vmatmul.mubr.f32.gmra.mrb[0].mxu0 %v17
  %v126 = vpop.f32.mrb[0].mxu0
  %v127 = vadd.f32 %v58, %v126
  %v128 = vpop.f32.mrb[0].mxu0
  %129 = vmatprep.mubr.f32.mxu0 0.0
  %130 = vmatmul.mubr.f32.gmra.mrb[0].mxu0 %v18
  %v131 = vpop.f32.mrb[0].mxu0
  %v132 = vadd.f32 %v58, %v131
  %v133 = vpop.f32.mrb[0].mxu0
  %134 = vmatprep.mubr.f32.mxu0 0.0
  %135 = vmatmul.mubr.f32.gmra.mrb[0].mxu0 %v19
  %v136 = vpop.f32.mrb[0].mxu0
  %v137 = vadd.f32 %v58, %v136
  %v138 = vpop.f32.mrb[0].mxu0
  %139 = vmatprep.mubr.f32.mxu0 0.0
  %140 = vmatmul.mubr.f32.gmra.mrb[0].mxu0 %v20
  %v141 = vpop.f32.mrb[0].mxu0
  %v142 = vadd.f32 %v58, %v141
  %v143 = vpop.f32.mrb[0].mxu0
  %144 = vmatprep.mubr.f32.mxu0 0.0
  %145 = vmatmul.mubr.f32.gmra.mrb[0].mxu0 %v21
  %v146 = vpop.f32.mrb[0].mxu0
  %v147 = vadd.f32 %v58, %v146
  %v148 = vpop.f32.mrb[0].mxu0
  %149 = vmatprep.mubr.f32.mxu0 0.0
  %150 = vmatmul.mubr.f32.gmra.mrb[0].mxu0 %v22
  %v151 = vpop.f32.mrb[0].mxu0
  %v152 = vadd.f32 %v58, %v151
  %v153 = vpop.f32.mrb[0].mxu0
  %154 = vmatprep.mubr.f32.mxu0 0.0
  %155 = vmatmul.mubr.f32.gmra.mrb[0].mxu0 %v23
  %v156 = vpop.f32.mrb[0].mxu0
  %v157 = vadd.f32 %v58, %v156
  %v158 = vpop.f32.mrb[0].mxu0
  %159 = vmatprep.mubr.f32.mxu0 0.0
  %160 = vmatmul.mubr.f32.gmra.mrb[0].mxu0 %v24
  %v161 = vpop.f32.mrb[0].mxu0
  %v162 = vadd.f32 %v58, %v161
  %v163 = vpop.f32.mrb[0].mxu0
  %164 = vmatprep.mubr.f32.mxu0 0.0
  %165 = vmatmul.mubr.f32.gmra.mrb[0].mxu0 %v25
  %v166 = vpop.f32.mrb[0].mxu0
  %v167 = vadd.f32 %v58, %v166
  %v168 = vpop.f32.mrb[0].mxu0
  %169 = vmatprep.mubr.f32.mxu0 0.0
  %170 = vmatmul.mubr.f32.gmra.mrb[0].mxu0 %v26
  %v171 = vpop.f32.mrb[0].mxu0
  %v172 = vadd.f32 %v58, %v171
  %v173 = vpop.f32.mrb[0].mxu0
  %174 = vmatprep.mubr.f32.mxu0 0.0
  %175 = vmatmul.mubr.f32.gmra.mrb[0].mxu0 %v27
  %v176 = vpop.f32.mrb[0].mxu0
  %v177 = vadd.f32 %v58, %v176
  %v178 = vpop.f32.mrb[0].mxu0
  %179 = vmatprep.mubr.f32.mxu0 0.0
  %180 = vmatmul.mubr.f32.gmra.mrb[0].mxu0 %v28
  %v181 = vpop.f32.mrb[0].mxu0
  %v182 = vadd.f32 %v58, %v181
  %v183 = vpop.f32.mrb[0].mxu0
  %184 = vmatprep.mubr.f32.mxu0 0.0
  %185 = vmatmul.mubr.f32.gmra.mrb[0].mxu0 %v29
  %v186 = vpop.f32.mrb[0].mxu0
  %v187 = vadd.f32 %v58, %v186
  %v188 = vpop.f32.mrb[0].mxu0
  %189 = vmatprep.mubr.f32.mxu0 0.0
  %190 = vmatmul.mubr.f32.gmra.mrb[0].mxu0 %v30
  %v191 = vpop.f32.mrb[0].mxu0
  %v192 = vadd.f32 %v58, %v191
  %v193 = vpop.f32.mrb[0].mxu0
  %194 = vmatprep.mubr.f32.mxu0 0.0
  %195 = vmatmul.mubr.f32.gmra.mrb[0].mxu0 %v31
  %v196 = vpop.f32.mrb[0].mxu0
  %v197 = vadd.f32 %v58, %v196
  %v198 = vpop.f32.mrb[0].mxu0
  %199 = vmatprep.mubr.f32.mxu0 0.0
  %200 = vmatmul.mubr.f32.gmra.mrb[0].mxu0 %v32
  %v201 = vpop.f32.mrb[0].mxu0
  %v202 = vadd.f32 %v58, %v201
  %v203 = vpop.f32.mrb[0].mxu0
  %204 = vmatprep.mubr.f32.mxu0 0.0
  %205 = vmatmul.mubr.f32.gmra.mrb[0].mxu0 %v33
  %v206 = vpop.f32.mrb[0].mxu0
  %v207 = vadd.f32 %v58, %v206
  %v208 = vpop.f32.mrb[0].mxu0
  %209 = vmatprep.mubr.f32.mxu0 0.0
  %210 = vmatmul.mubr.f32.gmra.mrb[0].mxu0 %v34
  %v211 = vpop.f32.mrb[0].mxu0
  %v212 = vadd.f32 %v58, %v211
  %v213 = vpop.f32.mrb[0].mxu0
  %214 = vmatprep.mubr.f32.mxu0 0.0
  %215 = vmatmul.mubr.f32.gmra.mrb[0].mxu0 %v35
  %v216 = vpop.f32.mrb[0].mxu0
  %v217 = vadd.f32 %v58, %v216
  %v218 = vpop.f32.mrb[0].mxu0
  %219 = vmatprep.mubr.f32.mxu0 0.0
  %220 = vmatmul.mubr.f32.gmra.mrb[0].mxu0 %v36
  %v221 = vpop.f32.mrb[0].mxu0
  %v222 = vadd.f32 %v58, %v221
  %v223 = vpop.f32.mrb[0].mxu0
  %224 = vdwg.mxu0
  %v225 = vld [vmem:[%s3] sm:$0xff]
  %v226 = vld [vmem:[%s3 + $0x8] sm:$0xff]
  %v227 = vld [vmem:[%s3 + $0x10] sm:$0xff]
  %v228 = vld [vmem:[%s3 + $0x18] sm:$0xff]
  %v229 = vld [vmem:[%s3 + $0x20] sm:$0xff]
  %v230 = vld [vmem:[%s3 + $0x28] sm:$0xff]
  %v231 = vld [vmem:[%s3 + $0x30] sm:$0xff]
  %v232 = vld [vmem:[%s3 + $0x38] sm:$0xff]
  %v233 = vld [vmem:[%s3 + $0x40] sm:$0xff]
  %v234 = vld [vmem:[%s3 + $0x48] sm:$0xff]
  %v235 = vld [vmem:[%s3 + $0x50] sm:$0xff]
  %v236 = vld [vmem:[%s3 + $0x58] sm:$0xff]
  %v237 = vld [vmem:[%s3 + $0x60] sm:$0xff]
  %v238 = vld [vmem:[%s3 + $0x68] sm:$0xff]
  %v239 = vld [vmem:[%s3 + $0x70] sm:$0xff]
  %v240 = vld [vmem:[%s3 + $0x78] sm:$0xff]
  %v241 = vld [vmem:[%s3 + $0x80] sm:$0xff]
  %v242 = vld [vmem:[%s3 + $0x88] sm:$0xff]
  %v243 = vld [vmem:[%s3 + $0x90] sm:$0xff]
  %v244 = vld [vmem:[%s3 + $0x98] sm:$0x3]
  %v245 = vadd.f32 %v127, %v225
  %v246 = vadd.f32 %v132, %v226
  %v247 = vadd.f32 %v137, %v227
  %v248 = vadd.f32 %v142, %v228
  %v249 = vadd.f32 %v147, %v229
  %v250 = vadd.f32 %v152, %v230
  %v251 = vadd.f32 %v157, %v231
  %v252 = vadd.f32 %v162, %v232
  %v253 = vadd.f32 %v167, %v233
  %v254 = vadd.f32 %v172, %v234
  %v255 = vadd.f32 %v177, %v235
  %v256 = vadd.f32 %v182, %v236
  %v257 = vadd.f32 %v187, %v237
  %v258 = vadd.f32 %v192, %v238
  %v259 = vadd.f32 %v197, %v239
  %v260 = vadd.f32 %v202, %v240
  %v261 = vadd.f32 %v207, %v241
  %v262 = vadd.f32 %v212, %v242
  %v263 = vadd.f32 %v217, %v243
  %v264 = vadd.f32 %v222, %v244
  %265 = vst [vmem:[%s4] sm:$0xff] %v245
  %266 = vst [vmem:[%s4 + $0x8] sm:$0xff] %v246
  %267 = vst [vmem:[%s4 + $0x10] sm:$0xff] %v247
  %268 = vst [vmem:[%s4 + $0x18] sm:$0xff] %v248
  %269 = vst [vmem:[%s4 + $0x20] sm:$0xff] %v249
  %270 = vst [vmem:[%s4 + $0x28] sm:$0xff] %v250
  %271 = vst [vmem:[%s4 + $0x30] sm:$0xff] %v251
  %272 = vst [vmem:[%s4 + $0x38] sm:$0xff] %v252
  %273 = vst [vmem:[%s4 + $0x40] sm:$0xff] %v253
  %274 = vst [vmem:[%s4 + $0x48] sm:$0xff] %v254
  %275 = vst [vmem:[%s4 + $0x50] sm:$0xff] %v255
  %276 = vst [vmem:[%s4 + $0x58] sm:$0xff] %v256
  %277 = vst [vmem:[%s4 + $0x60] sm:$0xff] %v257
  %278 = vst [vmem:[%s4 + $0x68] sm:$0xff] %v258
  %279 = vst [vmem:[%s4 + $0x70] sm:$0xff] %v259
  %280 = vst [vmem:[%s4 + $0x78] sm:$0xff] %v260
  %281 = vst [vmem:[%s4 + $0x80] sm:$0xff] %v261
  %282 = vst [vmem:[%s4 + $0x88] sm:$0xff] %v262
  %283 = vst [vmem:[%s4 + $0x90] sm:$0xff] %v263
  %284 = vst [vmem:[%s4 + $0x98] sm:$0x3] %v264
  // Predicated region
  $region18: #{_clip_text_forward.20} parent=0 // pred_check
    _
  $region19: #{_clip_text_forward.20} parent=0 // pred_check_branch
    %286 = sbr.rel (0) target = $region21
  $region20: #{_clip_text_forward.20} parent=0 // pred_region
    _
  $region21: #{_clip_text_forward.20} parent=0 // pred_fallthru
    _
  // Predicated region
  $region22: #{_clip_text_forward.20} parent=0 // pred_check
    _
  $region23: #{_clip_text_forward.20} parent=0 // pred_check_branch
    %288 = sbr.rel (0) target = $region25
  $region24: #{_clip_text_forward.20} parent=0 // pred_region
    _
  $region25: #{_clip_text_forward.20} parent=0 // pred_fallthru
    _

// kernel: _clip_text_forward.22
$region0: #{_clip_text_forward.22}
  #allocation0 [shape = 'u32[]', space=smem, size = 0x4, offset = 0x4, fixed_abs, tag = 'smem constant byte address 0x4 - core index']
  #allocation1 [shape = 'u32[144,128]{1,0:T(1,128)}', space=vmem, size = 0x12000, scoped, tag = 'internal scratch']
  %s0 = inlined_call_operand.vmem [shape: f32[154,128], index: 0, kind: input, shape index: {}]
  %s1 = inlined_call_operand.vmem [shape: f32[128,512], index: 1, kind: input, shape index: {}]
  %s2 = inlined_call_operand.vmem [shape: f32[1,512], index: 2, kind: input, shape index: {}]
  %s3 = inlined_call_operand.vmem [shape: f32[154,512], index: 3, kind: output, shape index: {}]
  %s4 = sld [smem:[#allocation0]]
  $region117: #{_clip_text_forward.22} parent=0
    _
  %s6 = ssub.s32 1, %s4
  %s7 = scalar_select 0, %s6, %s4
  $region1: #{_clip_text_forward.22} parent=0
    #allocation2 [shape = 'u8[131072]{0}', space=vmem, size = 0x20000, scoped, tag = 'input window, operand 1']
    #allocation3 [shape = 'u8[163840]{0}', space=vmem, size = 0x28000, scoped, tag = 'output window, operand 0']
    loop: start=0, step=1, limit=6
    $region2: #{_clip_text_forward.22} parent=1 // loop_pre_header
      _
    $region3: #{_clip_text_forward.22} parent=1 // loop_header
      %s9 = sphi 0, %s13
      %p10 = scmp.ge.s32.totalorder %s9, 6
      %s17 = sphi 0, %s17
      %s19 = sphi 0, %s17
      %s20 = sphi 0, %s19
      %s34 = sphi 0, %s20
      %s40 = sphi 0, %s42
      %s43 = sphi 0, %s40
      %s44 = sphi 0, %s43
      %s60 = sphi 0, %s44
      %s66 = sphi 0, %s68
      %s69 = sphi 0, %s66
      %s70 = sphi 0, %s69
      %s86 = sphi 0, %s70
      %s92 = sphi 0, %s94
      %s95 = sphi 0, %s92
      %s96 = sphi 0, %s95
      %s112 = sphi 0, %s96
    $region4: #{_clip_text_forward.22} parent=1 // loop_header_branch
      %12 = sbr.rel (%p10) target = $region8
    $region5: #{_clip_text_forward.22} parent=1 // loop_body
      %s14 = ssub.s32 %s9, 1
      %s15 = ssub.s32 %s9, 2
      %s16 = sadd.s32 %s9, 1
      %s18 = sadd.s32 %s17, 1
      %p21 = scmp.eq.s32.totalorder %s9, 3
      %p22 = scmp.ne.s32.totalorder %s17, %s19
      %p23 = scmp.eq.s32.totalorder %s9, 0
      %p24 = por %p22, %p23
      %p25 = scmp.ne.s32.totalorder %s17, %s19
      %p26 = scmp.eq.s32.totalorder %s14, 3
      %p27 = por %p25, %p26
      %p28 = scmp.ne.s32.totalorder %s19, %s20
      %p29 = scmp.eq.s32.totalorder %s14, 0
      %p30 = por %p28, %p29
      %p31 = scmp.ne.s32.totalorder %s19, %s20
      %p32 = scmp.eq.s32.totalorder %s15, 3
      %p33 = por %p31, %p32
      %p35 = scmp.ne.s32.totalorder %s20, %s34
      %p36 = scmp.eq.s32.totalorder %s15, 0
      %p37 = por %p35, %p36
      %s38 = ssub.s32 %s9, %s16
      %p39 = scmp.eq.s32.totalorder %s38, 0
      %s41 = sadd.s32 %s40, 1
      %s42 = scalar_select %p39, %s40, %s41
      %p45 = pneg %p39
      %p46 = scmp.eq.s32.totalorder %s9, 3
      %p47 = por %p45, %p46
      %p48 = scmp.ne.s32.totalorder %s40, %s43
      %p49 = scmp.eq.s32.totalorder %s9, 0
      %p50 = por %p48, %p49
      %p51 = scmp.ne.s32.totalorder %s40, %s43
      %p52 = scmp.eq.s32.totalorder %s14, 3
      %p53 = por %p51, %p52
      %p54 = scmp.ne.s32.totalorder %s43, %s44
      %p55 = scmp.eq.s32.totalorder %s14, 0
      %p56 = por %p54, %p55
      %p57 = scmp.ne.s32.totalorder %s43, %s44
      %p58 = scmp.eq.s32.totalorder %s15, 3
      %p59 = por %p57, %p58
      %p61 = scmp.ne.s32.totalorder %s44, %s60
      %p62 = scmp.eq.s32.totalorder %s15, 0
      %p63 = por %p61, %p62
      %s64 = ssub.s32 %s9, %s16
      %p65 = scmp.eq.s32.totalorder %s64, 0
      %s67 = sadd.s32 %s66, 1
      %s68 = scalar_select %p65, %s66, %s67
      %p71 = pneg %p65
      %p72 = scmp.eq.s32.totalorder %s9, 3
      %p73 = por %p71, %p72
      %p74 = scmp.ne.s32.totalorder %s66, %s69
      %p75 = scmp.eq.s32.totalorder %s9, 0
      %p76 = por %p74, %p75
      %p77 = scmp.ne.s32.totalorder %s66, %s69
      %p78 = scmp.eq.s32.totalorder %s14, 3
      %p79 = por %p77, %p78
      %p80 = scmp.ne.s32.totalorder %s69, %s70
      %p81 = scmp.eq.s32.totalorder %s14, 0
      %p82 = por %p80, %p81
      %p83 = scmp.ne.s32.totalorder %s69, %s70
      %p84 = scmp.eq.s32.totalorder %s15, 3
      %p85 = por %p83, %p84
      %p87 = scmp.ne.s32.totalorder %s70, %s86
      %p88 = scmp.eq.s32.totalorder %s15, 0
      %p89 = por %p87, %p88
      %s90 = ssub.s32 %s9, %s16
      %p91 = scmp.eq.s32.totalorder %s90, 0
      %s93 = sadd.s32 %s92, 1
      %s94 = scalar_select %p91, %s92, %s93
      %p97 = pneg %p91
      %p98 = scmp.eq.s32.totalorder %s9, 3
      %p99 = por %p97, %p98
      %p100 = scmp.ne.s32.totalorder %s92, %s95
      %p101 = scmp.eq.s32.totalorder %s9, 0
      %p102 = por %p100, %p101
      %p103 = scmp.ne.s32.totalorder %s92, %s95
      %p104 = scmp.eq.s32.totalorder %s14, 3
      %p105 = por %p103, %p104
      %p106 = scmp.ne.s32.totalorder %s95, %s96
      %p107 = scmp.eq.s32.totalorder %s14, 0
      %p108 = por %p106, %p107
      %p109 = scmp.ne.s32.totalorder %s95, %s96
      %p110 = scmp.eq.s32.totalorder %s15, 3
      %p111 = por %p109, %p110
      %p113 = scmp.ne.s32.totalorder %s96, %s112
      %p114 = scmp.eq.s32.totalorder %s15, 0
      %p115 = por %p113, %p114
      %p116 = scmp.le.s32.totalorder 1, %s9
      %p117 = scmp.lt.s32.totalorder %s9, 5
      %p118 = pnand %p116, %p117
      %p119 = pneg %p118
      // Predicated region
      $region9: #{_clip_text_forward.22} parent=5 // pred_check
        _
      $region10: #{_clip_text_forward.22} parent=5 // pred_check_branch
        %121 = sbr.rel (%p118) target = $region12
      $region11: #{_clip_text_forward.22} parent=5 // pred_region
        %s122 = ssub.s32 %s9, 1
        // Predicated region
        $region13: #{_clip_text_forward.22} parent=11 // pred_check
          %p123 = pneg %p30
        $region14: #{_clip_text_forward.22} parent=11 // pred_check_branch
          %125 = sbr.rel (%p123) target = $region16
        $region15: #{_clip_text_forward.22} parent=11 // pred_region
          _
        $region16: #{_clip_text_forward.22} parent=11 // pred_fallthru
          _
      $region12: #{_clip_text_forward.22} parent=5 // pred_fallthru
        _
      %p126 = scmp.lt.s32.totalorder %s9, 4
      // Predicated region
      $region17: #{_clip_text_forward.22} parent=5 // pred_check
        %p127 = pneg %p126
      $region18: #{_clip_text_forward.22} parent=5 // pred_check_branch
        %129 = sbr.rel (%p127) target = $region20
      $region19: #{_clip_text_forward.22} parent=5 // pred_region
        // Predicated region
        $region21: #{_clip_text_forward.22} parent=19 // pred_check
          %p130 = pneg %p50
        $region22: #{_clip_text_forward.22} parent=19 // pred_check_branch
          %132 = sbr.rel (%p130) target = $region24
        $region23: #{_clip_text_forward.22} parent=19 // pred_region
          %s133 = sand.u32 %s40, 1
          %s134 = sand.u32 %s40, 1
          %s135 = smul.addr %s134, 128
          %s136 = scalar_lea.vmem [#allocation2], %s135
          %s137 = smul.addr %s9, 8
          %s138 = scalar_lea.vmem %s1, %s137
          // Predicated region
          $region25: #{_clip_text_forward.22} parent=23 // pred_check
            _
          $region26: #{_clip_text_forward.22} parent=23 // pred_check_branch
            %140 = sbr.rel (0) target = $region28
          $region27: #{_clip_text_forward.22} parent=23 // pred_region
            // Predicated region
            $region29: #{_clip_text_forward.22} parent=27 // pred_check
              _
            $region30: #{_clip_text_forward.22} parent=27 // pred_check_branch
              %142 = sbr.rel (0) target = $region32
            $region31: #{_clip_text_forward.22} parent=27 // pred_region
              // Predicated region
              $region44: #{_clip_text_forward.22} parent=31 // pred_check
                _
              $region45: #{_clip_text_forward.22} parent=31 // pred_check_branch
                %187 = sbr.rel (0) target = $region47
              $region46: #{_clip_text_forward.22} parent=31 // pred_region
                loop: start=0, step=1, limit=1
                $region48: #{_clip_text_forward.22} parent=46 // loop_pre_header
                  _
                $region49: #{_clip_text_forward.22} parent=46 // loop_header
                  %s189 = sphi 0, %s193
                  %p190 = scmp.ge.s32.totalorder %s189, 1
                  %s194 = sphi %s138, %s138
                  %s195 = sphi %s136, %s136
                $region50: #{_clip_text_forward.22} parent=46 // loop_header_branch
                  %192 = sbr.rel (%p190) target = $region54
                $region51: #{_clip_text_forward.22} parent=46 // loop_body
                  %v196 = vld [vmem:[%s194] sm:$0xff]
                  %197 = vst [vmem:[%s195] sm:$0xff] %v196
                  %v198 = vld [vmem:[%s194 + $0x20] sm:$0xff]
                  %199 = vst [vmem:[%s195 + $0x8] sm:$0xff] %v198
                  %v200 = vld [vmem:[%s194 + $0x40] sm:$0xff]
                  %201 = vst [vmem:[%s195 + $0x10] sm:$0xff] %v200
                  %v202 = vld [vmem:[%s194 + $0x60] sm:$0xff]
                  %203 = vst [vmem:[%s195 + $0x18] sm:$0xff] %v202
                  %v204 = vld [vmem:[%s194 + $0x80] sm:$0xff]
                  %205 = vst [vmem:[%s195 + $0x20] sm:$0xff] %v204
                  %v206 = vld [vmem:[%s194 + $0xa0] sm:$0xff]
                  %207 = vst [vmem:[%s195 + $0x28] sm:$0xff] %v206
                  %v208 = vld [vmem:[%s194 + $0xc0] sm:$0xff]
                  %209 = vst [vmem:[%s195 + $0x30] sm:$0xff] %v208
                  %v210 = vld [vmem:[%s194 + $0xe0] sm:$0xff]
                  %211 = vst [vmem:[%s195 + $0x38] sm:$0xff] %v210
                  %v212 = vld [vmem:[%s194 + $0x100] sm:$0xff]
                  %213 = vst [vmem:[%s195 + $0x40] sm:$0xff] %v212
                  %v214 = vld [vmem:[%s194 + $0x120] sm:$0xff]
                  %215 = vst [vmem:[%s195 + $0x48] sm:$0xff] %v214
                  %v216 = vld [vmem:[%s194 + $0x140] sm:$0xff]
                  %217 = vst [vmem:[%s195 + $0x50] sm:$0xff] %v216
                  %v218 = vld [vmem:[%s194 + $0x160] sm:$0xff]
                  %219 = vst [vmem:[%s195 + $0x58] sm:$0xff] %v218
                  %v220 = vld [vmem:[%s194 + $0x180] sm:$0xff]
                  %221 = vst [vmem:[%s195 + $0x60] sm:$0xff] %v220
                  %v222 = vld [vmem:[%s194 + $0x1a0] sm:$0xff]
                  %223 = vst [vmem:[%s195 + $0x68] sm:$0xff] %v222
                  %v224 = vld [vmem:[%s194 + $0x1c0] sm:$0xff]
                  %225 = vst [vmem:[%s195 + $0x70] sm:$0xff] %v224
                  %v226 = vld [vmem:[%s194 + $0x1e0] sm:$0xff]
                  %227 = vst [vmem:[%s195 + $0x78] sm:$0xff] %v226
                $region52: #{_clip_text_forward.22} parent=46 // loop_footer
                  %s193 = sadd.s32 1, %s189
                $region53: #{_clip_text_forward.22} parent=46 // loop_footer_branch
                  %188 = sbr.rel target = $region49
                $region54: #{_clip_text_forward.22} parent=46 // loop_exit
                  _
              $region47: #{_clip_text_forward.22} parent=31 // pred_fallthru
                _
              // Predicated region
              $region55: #{_clip_text_forward.22} parent=31 // pred_check
                _
              $region56: #{_clip_text_forward.22} parent=31 // pred_check_branch
                %229 = sbr.rel target = $region58
              $region57: #{_clip_text_forward.22} parent=31 // pred_region
                _
              $region58: #{_clip_text_forward.22} parent=31 // pred_fallthru
                _
            $region32: #{_clip_text_forward.22} parent=27 // pred_fallthru
              _
            // Predicated region
            $region33: #{_clip_text_forward.22} parent=27 // pred_check
              _
            $region34: #{_clip_text_forward.22} parent=27 // pred_check_branch
              %144 = sbr.rel target = $region36
            $region35: #{_clip_text_forward.22} parent=27 // pred_region
              loop: start=0, step=1, limit=1
              $region37: #{_clip_text_forward.22} parent=35 // loop_pre_header
                _
              $region38: #{_clip_text_forward.22} parent=35 // loop_header
                %s147 = sphi 0, %s151
                %p148 = scmp.ge.s32.totalorder %s147, 1
                %s152 = sphi %s138, %s138
                %s153 = sphi %s136, %s136
              $region39: #{_clip_text_forward.22} parent=35 // loop_header_branch
                %150 = sbr.rel (%p148) target = $region43
              $region40: #{_clip_text_forward.22} parent=35 // loop_body
                %v154 = vld [vmem:[%s152] sm:$0xff]
                %155 = vst [vmem:[%s153] sm:$0xff] %v154
                %v156 = vld [vmem:[%s152 + $0x20] sm:$0xff]
                %157 = vst [vmem:[%s153 + $0x8] sm:$0xff] %v156
                %v158 = vld [vmem:[%s152 + $0x40] sm:$0xff]
                %159 = vst [vmem:[%s153 + $0x10] sm:$0xff] %v158
                %v160 = vld [vmem:[%s152 + $0x60] sm:$0xff]
                %161 = vst [vmem:[%s153 + $0x18] sm:$0xff] %v160
                %v162 = vld [vmem:[%s152 + $0x80] sm:$0xff]
                %163 = vst [vmem:[%s153 + $0x20] sm:$0xff] %v162
                %v164 = vld [vmem:[%s152 + $0xa0] sm:$0xff]
                %165 = vst [vmem:[%s153 + $0x28] sm:$0xff] %v164
                %v166 = vld [vmem:[%s152 + $0xc0] sm:$0xff]
                %167 = vst [vmem:[%s153 + $0x30] sm:$0xff] %v166
                %v168 = vld [vmem:[%s152 + $0xe0] sm:$0xff]
                %169 = vst [vmem:[%s153 + $0x38] sm:$0xff] %v168
                %v170 = vld [vmem:[%s152 + $0x100] sm:$0xff]
                %171 = vst [vmem:[%s153 + $0x40] sm:$0xff] %v170
                %v172 = vld [vmem:[%s152 + $0x120] sm:$0xff]
                %173 = vst [vmem:[%s153 + $0x48] sm:$0xff] %v172
                %v174 = vld [vmem:[%s152 + $0x140] sm:$0xff]
                %175 = vst [vmem:[%s153 + $0x50] sm:$0xff] %v174
                %v176 = vld [vmem:[%s152 + $0x160] sm:$0xff]
                %177 = vst [vmem:[%s153 + $0x58] sm:$0xff] %v176
                %v178 = vld [vmem:[%s152 + $0x180] sm:$0xff]
                %179 = vst [vmem:[%s153 + $0x60] sm:$0xff] %v178
                %v180 = vld [vmem:[%s152 + $0x1a0] sm:$0xff]
                %181 = vst [vmem:[%s153 + $0x68] sm:$0xff] %v180
                %v182 = vld [vmem:[%s152 + $0x1c0] sm:$0xff]
                %183 = vst [vmem:[%s153 + $0x70] sm:$0xff] %v182
                %v184 = vld [vmem:[%s152 + $0x1e0] sm:$0xff]
                %185 = vst [vmem:[%s153 + $0x78] sm:$0xff] %v184
              $region41: #{_clip_text_forward.22} parent=35 // loop_footer
                %s151 = sadd.s32 1, %s147
              $region42: #{_clip_text_forward.22} parent=35 // loop_footer_branch
                %146 = sbr.rel target = $region38
              $region43: #{_clip_text_forward.22} parent=35 // loop_exit
                _
            $region36: #{_clip_text_forward.22} parent=27 // pred_fallthru
              _
          $region28: #{_clip_text_forward.22} parent=23 // pred_fallthru
            _
          %230 = vnop
        $region24: #{_clip_text_forward.22} parent=19 // pred_fallthru
          _
        // Predicated region
        $region59: #{_clip_text_forward.22} parent=19 // pred_check
          %p231 = pneg %p76
        $region60: #{_clip_text_forward.22} parent=19 // pred_check_branch
          %233 = sbr.rel (%p231) target = $region62
        $region61: #{_clip_text_forward.22} parent=19 // pred_region
          %p234 = scmp.lt.s32.totalorder %s9, 3
          %s235 = scalar_select %p234, %s9, 3
          %s236 = scalar_lea.vmem %s2, %s235
        $region62: #{_clip_text_forward.22} parent=19 // pred_fallthru
          _
      $region20: #{_clip_text_forward.22} parent=5 // pred_fallthru
        _
      %p237 = scmp.le.s32.totalorder 1, %s9
      %p238 = scmp.lt.s32.totalorder %s9, 5
      %p239 = pnand %p237, %p238
      %p240 = pneg %p239
      // Predicated region
      $region63: #{_clip_text_forward.22} parent=5 // pred_check
        _
      $region64: #{_clip_text_forward.22} parent=5 // pred_check_branch
        %242 = sbr.rel (%p239) target = $region66
      $region65: #{_clip_text_forward.22} parent=5 // pred_region
        %s243 = ssub.s32 %s9, 1
        %s244 = sand.u32 %s43, 1
        %s245 = sand.u32 %s43, 1
        %s246 = smul.addr %s245, 128
        %s247 = scalar_lea.vmem [#allocation2], %s246
        // Predicated region
        $region67: #{_clip_text_forward.22} parent=65 // pred_check
          %p248 = pneg %p56
        $region68: #{_clip_text_forward.22} parent=65 // pred_check_branch
          %250 = sbr.rel (%p248) target = $region70
        $region69: #{_clip_text_forward.22} parent=65 // pred_region
          _
        $region70: #{_clip_text_forward.22} parent=65 // pred_fallthru
          _
        %p251 = pneg %p30
        %p252 = pneg %p27
        %s253 = sand.u32 %s43, 1
        %s254 = sand.u32 %s43, 1
        %s255 = smul.addr %s254, 128
        %s256 = scalar_lea.vmem [#allocation2], %s255
        %p257 = pneg %p56
        %p258 = pneg %p53
        %p259 = scmp.lt.s32.totalorder %s14, 3
        %s260 = scalar_select %p259, %s14, 3
        %s261 = scalar_lea.vmem %s2, %s260
        %p262 = pneg %p82
        %p263 = pneg %p79
        %p264 = pneg %p108
        %p265 = pneg %p105
        %s266 = sand.u32 %s95, 1
        %s267 = sand.u32 %s95, 1
        %s268 = smul.addr %s267, 160
        %s269 = scalar_lea.vmem [#allocation3], %s268
        %p270 = scmp.lt.s32.totalorder %s14, 3
        %s271 = scalar_select %p270, %s14, 3
        %s272 = scalar_lea.vmem %s2, %s271
        %v273 = vld [vmem:[%s0] sm:$0xff]
        %v274 = vld [vmem:[%s0 + $0x8] sm:$0xff]
        %v275 = vld [vmem:[%s0 + $0x10] sm:$0xff]
        %v276 = vld [vmem:[%s0 + $0x18] sm:$0xff]
        %v277 = vld [vmem:[%s0 + $0x20] sm:$0xff]
        %v278 = vld [vmem:[%s0 + $0x28] sm:$0xff]
        %v279 = vld [vmem:[%s0 + $0x30] sm:$0xff]
        %v280 = vld [vmem:[%s0 + $0x38] sm:$0xff]
        %v281 = vld [vmem:[%s0 + $0x40] sm:$0xff]
        %v282 = vld [vmem:[%s0 + $0x48] sm:$0xff]
        %v283 = vld [vmem:[%s0 + $0x50] sm:$0xff]
        %v284 = vld [vmem:[%s0 + $0x58] sm:$0xff]
        %v285 = vld [vmem:[%s0 + $0x60] sm:$0xff]
        %v286 = vld [vmem:[%s0 + $0x68] sm:$0xff]
        %v287 = vld [vmem:[%s0 + $0x70] sm:$0xff]
        %v288 = vld [vmem:[%s0 + $0x78] sm:$0xff]
        %v289 = vld [vmem:[%s0 + $0x80] sm:$0xff]
        %v290 = vld [vmem:[%s0 + $0x88] sm:$0xff]
        %v291 = vld [vmem:[%s0 + $0x90] sm:$0xff]
        %v292 = vld [vmem:[%s0 + $0x98] sm:$0x3]
        %v293 = vld [vmem:[%s247] sm:$0xff]
        %v294 = vld [vmem:[%s247 + $0x8] sm:$0xff]
        %v295 = vld [vmem:[%s247 + $0x10] sm:$0xff]
        %v296 = vld [vmem:[%s247 + $0x18] sm:$0xff]
        %v297 = vld [vmem:[%s247 + $0x20] sm:$0xff]
        %v298 = vld [vmem:[%s247 + $0x28] sm:$0xff]
        %v299 = vld [vmem:[%s247 + $0x30] sm:$0xff]
        %v300 = vld [vmem:[%s247 + $0x38] sm:$0xff]
        %v301 = vld [vmem:[%s247 + $0x40] sm:$0xff]
        %v302 = vld [vmem:[%s247 + $0x48] sm:$0xff]
        %v303 = vld [vmem:[%s247 + $0x50] sm:$0xff]
        %v304 = vld [vmem:[%s247 + $0x58] sm:$0xff]
        %v305 = vld [vmem:[%s247 + $0x60] sm:$0xff]
        %v306 = vld [vmem:[%s247 + $0x68] sm:$0xff]
        %v307 = vld [vmem:[%s247 + $0x70] sm:$0xff]
        %v308 = vld [vmem:[%s247 + $0x78] sm:$0xff]
        %v309 = vld [vmem:[%s272] sm:$0x1]
        %v311 = vlaneseq
        %v312 = vshrl.u32 %v311, 7
        %v313 = vsub.s32 0, %v312
        %v314 = vrot.slane %v309, %v313
        %316 = vmatprep.subr.mxu0 0.0
        %317 = vmatpush1.msra.mxu0 %v293
        %318 = vmatprep.subr.mxu0 0.0
        %319 = vmatpush1.msra.mxu0 %v294
        %320 = vmatprep.subr.mxu0 0.0
        %321 = vmatpush1.msra.mxu0 %v295
        %322 = vmatprep.subr.mxu0 0.0
        %323 = vmatpush1.msra.mxu0 %v296
        %324 = vmatprep.subr.mxu0 0.0
        %325 = vmatpush1.msra.mxu0 %v297
        %326 = vmatprep.subr.mxu0 0.0
        %327 = vmatpush1.msra.mxu0 %v298
        %328 = vmatprep.subr.mxu0 0.0
        %329 = vmatpush1.msra.mxu0 %v299
        %330 = vmatprep.subr.mxu0 0.0
        %331 = vmatpush1.msra.mxu0 %v300
        %332 = vmatprep.subr.mxu0 0.0
        %333 = vmatpush1.msra.mxu0 %v301
        %334 = vmatprep.subr.mxu0 0.0
        %335 = vmatpush1.msra.mxu0 %v302
        %336 = vmatprep.subr.mxu0 0.0
        %337 = vmatpush1.msra.mxu0 %v303
        %338 = vmatprep.subr.mxu0 0.0
        %339 = vmatpush1.msra.mxu0 %v304
        %340 = vmatprep.subr.mxu0 0.0
        %341 = vmatpush1.msra.mxu0 %v305
        %342 = vmatprep.subr.mxu0 0.0
        %343 = vmatpush1.msra.mxu0 %v306
        %344 = vmatprep.subr.mxu0 0.0
        %345 = vmatpush1.msra.mxu0 %v307
        %346 = vmatprep.subr.mxu0 0.0
        %347 = vmatpush1.msra.mxu0 %v308
        %348 = vmatprep.subr.mxu0 0.0
        %349 = vmatpush1.msra.mxu0 0.0
        %350 = vmatprep.subr.mxu0 0.0
        %351 = vmatpush1.msra.mxu0 0.0
        %352 = vmatprep.subr.mxu0 0.0
        %353 = vmatpush1.msra.mxu0 0.0
        %354 = vmatprep.subr.mxu0 0.0
        %355 = vmatpush1.msra.mxu0 0.0
        %356 = vmatprep.subr.mxu0 0.0
        %357 = vmatpush1.msra.mxu0 0.0
        %358 = vmatprep.subr.mxu0 0.0
        %359 = vmatpush1.msra.mxu0 0.0
        %360 = vmatprep.subr.mxu0 0.0
        %361 = vmatpush1.msra.mxu0 0.0
        %362 = vmatprep.subr.mxu0 0.0
        %363 = vmatpush1.msra.mxu0 0.0
        %364 = vmatprep.subr.mxu0 0.0
        %365 = vmatpush1.msra.mxu0 0.0
        %366 = vmatprep.subr.mxu0 0.0
        %367 = vmatpush1.msra.mxu0 0.0
        %368 = vmatprep.subr.mxu0 0.0
        %369 = vmatpush1.msra.mxu0 0.0
        %370 = vmatprep.subr.mxu0 0.0
        %371 = vmatpush1.msra.mxu0 0.0
        %372 = vmatprep.subr.mxu0 0.0
        %373 = vmatpush1.msra.mxu0 0.0
        %374 = vmatprep.subr.mxu0 0.0
        %375 = vmatpush1.msra.mxu0 0.0
        %376 = vmatprep.subr.mxu0 0.0
        %377 = vmatpush1.msra.mxu0 0.0
        %378 = vmatprep.subr.mxu0 0.0
        %379 = vmatpush1.msra.mxu0 0.0
        %380 = vmatprep.mubr.f32.mxu0 0.0
        %381 = vmatmul.mubr.f32.gmra.mrb[0].mxu0 %v273
        %v382 = vpop.f32.mrb[0].mxu0
        %v383 = vadd.f32 %v314, %v382
        %v384 = vpop.f32.mrb[0].mxu0
        %385 = vmatprep.mubr.f32.mxu0 0.0
        %386 = vmatmul.mubr.f32.gmra.mrb[0].mxu0 %v274
        %v387 = vpop.f32.mrb[0].mxu0
        %v388 = vadd.f32 %v314, %v387
        %v389 = vpop.f32.mrb[0].mxu0
        %390 = vmatprep.mubr.f32.mxu0 0.0
        %391 = vmatmul.mubr.f32.gmra.mrb[0].mxu0 %v275
        %v392 = vpop.f32.mrb[0].mxu0
        %v393 = vadd.f32 %v314, %v392
        %v394 = vpop.f32.mrb[0].mxu0
        %395 = vmatprep.mubr.f32.mxu0 0.0
        %396 = vmatmul.mubr.f32.gmra.mrb[0].mxu0 %v276
        %v397 = vpop.f32.mrb[0].mxu0
        %v398 = vadd.f32 %v314, %v397
        %v399 = vpop.f32.mrb[0].mxu0
        %400 = vmatprep.mubr.f32.mxu0 0.0
        %401 = vmatmul.mubr.f32.gmra.mrb[0].mxu0 %v277
        %v402 = vpop.f32.mrb[0].mxu0
        %v403 = vadd.f32 %v314, %v402
        %v404 = vpop.f32.mrb[0].mxu0
        %405 = vmatprep.mubr.f32.mxu0 0.0
        %406 = vmatmul.mubr.f32.gmra.mrb[0].mxu0 %v278
        %v407 = vpop.f32.mrb[0].mxu0
        %v408 = vadd.f32 %v314, %v407
        %v409 = vpop.f32.mrb[0].mxu0
        %410 = vmatprep.mubr.f32.mxu0 0.0
        %411 = vmatmul.mubr.f32.gmra.mrb[0].mxu0 %v279
        %v412 = vpop.f32.mrb[0].mxu0
        %v413 = vadd.f32 %v314, %v412
        %v414 = vpop.f32.mrb[0].mxu0
        %415 = vmatprep.mubr.f32.mxu0 0.0
        %416 = vmatmul.mubr.f32.gmra.mrb[0].mxu0 %v280
        %v417 = vpop.f32.mrb[0].mxu0
        %v418 = vadd.f32 %v314, %v417
        %v419 = vpop.f32.mrb[0].mxu0
        %420 = vmatprep.mubr.f32.mxu0 0.0
        %421 = vmatmul.mubr.f32.gmra.mrb[0].mxu0 %v281
        %v422 = vpop.f32.mrb[0].mxu0
        %v423 = vadd.f32 %v314, %v422
        %v424 = vpop.f32.mrb[0].mxu0
        %425 = vmatprep.mubr.f32.mxu0 0.0
        %426 = vmatmul.mubr.f32.gmra.mrb[0].mxu0 %v282
        %v427 = vpop.f32.mrb[0].mxu0
        %v428 = vadd.f32 %v314, %v427
        %v429 = vpop.f32.mrb[0].mxu0
        %430 = vmatprep.mubr.f32.mxu0 0.0
        %431 = vmatmul.mubr.f32.gmra.mrb[0].mxu0 %v283
        %v432 = vpop.f32.mrb[0].mxu0
        %v433 = vadd.f32 %v314, %v432
        %v434 = vpop.f32.mrb[0].mxu0
        %435 = vmatprep.mubr.f32.mxu0 0.0
        %436 = vmatmul.mubr.f32.gmra.mrb[0].mxu0 %v284
        %v437 = vpop.f32.mrb[0].mxu0
        %v438 = vadd.f32 %v314, %v437
        %v439 = vpop.f32.mrb[0].mxu0
        %440 = vmatprep.mubr.f32.mxu0 0.0
        %441 = vmatmul.mubr.f32.gmra.mrb[0].mxu0 %v285
        %v442 = vpop.f32.mrb[0].mxu0
        %v443 = vadd.f32 %v314, %v442
        %v444 = vpop.f32.mrb[0].mxu0
        %445 = vmatprep.mubr.f32.mxu0 0.0
        %446 = vmatmul.mubr.f32.gmra.mrb[0].mxu0 %v286
        %v447 = vpop.f32.mrb[0].mxu0
        %v448 = vadd.f32 %v314, %v447
        %v449 = vpop.f32.mrb[0].mxu0
        %450 = vmatprep.mubr.f32.mxu0 0.0
        %451 = vmatmul.mubr.f32.gmra.mrb[0].mxu0 %v287
        %v452 = vpop.f32.mrb[0].mxu0
        %v453 = vadd.f32 %v314, %v452
        %v454 = vpop.f32.mrb[0].mxu0
        %455 = vmatprep.mubr.f32.mxu0 0.0
        %456 = vmatmul.mubr.f32.gmra.mrb[0].mxu0 %v288
        %v457 = vpop.f32.mrb[0].mxu0
        %v458 = vadd.f32 %v314, %v457
        %v459 = vpop.f32.mrb[0].mxu0
        %460 = vmatprep.mubr.f32.mxu0 0.0
        %461 = vmatmul.mubr.f32.gmra.mrb[0].mxu0 %v289
        %v462 = vpop.f32.mrb[0].mxu0
        %v463 = vadd.f32 %v314, %v462
        %v464 = vpop.f32.mrb[0].mxu0
        %465 = vmatprep.mubr.f32.mxu0 0.0
        %466 = vmatmul.mubr.f32.gmra.mrb[0].mxu0 %v290
        %v467 = vpop.f32.mrb[0].mxu0
        %v468 = vadd.f32 %v314, %v467
        %v469 = vpop.f32.mrb[0].mxu0
        %470 = vmatprep.mubr.f32.mxu0 0.0
        %471 = vmatmul.mubr.f32.gmra.mrb[0].mxu0 %v291
        %v472 = vpop.f32.mrb[0].mxu0
        %v473 = vadd.f32 %v314, %v472
        %v474 = vpop.f32.mrb[0].mxu0
        %475 = vmatprep.mubr.f32.mxu0 0.0
        %476 = vmatmul.mubr.f32.gmra.mrb[0].mxu0 %v292
        %v477 = vpop.f32.mrb[0].mxu0
        %v478 = vadd.f32 %v314, %v477
        %v479 = vpop.f32.mrb[0].mxu0
        %480 = vdwg.mxu0
        %v481 = vmul.f32 %v383, 1.702
        %v482 = vmul.f32 %v388, 1.702
        %v483 = vmul.f32 %v393, 1.702
        %v484 = vmul.f32 %v398, 1.702
        %v485 = vmul.f32 %v403, 1.702
        %v486 = vmul.f32 %v408, 1.702
        %v487 = vmul.f32 %v413, 1.702
        %v488 = vmul.f32 %v418, 1.702
        %v489 = vmul.f32 %v423, 1.702
        %v490 = vmul.f32 %v428, 1.702
        %v491 = vmul.f32 %v433, 1.702
        %v492 = vmul.f32 %v438, 1.702
        %v493 = vmul.f32 %v443, 1.702
        %v494 = vmul.f32 %v448, 1.702
        %v495 = vmul.f32 %v453, 1.702
        %v496 = vmul.f32 %v458, 1.702
        %v497 = vmul.f32 %v463, 1.702
        %v498 = vmul.f32 %v468, 1.702
        %v499 = vmul.f32 %v473, 1.702
        %v500 = vmul.f32 %v478, 1.702
        %v501 = vxor.u32 %v481, 2147483648
        %v502 = vxor.u32 %v482, 2147483648
        %v503 = vxor.u32 %v483, 2147483648
        %v504 = vxor.u32 %v484, 2147483648
        %v505 = vxor.u32 %v485, 2147483648
        %v506 = vxor.u32 %v486, 2147483648
        %v507 = vxor.u32 %v487, 2147483648
        %v508 = vxor.u32 %v488, 2147483648
        %v509 = vxor.u32 %v489, 2147483648
        %v510 = vxor.u32 %v490, 2147483648
        %v511 = vxor.u32 %v491, 2147483648
        %v512 = vxor.u32 %v492, 2147483648
        %v513 = vxor.u32 %v493, 2147483648
        %v514 = vxor.u32 %v494, 2147483648
        %v515 = vxor.u32 %v495, 2147483648
        %v516 = vxor.u32 %v496, 2147483648
        %v517 = vxor.u32 %v497, 2147483648
        %v518 = vxor.u32 %v498, 2147483648
        %v519 = vxor.u32 %v499, 2147483648
        %v520 = vxor.u32 %v500, 2147483648
        %v521 = vmul.f32 %v501, 1.442695
        %v522 = vpow.pop %v521
        %v523 = vmul.f32 %v502, 1.442695
        %v524 = vpow.pop %v523
        %v525 = vmul.f32 %v503, 1.442695
        %v526 = vpow.pop %v525
        %v527 = vmul.f32 %v504, 1.442695
        %v528 = vpow.pop %v527
        %v529 = vmul.f32 %v505, 1.442695
        %v530 = vpow.pop %v529
        %v531 = vmul.f32 %v506, 1.442695
        %v532 = vpow.pop %v531
        %v533 = vmul.f32 %v507, 1.442695
        %v534 = vpow.pop %v533
        %v535 = vmul.f32 %v508, 1.442695
        %v536 = vpow.pop %v535
        %v537 = vmul.f32 %v509, 1.442695
        %v538 = vpow.pop %v537
        %v539 = vmul.f32 %v510, 1.442695
        %v540 = vpow.pop %v539
        %v541 = vmul.f32 %v511, 1.442695
        %v542 = vpow.pop %v541
        %v543 = vmul.f32 %v512, 1.442695
        %v544 = vpow.pop %v543
        %v545 = vmul.f32 %v513, 1.442695
        %v546 = vpow.pop %v545
        %v547 = vmul.f32 %v514, 1.442695
        %v548 = vpow.pop %v547
        %v549 = vmul.f32 %v515, 1.442695
        %v550 = vpow.pop %v549
        %v551 = vmul.f32 %v516, 1.442695
        %v552 = vpow.pop %v551
        %v553 = vmul.f32 %v517, 1.442695
        %v554 = vpow.pop %v553
        %v555 = vmul.f32 %v518, 1.442695
        %v556 = vpow.pop %v555
        %v557 = vmul.f32 %v519, 1.442695
        %v558 = vpow.pop %v557
        %v559 = vmul.f32 %v520, 1.442695
        %v560 = vpow.pop %v559
        %v561 = vadd.f32 %v522, 1.0
        %v562 = vadd.f32 %v524, 1.0
        %v563 = vadd.f32 %v526, 1.0
        %v564 = vadd.f32 %v528, 1.0
        %v565 = vadd.f32 %v530, 1.0
        %v566 = vadd.f32 %v532, 1.0
        %v567 = vadd.f32 %v534, 1.0
        %v568 = vadd.f32 %v536, 1.0
        %v569 = vadd.f32 %v538, 1.0
        %v570 = vadd.f32 %v540, 1.0
        %v571 = vadd.f32 %v542, 1.0
        %v572 = vadd.f32 %v544, 1.0
        %v573 = vadd.f32 %v546, 1.0
        %v574 = vadd.f32 %v548, 1.0
        %v575 = vadd.f32 %v550, 1.0
        %v576 = vadd.f32 %v552, 1.0
        %v577 = vadd.f32 %v554, 1.0
        %v578 = vadd.f32 %v556, 1.0
        %v579 = vadd.f32 %v558, 1.0
        %v580 = vadd.f32 %v560, 1.0
        %v581 = vrcp.pop %v561
        %v582 = vmul.f32 1.0, %v581
        %v583 = vrcp.pop %v562
        %v584 = vmul.f32 1.0, %v583
        %v585 = vrcp.pop %v563
        %v586 = vmul.f32 1.0, %v585
        %v587 = vrcp.pop %v564
        %v588 = vmul.f32 1.0, %v587
        %v589 = vrcp.pop %v565
        %v590 = vmul.f32 1.0, %v589
        %v591 = vrcp.pop %v566
        %v592 = vmul.f32 1.0, %v591
        %v593 = vrcp.pop %v567
        %v594 = vmul.f32 1.0, %v593
        %v595 = vrcp.pop %v568
        %v596 = vmul.f32 1.0, %v595
        %v597 = vrcp.pop %v569
        %v598 = vmul.f32 1.0, %v597
        %v599 = vrcp.pop %v570
        %v600 = vmul.f32 1.0, %v599
        %v601 = vrcp.pop %v571
        %v602 = vmul.f32 1.0, %v601
        %v603 = vrcp.pop %v572
        %v604 = vmul.f32 1.0, %v603
        %v605 = vrcp.pop %v573
        %v606 = vmul.f32 1.0, %v605
        %v607 = vrcp.pop %v574
        %v608 = vmul.f32 1.0, %v607
        %v609 = vrcp.pop %v575
        %v610 = vmul.f32 1.0, %v609
        %v611 = vrcp.pop %v576
        %v612 = vmul.f32 1.0, %v611
        %v613 = vrcp.pop %v577
        %v614 = vmul.f32 1.0, %v613
        %v615 = vrcp.pop %v578
        %v616 = vmul.f32 1.0, %v615
        %v617 = vrcp.pop %v579
        %v618 = vmul.f32 1.0, %v617
        %v619 = vrcp.pop %v580
        %v620 = vmul.f32 1.0, %v619
        %v621 = vmul.f32 %v383, %v582
        %v622 = vmul.f32 %v388, %v584
        %v623 = vmul.f32 %v393, %v586
        %v624 = vmul.f32 %v398, %v588
        %v625 = vmul.f32 %v403, %v590
        %v626 = vmul.f32 %v408, %v592
        %v627 = vmul.f32 %v413, %v594
        %v628 = vmul.f32 %v418, %v596
        %v629 = vmul.f32 %v423, %v598
        %v630 = vmul.f32 %v428, %v600
        %v631 = vmul.f32 %v433, %v602
        %v632 = vmul.f32 %v438, %v604
        %v633 = vmul.f32 %v443, %v606
        %v634 = vmul.f32 %v448, %v608
        %v635 = vmul.f32 %v453, %v610
        %v636 = vmul.f32 %v458, %v612
        %v637 = vmul.f32 %v463, %v614
        %v638 = vmul.f32 %v468, %v616
        %v639 = vmul.f32 %v473, %v618
        %v640 = vmul.f32 %v478, %v620
        %641 = vst [vmem:[%s269] sm:$0xff] %v621
        %642 = vst [vmem:[%s269 + $0x8] sm:$0xff] %v622
        %643 = vst [vmem:[%s269 + $0x10] sm:$0xff] %v623
        %644 = vst [vmem:[%s269 + $0x18] sm:$0xff] %v624
        %645 = vst [vmem:[%s269 + $0x20] sm:$0xff] %v625
        %646 = vst [vmem:[%s269 + $0x28] sm:$0xff] %v626
        %647 = vst [vmem:[%s269 + $0x30] sm:$0xff] %v627
        %648 = vst [vmem:[%s269 + $0x38] sm:$0xff] %v628
        %649 = vst [vmem:[%s269 + $0x40] sm:$0xff] %v629
        %650 = vst [vmem:[%s269 + $0x48] sm:$0xff] %v630
        %651 = vst [vmem:[%s269 + $0x50] sm:$0xff] %v631
        %652 = vst [vmem:[%s269 + $0x58] sm:$0xff] %v632
        %653 = vst [vmem:[%s269 + $0x60] sm:$0xff] %v633
        %654 = vst [vmem:[%s269 + $0x68] sm:$0xff] %v634
        %655 = vst [vmem:[%s269 + $0x70] sm:$0xff] %v635
        %656 = vst [vmem:[%s269 + $0x78] sm:$0xff] %v636
        %657 = vst [vmem:[%s269 + $0x80] sm:$0xff] %v637
        %658 = vst [vmem:[%s269 + $0x88] sm:$0xff] %v638
        %659 = vst [vmem:[%s269 + $0x90] sm:$0xff] %v639
        %660 = vst [vmem:[%s269 + $0x98] sm:$0x3] %v640
        %s661 = sand.u32 %s95, 1
        %s662 = sand.u32 %s95, 1
        %s663 = smul.addr %s662, 160
        %s664 = scalar_lea.vmem [#allocation3], %s663
        // Predicated region
        $region71: #{_clip_text_forward.22} parent=65 // pred_check
          %p665 = pneg %p105
        $region72: #{_clip_text_forward.22} parent=65 // pred_check_branch
          %667 = sbr.rel (%p665) target = $region74
        $region73: #{_clip_text_forward.22} parent=65 // pred_region
          %s668 = smul.addr %s14, 8
          %s669 = scalar_lea.vmem %s3, %s668
          // Predicated region
          $region75: #{_clip_text_forward.22} parent=73 // pred_check
            _
          $region76: #{_clip_text_forward.22} parent=73 // pred_check_branch
            %671 = sbr.rel (0) target = $region78
          $region77: #{_clip_text_forward.22} parent=73 // pred_region
            // Predicated region
            $region79: #{_clip_text_forward.22} parent=77 // pred_check
              _
            $region80: #{_clip_text_forward.22} parent=77 // pred_check_branch
              %673 = sbr.rel (0) target = $region82
            $region81: #{_clip_text_forward.22} parent=77 // pred_region
              // Predicated region
              $region94: #{_clip_text_forward.22} parent=81 // pred_check
                _
              $region95: #{_clip_text_forward.22} parent=81 // pred_check_branch
                %726 = sbr.rel (0) target = $region97
              $region96: #{_clip_text_forward.22} parent=81 // pred_region
                loop: start=0, step=1, limit=1
                $region98: #{_clip_text_forward.22} parent=96 // loop_pre_header
                  _
                $region99: #{_clip_text_forward.22} parent=96 // loop_header
                  %s728 = sphi 0, %s732
                  %p729 = scmp.ge.s32.totalorder %s728, 1
                  %s733 = sphi %s664, %s664
                  %s734 = sphi %s669, %s669
                $region100: #{_clip_text_forward.22} parent=96 // loop_header_branch
                  %731 = sbr.rel (%p729) target = $region104
                $region101: #{_clip_text_forward.22} parent=96 // loop_body
                  %v735 = vld [vmem:[%s733] sm:$0xff]
                  %736 = vst [vmem:[%s734] sm:$0xff] %v735
                  %v737 = vld [vmem:[%s733 + $0x8] sm:$0xff]
                  %738 = vst [vmem:[%s734 + $0x20] sm:$0xff] %v737
                  %v739 = vld [vmem:[%s733 + $0x10] sm:$0xff]
                  %740 = vst [vmem:[%s734 + $0x40] sm:$0xff] %v739
                  %v741 = vld [vmem:[%s733 + $0x18] sm:$0xff]
                  %742 = vst [vmem:[%s734 + $0x60] sm:$0xff] %v741
                  %v743 = vld [vmem:[%s733 + $0x20] sm:$0xff]
                  %744 = vst [vmem:[%s734 + $0x80] sm:$0xff] %v743
                  %v745 = vld [vmem:[%s733 + $0x28] sm:$0xff]
                  %746 = vst [vmem:[%s734 + $0xa0] sm:$0xff] %v745
                  %v747 = vld [vmem:[%s733 + $0x30] sm:$0xff]
                  %748 = vst [vmem:[%s734 + $0xc0] sm:$0xff] %v747
                  %v749 = vld [vmem:[%s733 + $0x38] sm:$0xff]
                  %750 = vst [vmem:[%s734 + $0xe0] sm:$0xff] %v749
                  %v751 = vld [vmem:[%s733 + $0x40] sm:$0xff]
                  %752 = vst [vmem:[%s734 + $0x100] sm:$0xff] %v751
                  %v753 = vld [vmem:[%s733 + $0x48] sm:$0xff]
                  %754 = vst [vmem:[%s734 + $0x120] sm:$0xff] %v753
                  %v755 = vld [vmem:[%s733 + $0x50] sm:$0xff]
                  %756 = vst [vmem:[%s734 + $0x140] sm:$0xff] %v755
                  %v757 = vld [vmem:[%s733 + $0x58] sm:$0xff]
                  %758 = vst [vmem:[%s734 + $0x160] sm:$0xff] %v757
                  %v759 = vld [vmem:[%s733 + $0x60] sm:$0xff]
                  %760 = vst [vmem:[%s734 + $0x180] sm:$0xff] %v759
                  %v761 = vld [vmem:[%s733 + $0x68] sm:$0xff]
                  %762 = vst [vmem:[%s734 + $0x1a0] sm:$0xff] %v761
                  %v763 = vld [vmem:[%s733 + $0x70] sm:$0xff]
                  %764 = vst [vmem:[%s734 + $0x1c0] sm:$0xff] %v763
                  %v765 = vld [vmem:[%s733 + $0x78] sm:$0xff]
                  %766 = vst [vmem:[%s734 + $0x1e0] sm:$0xff] %v765
                  %v767 = vld [vmem:[%s733 + $0x80] sm:$0xff]
                  %768 = vst [vmem:[%s734 + $0x200] sm:$0xff] %v767
                  %v769 = vld [vmem:[%s733 + $0x88] sm:$0xff]
                  %770 = vst [vmem:[%s734 + $0x220] sm:$0xff] %v769
                  %v771 = vld [vmem:[%s733 + $0x90] sm:$0xff]
                  %772 = vst [vmem:[%s734 + $0x240] sm:$0xff] %v771
                  %v773 = vld [vmem:[%s733 + $0x98] sm:$0xff]
                  %774 = vst [vmem:[%s734 + $0x260] sm:$0xff] %v773
                $region102: #{_clip_text_forward.22} parent=96 // loop_footer
                  %s732 = sadd.s32 1, %s728
                $region103: #{_clip_text_forward.22} parent=96 // loop_footer_branch
                  %727 = sbr.rel target = $region99
                $region104: #{_clip_text_forward.22} parent=96 // loop_exit
                  _
              $region97: #{_clip_text_forward.22} parent=81 // pred_fallthru
                _
              // Predicated region
              $region105: #{_clip_text_forward.22} parent=81 // pred_check
                _
              $region106: #{_clip_text_forward.22} parent=81 // pred_check_branch
                %776 = sbr.rel target = $region108
              $region107: #{_clip_text_forward.22} parent=81 // pred_region
                _
              $region108: #{_clip_text_forward.22} parent=81 // pred_fallthru
                _
            $region82: #{_clip_text_forward.22} parent=77 // pred_fallthru
              _
            // Predicated region
            $region83: #{_clip_text_forward.22} parent=77 // pred_check
              _
            $region84: #{_clip_text_forward.22} parent=77 // pred_check_branch
              %675 = sbr.rel target = $region86
            $region85: #{_clip_text_forward.22} parent=77 // pred_region
              loop: start=0, step=1, limit=1
              $region87: #{_clip_text_forward.22} parent=85 // loop_pre_header
                _
              $region88: #{_clip_text_forward.22} parent=85 // loop_header
                %s678 = sphi 0, %s682
                %p679 = scmp.ge.s32.totalorder %s678, 1
                %s683 = sphi %s664, %s664
                %s684 = sphi %s669, %s669
              $region89: #{_clip_text_forward.22} parent=85 // loop_header_branch
                %681 = sbr.rel (%p679) target = $region93
              $region90: #{_clip_text_forward.22} parent=85 // loop_body
                %v685 = vld [vmem:[%s683] sm:$0xff]
                %686 = vst [vmem:[%s684] sm:$0xff] %v685
                %v687 = vld [vmem:[%s683 + $0x8] sm:$0xff]
                %688 = vst [vmem:[%s684 + $0x20] sm:$0xff] %v687
                %v689 = vld [vmem:[%s683 + $0x10] sm:$0xff]
                %690 = vst [vmem:[%s684 + $0x40] sm:$0xff] %v689
                %v691 = vld [vmem:[%s683 + $0x18] sm:$0xff]
                %692 = vst [vmem:[%s684 + $0x60] sm:$0xff] %v691
                %v693 = vld [vmem:[%s683 + $0x20] sm:$0xff]
                %694 = vst [vmem:[%s684 + $0x80] sm:$0xff] %v693
                %v695 = vld [vmem:[%s683 + $0x28] sm:$0xff]
                %696 = vst [vmem:[%s684 + $0xa0] sm:$0xff] %v695
                %v697 = vld [vmem:[%s683 + $0x30] sm:$0xff]
                %698 = vst [vmem:[%s684 + $0xc0] sm:$0xff] %v697
                %v699 = vld [vmem:[%s683 + $0x38] sm:$0xff]
                %700 = vst [vmem:[%s684 + $0xe0] sm:$0xff] %v699
                %v701 = vld [vmem:[%s683 + $0x40] sm:$0xff]
                %702 = vst [vmem:[%s684 + $0x100] sm:$0xff] %v701
                %v703 = vld [vmem:[%s683 + $0x48] sm:$0xff]
                %704 = vst [vmem:[%s684 + $0x120] sm:$0xff] %v703
                %v705 = vld [vmem:[%s683 + $0x50] sm:$0xff]
                %706 = vst [vmem:[%s684 + $0x140] sm:$0xff] %v705
                %v707 = vld [vmem:[%s683 + $0x58] sm:$0xff]
                %708 = vst [vmem:[%s684 + $0x160] sm:$0xff] %v707
                %v709 = vld [vmem:[%s683 + $0x60] sm:$0xff]
                %710 = vst [vmem:[%s684 + $0x180] sm:$0xff] %v709
                %v711 = vld [vmem:[%s683 + $0x68] sm:$0xff]
                %712 = vst [vmem:[%s684 + $0x1a0] sm:$0xff] %v711
                %v713 = vld [vmem:[%s683 + $0x70] sm:$0xff]
                %714 = vst [vmem:[%s684 + $0x1c0] sm:$0xff] %v713
                %v715 = vld [vmem:[%s683 + $0x78] sm:$0xff]
                %716 = vst [vmem:[%s684 + $0x1e0] sm:$0xff] %v715
                %v717 = vld [vmem:[%s683 + $0x80] sm:$0xff]
                %718 = vst [vmem:[%s684 + $0x200] sm:$0xff] %v717
                %v719 = vld [vmem:[%s683 + $0x88] sm:$0xff]
                %720 = vst [vmem:[%s684 + $0x220] sm:$0xff] %v719
                %v721 = vld [vmem:[%s683 + $0x90] sm:$0xff]
                %722 = vst [vmem:[%s684 + $0x240] sm:$0xff] %v721
                %v723 = vld [vmem:[%s683 + $0x98] sm:$0xff]
                %724 = vst [vmem:[%s684 + $0x260] sm:$0xff] %v723
              $region91: #{_clip_text_forward.22} parent=85 // loop_footer
                %s682 = sadd.s32 1, %s678
              $region92: #{_clip_text_forward.22} parent=85 // loop_footer_branch
                %677 = sbr.rel target = $region88
              $region93: #{_clip_text_forward.22} parent=85 // loop_exit
                _
            $region86: #{_clip_text_forward.22} parent=77 // pred_fallthru
              _
          $region78: #{_clip_text_forward.22} parent=73 // pred_fallthru
            _
          %777 = vnop
        $region74: #{_clip_text_forward.22} parent=65 // pred_fallthru
          _
      $region66: #{_clip_text_forward.22} parent=5 // pred_fallthru
        _
      %p778 = scmp.le.s32.totalorder 2, %s9
      // Predicated region
      $region109: #{_clip_text_forward.22} parent=5 // pred_check
        %p779 = pneg %p778
      $region110: #{_clip_text_forward.22} parent=5 // pred_check_branch
        %781 = sbr.rel (%p779) target = $region112
      $region111: #{_clip_text_forward.22} parent=5 // pred_region
        %s782 = ssub.s32 %s9, 2
        // Predicated region
        $region113: #{_clip_text_forward.22} parent=111 // pred_check
          %p783 = pneg %p111
        $region114: #{_clip_text_forward.22} parent=111 // pred_check_branch
          %785 = sbr.rel (%p783) target = $region116
        $region115: #{_clip_text_forward.22} parent=111 // pred_region
          %s786 = sand.u32 %s96, 1
          %s787 = sand.u32 %s96, 1
          %s788 = smul.addr %s787, 160
          %s789 = scalar_lea.vmem [#allocation3], %s788
        $region116: #{_clip_text_forward.22} parent=111 // pred_fallthru
          _
      $region112: #{_clip_text_forward.22} parent=5 // pred_fallthru
        _
    $region6: #{_clip_text_forward.22} parent=1 // loop_footer
      %s13 = sadd.s32 1, %s9
    $region7: #{_clip_text_forward.22} parent=1 // loop_footer_branch
      %8 = sbr.rel target = $region3
    $region8: #{_clip_text_forward.22} parent=1 // loop_exit
      _

// kernel: _clip_text_forward.23
$region0: #{_clip_text_forward.23}
  #allocation0 [shape = 'u32[]', space=smem, size = 0x4, offset = 0x4, fixed_abs, tag = 'smem constant byte address 0x4 - core index']
  #allocation1 [shape = 'u32[144,128]{1,0:T(1,128)}', space=vmem, size = 0x12000, scoped, tag = 'internal scratch']
  %s0 = inlined_call_operand.vmem [shape: f32[154,512], index: 0, kind: input, shape index: {}]
  %s1 = inlined_call_operand.vmem [shape: f32[512,128], index: 1, kind: input, shape index: {}]
  %s2 = inlined_call_operand.vmem [shape: f32[1,128], index: 2, kind: input, shape index: {}]
  %s3 = inlined_call_operand.vmem [shape: f32[154,128], index: 3, kind: input, shape index: {}]
  %s4 = inlined_call_operand.vmem [shape: f32[154,128], index: 4, kind: output, shape index: {}]
  %s5 = sld [smem:[#allocation0]]
  $region26: #{_clip_text_forward.23} parent=0
    _
  %s7 = ssub.s32 1, %s5
  %s8 = scalar_select 0, %s7, %s5
  // Predicated region
  $region2: #{_clip_text_forward.23} parent=0 // pred_check
    _
  $region3: #{_clip_text_forward.23} parent=0 // pred_check_branch
    %10 = sbr.rel (0) target = $region5
  $region4: #{_clip_text_forward.23} parent=0 // pred_region
    _
  $region5: #{_clip_text_forward.23} parent=0 // pred_fallthru
    _
  // Predicated region
  $region6: #{_clip_text_forward.23} parent=0 // pred_check
    _
  $region7: #{_clip_text_forward.23} parent=0 // pred_check_branch
    %12 = sbr.rel (0) target = $region9
  $region8: #{_clip_text_forward.23} parent=0 // pred_region
    _
  $region9: #{_clip_text_forward.23} parent=0 // pred_fallthru
    _
  // Predicated region
  $region10: #{_clip_text_forward.23} parent=0 // pred_check
    _
  $region11: #{_clip_text_forward.23} parent=0 // pred_check_branch
    %14 = sbr.rel (0) target = $region13
  $region12: #{_clip_text_forward.23} parent=0 // pred_region
    _
  $region13: #{_clip_text_forward.23} parent=0 // pred_fallthru
    _
  // Predicated region
  $region14: #{_clip_text_forward.23} parent=0 // pred_check
    _
  $region15: #{_clip_text_forward.23} parent=0 // pred_check_branch
    %16 = sbr.rel (0) target = $region17
  $region16: #{_clip_text_forward.23} parent=0 // pred_region
    _
  $region17: #{_clip_text_forward.23} parent=0 // pred_fallthru
    _
  %v17 = vld [vmem:[%s0] sm:$0xff]
  %v18 = vld [vmem:[%s0 + $0x8] sm:$0xff]
  %v19 = vld [vmem:[%s0 + $0x10] sm:$0xff]
  %v20 = vld [vmem:[%s0 + $0x18] sm:$0xff]
  %v21 = vld [vmem:[%s0 + $0x20] sm:$0xff]
  %v22 = vld [vmem:[%s0 + $0x28] sm:$0xff]
  %v23 = vld [vmem:[%s0 + $0x30] sm:$0xff]
  %v24 = vld [vmem:[%s0 + $0x38] sm:$0xff]
  %v25 = vld [vmem:[%s0 + $0x40] sm:$0xff]
  %v26 = vld [vmem:[%s0 + $0x48] sm:$0xff]
  %v27 = vld [vmem:[%s0 + $0x50] sm:$0xff]
  %v28 = vld [vmem:[%s0 + $0x58] sm:$0xff]
  %v29 = vld [vmem:[%s0 + $0x60] sm:$0xff]
  %v30 = vld [vmem:[%s0 + $0x68] sm:$0xff]
  %v31 = vld [vmem:[%s0 + $0x70] sm:$0xff]
  %v32 = vld [vmem:[%s0 + $0x78] sm:$0xff]
  %v33 = vld [vmem:[%s0 + $0x80] sm:$0xff]
  %v34 = vld [vmem:[%s0 + $0x88] sm:$0xff]
  %v35 = vld [vmem:[%s0 + $0x90] sm:$0xff]
  %v36 = vld [vmem:[%s0 + $0x98] sm:$0xff]
  %v37 = vld [vmem:[%s0 + $0xa0] sm:$0xff]
  %v38 = vld [vmem:[%s0 + $0xa8] sm:$0xff]
  %v39 = vld [vmem:[%s0 + $0xb0] sm:$0xff]
  %v40 = vld [vmem:[%s0 + $0xb8] sm:$0xff]
  %v41 = vld [vmem:[%s0 + $0xc0] sm:$0xff]
  %v42 = vld [vmem:[%s0 + $0xc8] sm:$0xff]
  %v43 = vld [vmem:[%s0 + $0xd0] sm:$0xff]
  %v44 = vld [vmem:[%s0 + $0xd8] sm:$0xff]
  %v45 = vld [vmem:[%s0 + $0xe0] sm:$0xff]
  %v46 = vld [vmem:[%s0 + $0xe8] sm:$0xff]
  %v47 = vld [vmem:[%s0 + $0xf0] sm:$0xff]
  %v48 = vld [vmem:[%s0 + $0xf8] sm:$0xff]
  %v49 = vld [vmem:[%s0 + $0x100] sm:$0xff]
  %v50 = vld [vmem:[%s0 + $0x108] sm:$0xff]
  %v51 = vld [vmem:[%s0 + $0x110] sm:$0xff]
  %v52 = vld [vmem:[%s0 + $0x118] sm:$0xff]
  %v53 = vld [vmem:[%s0 + $0x120] sm:$0xff]
  %v54 = vld [vmem:[%s0 + $0x128] sm:$0xff]
  %v55 = vld [vmem:[%s0 + $0x130] sm:$0xff]
  %v56 = vld [vmem:[%s0 + $0x138] sm:$0xff]
  %v57 = vld [vmem:[%s0 + $0x140] sm:$0xff]
  %v58 = vld [vmem:[%s0 + $0x148] sm:$0xff]
  %v59 = vld [vmem:[%s0 + $0x150] sm:$0xff]
  %v60 = vld [vmem:[%s0 + $0x158] sm:$0xff]
  %v61 = vld [vmem:[%s0 + $0x160] sm:$0xff]
  %v62 = vld [vmem:[%s0 + $0x168] sm:$0xff]
  %v63 = vld [vmem:[%s0 + $0x170] sm:$0xff]
  %v64 = vld [vmem:[%s0 + $0x178] sm:$0xff]
  %v65 = vld [vmem:[%s0 + $0x180] sm:$0xff]
  %v66 = vld [vmem:[%s0 + $0x188] sm:$0xff]
  %v67 = vld [vmem:[%s0 + $0x190] sm:$0xff]
  %v68 = vld [vmem:[%s0 + $0x198] sm:$0xff]
  %v69 = vld [vmem:[%s0 + $0x1a0] sm:$0xff]
  %v70 = vld [vmem:[%s0 + $0x1a8] sm:$0xff]
  %v71 = vld [vmem:[%s0 + $0x1b0] sm:$0xff]
  %v72 = vld [vmem:[%s0 + $0x1b8] sm:$0xff]
  %v73 = vld [vmem:[%s0 + $0x1c0] sm:$0xff]
  %v74 = vld [vmem:[%s0 + $0x1c8] sm:$0xff]
  %v75 = vld [vmem:[%s0 + $0x1d0] sm:$0xff]
  %v76 = vld [vmem:[%s0 + $0x1d8] sm:$0xff]
  %v77 = vld [vmem:[%s0 + $0x1e0] sm:$0xff]
  %v78 = vld [vmem:[%s0 + $0x1e8] sm:$0xff]
  %v79 = vld [vmem:[%s0 + $0x1f0] sm:$0xff]
  %v80 = vld [vmem:[%s0 + $0x1f8] sm:$0xff]
  %v81 = vld [vmem:[%s0 + $0x200] sm:$0xff]
  %v82 = vld [vmem:[%s0 + $0x208] sm:$0xff]
  %v83 = vld [vmem:[%s0 + $0x210] sm:$0xff]
  %v84 = vld [vmem:[%s0 + $0x218] sm:$0xff]
  %v85 = vld [vmem:[%s0 + $0x220] sm:$0xff]
  %v86 = vld [vmem:[%s0 + $0x228] sm:$0xff]
  %v87 = vld [vmem:[%s0 + $0x230] sm:$0xff]
  %v88 = vld [vmem:[%s0 + $0x238] sm:$0xff]
  %v89 = vld [vmem:[%s0 + $0x240] sm:$0xff]
  %v90 = vld [vmem:[%s0 + $0x248] sm:$0xff]
  %v91 = vld [vmem:[%s0 + $0x250] sm:$0xff]
  %v92 = vld [vmem:[%s0 + $0x258] sm:$0xff]
  %v93 = vld [vmem:[%s0 + $0x260] sm:$0x3]
  %v94 = vld [vmem:[%s0 + $0x268] sm:$0x3]
  %v95 = vld [vmem:[%s0 + $0x270] sm:$0x3]
  %v96 = vld [vmem:[%s0 + $0x278] sm:$0x3]
  %v97 = vld [vmem:[%s1] sm:$0xff]
  %v98 = vld [vmem:[%s1 + $0x8] sm:$0xff]
  %v99 = vld [vmem:[%s1 + $0x10] sm:$0xff]
  %v100 = vld [vmem:[%s1 + $0x18] sm:$0xff]
  %v101 = vld [vmem:[%s1 + $0x20] sm:$0xff]
  %v102 = vld [vmem:[%s1 + $0x28] sm:$0xff]
  %v103 = vld [vmem:[%s1 + $0x30] sm:$0xff]
  %v104 = vld [vmem:[%s1 + $0x38] sm:$0xff]
  %v105 = vld [vmem:[%s1 + $0x40] sm:$0xff]
  %v106 = vld [vmem:[%s1 + $0x48] sm:$0xff]
  %v107 = vld [vmem:[%s1 + $0x50] sm:$0xff]
  %v108 = vld [vmem:[%s1 + $0x58] sm:$0xff]
  %v109 = vld [vmem:[%s1 + $0x60] sm:$0xff]
  %v110 = vld [vmem:[%s1 + $0x68] sm:$0xff]
  %v111 = vld [vmem:[%s1 + $0x70] sm:$0xff]
  %v112 = vld [vmem:[%s1 + $0x78] sm:$0xff]
  %v113 = vld [vmem:[%s1 + $0x80] sm:$0xff]
  %v114 = vld [vmem:[%s1 + $0x88] sm:$0xff]
  %v115 = vld [vmem:[%s1 + $0x90] sm:$0xff]
  %v116 = vld [vmem:[%s1 + $0x98] sm:$0xff]
  %v117 = vld [vmem:[%s1 + $0xa0] sm:$0xff]
  %v118 = vld [vmem:[%s1 + $0xa8] sm:$0xff]
  %v119 = vld [vmem:[%s1 + $0xb0] sm:$0xff]
  %v120 = vld [vmem:[%s1 + $0xb8] sm:$0xff]
  %v121 = vld [vmem:[%s1 + $0xc0] sm:$0xff]
  %v122 = vld [vmem:[%s1 + $0xc8] sm:$0xff]
  %v123 = vld [vmem:[%s1 + $0xd0] sm:$0xff]
  %v124 = vld [vmem:[%s1 + $0xd8] sm:$0xff]
  %v125 = vld [vmem:[%s1 + $0xe0] sm:$0xff]
  %v126 = vld [vmem:[%s1 + $0xe8] sm:$0xff]
  %v127 = vld [vmem:[%s1 + $0xf0] sm:$0xff]
  %v128 = vld [vmem:[%s1 + $0xf8] sm:$0xff]
  %v129 = vld [vmem:[%s1 + $0x100] sm:$0xff]
  %v130 = vld [vmem:[%s1 + $0x108] sm:$0xff]
  %v131 = vld [vmem:[%s1 + $0x110] sm:$0xff]
  %v132 = vld [vmem:[%s1 + $0x118] sm:$0xff]
  %v133 = vld [vmem:[%s1 + $0x120] sm:$0xff]
  %v134 = vld [vmem:[%s1 + $0x128] sm:$0xff]
  %v135 = vld [vmem:[%s1 + $0x130] sm:$0xff]
  %v136 = vld [vmem:[%s1 + $0x138] sm:$0xff]
  %v137 = vld [vmem:[%s1 + $0x140] sm:$0xff]
  %v138 = vld [vmem:[%s1 + $0x148] sm:$0xff]
  %v139 = vld [vmem:[%s1 + $0x150] sm:$0xff]
  %v140 = vld [vmem:[%s1 + $0x158] sm:$0xff]
  %v141 = vld [vmem:[%s1 + $0x160] sm:$0xff]
  %v142 = vld [vmem:[%s1 + $0x168] sm:$0xff]
  %v143 = vld [vmem:[%s1 + $0x170] sm:$0xff]
  %v144 = vld [vmem:[%s1 + $0x178] sm:$0xff]
  %v145 = vld [vmem:[%s1 + $0x180] sm:$0xff]
  %v146 = vld [vmem:[%s1 + $0x188] sm:$0xff]
  %v147 = vld [vmem:[%s1 + $0x190] sm:$0xff]
  %v148 = vld [vmem:[%s1 + $0x198] sm:$0xff]
  %v149 = vld [vmem:[%s1 + $0x1a0] sm:$0xff]
  %v150 = vld [vmem:[%s1 + $0x1a8] sm:$0xff]
  %v151 = vld [vmem:[%s1 + $0x1b0] sm:$0xff]
  %v152 = vld [vmem:[%s1 + $0x1b8] sm:$0xff]
  %v153 = vld [vmem:[%s1 + $0x1c0] sm:$0xff]
  %v154 = vld [vmem:[%s1 + $0x1c8] sm:$0xff]
  %v155 = vld [vmem:[%s1 + $0x1d0] sm:$0xff]
  %v156 = vld [vmem:[%s1 + $0x1d8] sm:$0xff]
  %v157 = vld [vmem:[%s1 + $0x1e0] sm:$0xff]
  %v158 = vld [vmem:[%s1 + $0x1e8] sm:$0xff]
  %v159 = vld [vmem:[%s1 + $0x1f0] sm:$0xff]
  %v160 = vld [vmem:[%s1 + $0x1f8] sm:$0xff]
  %v161 = vld [vmem:[%s2] sm:$0x1]
  %v163 = vlaneseq
  %v164 = vshrl.u32 %v163, 7
  %v165 = vsub.s32 0, %v164
  %v166 = vrot.slane %v161, %v165
  %168 = vmatprep.subr.mxu0 0.0
  %169 = vmatpush1.msra.mxu0 %v97
  %170 = vmatprep.subr.mxu0 0.0
  %171 = vmatpush1.msra.mxu0 %v98
  %172 = vmatprep.subr.mxu0 0.0
  %173 = vmatpush1.msra.mxu0 %v99
  %174 = vmatprep.subr.mxu0 0.0
  %175 = vmatpush1.msra.mxu0 %v100
  %176 = vmatprep.subr.mxu0 0.0
  %177 = vmatpush1.msra.mxu0 %v101
  %178 = vmatprep.subr.mxu0 0.0
  %179 = vmatpush1.msra.mxu0 %v102
  %180 = vmatprep.subr.mxu0 0.0
  %181 = vmatpush1.msra.mxu0 %v103
  %182 = vmatprep.subr.mxu0 0.0
  %183 = vmatpush1.msra.mxu0 %v104
  %184 = vmatprep.subr.mxu0 0.0
  %185 = vmatpush1.msra.mxu0 %v105
  %186 = vmatprep.subr.mxu0 0.0
  %187 = vmatpush1.msra.mxu0 %v106
  %188 = vmatprep.subr.mxu0 0.0
  %189 = vmatpush1.msra.mxu0 %v107
  %190 = vmatprep.subr.mxu0 0.0
  %191 = vmatpush1.msra.mxu0 %v108
  %192 = vmatprep.subr.mxu0 0.0
  %193 = vmatpush1.msra.mxu0 %v109
  %194 = vmatprep.subr.mxu0 0.0
  %195 = vmatpush1.msra.mxu0 %v110
  %196 = vmatprep.subr.mxu0 0.0
  %197 = vmatpush1.msra.mxu0 %v111
  %198 = vmatprep.subr.mxu0 0.0
  %199 = vmatpush1.msra.mxu0 %v112
  %200 = vmatprep.subr.mxu0 0.0
  %201 = vmatpush1.msra.mxu0 %v113
  %202 = vmatprep.subr.mxu0 0.0
  %203 = vmatpush1.msra.mxu0 %v114
  %204 = vmatprep.subr.mxu0 0.0
  %205 = vmatpush1.msra.mxu0 %v115
  %206 = vmatprep.subr.mxu0 0.0
  %207 = vmatpush1.msra.mxu0 %v116
  %208 = vmatprep.subr.mxu0 0.0
  %209 = vmatpush1.msra.mxu0 %v117
  %210 = vmatprep.subr.mxu0 0.0
  %211 = vmatpush1.msra.mxu0 %v118
  %212 = vmatprep.subr.mxu0 0.0
  %213 = vmatpush1.msra.mxu0 %v119
  %214 = vmatprep.subr.mxu0 0.0
  %215 = vmatpush1.msra.mxu0 %v120
  %216 = vmatprep.subr.mxu0 0.0
  %217 = vmatpush1.msra.mxu0 %v121
  %218 = vmatprep.subr.mxu0 0.0
  %219 = vmatpush1.msra.mxu0 %v122
  %220 = vmatprep.subr.mxu0 0.0
  %221 = vmatpush1.msra.mxu0 %v123
  %222 = vmatprep.subr.mxu0 0.0
  %223 = vmatpush1.msra.mxu0 %v124
  %224 = vmatprep.subr.mxu0 0.0
  %225 = vmatpush1.msra.mxu0 %v125
  %226 = vmatprep.subr.mxu0 0.0
  %227 = vmatpush1.msra.mxu0 %v126
  %228 = vmatprep.subr.mxu0 0.0
  %229 = vmatpush1.msra.mxu0 %v127
  %230 = vmatprep.subr.mxu0 0.0
  %231 = vmatpush1.msra.mxu0 %v128
  %232 = vmatprep.mubr.f32.mxu0 %v18
  %233 = vmatmul.mubr.f32.gmra.mrb[0].mxu0 %v17
  %v234 = vpop.f32.mrb[0].mxu0
  %v235 = vadd.f32 %v166, %v234
  %v236 = vpop.f32.mrb[0].mxu0
  %237 = vmatprep.mubr.f32.mxu0 %v22
  %238 = vmatmul.mubr.f32.gmra.mrb[0].mxu0 %v21
  %v239 = vpop.f32.mrb[0].mxu0
  %v240 = vadd.f32 %v166, %v239
  %v241 = vpop.f32.mrb[0].mxu0
  %242 = vmatprep.mubr.f32.mxu0 %v26
  %243 = vmatmul.mubr.f32.gmra.mrb[0].mxu0 %v25
  %v244 = vpop.f32.mrb[0].mxu0
  %v245 = vadd.f32 %v166, %v244
  %v246 = vpop.f32.mrb[0].mxu0
  %247 = vmatprep.mubr.f32.mxu0 %v30
  %248 = vmatmul.mubr.f32.gmra.mrb[0].mxu0 %v29
  %v249 = vpop.f32.mrb[0].mxu0
  %v250 = vadd.f32 %v166, %v249
  %v251 = vpop.f32.mrb[0].mxu0
  %252 = vmatprep.mubr.f32.mxu0 %v34
  %253 = vmatmul.mubr.f32.gmra.mrb[0].mxu0 %v33
  %v254 = vpop.f32.mrb[0].mxu0
  %v255 = vadd.f32 %v166, %v254
  %v256 = vpop.f32.mrb[0].mxu0
  %257 = vmatprep.mubr.f32.mxu0 %v38
  %258 = vmatmul.mubr.f32.gmra.mrb[0].mxu0 %v37
  %v259 = vpop.f32.mrb[0].mxu0
  %v260 = vadd.f32 %v166, %v259
  %v261 = vpop.f32.mrb[0].mxu0
  %262 = vmatprep.mubr.f32.mxu0 %v42
  %263 = vmatmul.mubr.f32.gmra.mrb[0].mxu0 %v41
  %v264 = vpop.f32.mrb[0].mxu0
  %v265 = vadd.f32 %v166, %v264
  %v266 = vpop.f32.mrb[0].mxu0
  %267 = vmatprep.mubr.f32.mxu0 %v46
  %268 = vmatmul.mubr.f32.gmra.mrb[0].mxu0 %v45
  %v269 = vpop.f32.mrb[0].mxu0
  %v270 = vadd.f32 %v166, %v269
  %v271 = vpop.f32.mrb[0].mxu0
  %272 = vmatprep.mubr.f32.mxu0 %v50
  %273 = vmatmul.mubr.f32.gmra.mrb[0].mxu0 %v49
  %v274 = vpop.f32.mrb[0].mxu0
  %v275 = vadd.f32 %v166, %v274
  %v276 = vpop.f32.mrb[0].mxu0
  %277 = vmatprep.mubr.f32.mxu0 %v54
  %278 = vmatmul.mubr.f32.gmra.mrb[0].mxu0 %v53
  %v279 = vpop.f32.mrb[0].mxu0
  %v280 = vadd.f32 %v166, %v279
  %v281 = vpop.f32.mrb[0].mxu0
  %282 = vmatprep.mubr.f32.mxu0 %v58
  %283 = vmatmul.mubr.f32.gmra.mrb[0].mxu0 %v57
  %v284 = vpop.f32.mrb[0].mxu0
  %v285 = vadd.f32 %v166, %v284
  %v286 = vpop.f32.mrb[0].mxu0
  %287 = vmatprep.mubr.f32.mxu0 %v62
  %288 = vmatmul.mubr.f32.gmra.mrb[0].mxu0 %v61
  %v289 = vpop.f32.mrb[0].mxu0
  %v290 = vadd.f32 %v166, %v289
  %v291 = vpop.f32.mrb[0].mxu0
  %292 = vmatprep.mubr.f32.mxu0 %v66
  %293 = vmatmul.mubr.f32.gmra.mrb[0].mxu0 %v65
  %v294 = vpop.f32.mrb[0].mxu0
  %v295 = vadd.f32 %v166, %v294
  %v296 = vpop.f32.mrb[0].mxu0
  %297 = vmatprep.mubr.f32.mxu0 %v70
  %298 = vmatmul.mubr.f32.gmra.mrb[0].mxu0 %v69
  %v299 = vpop.f32.mrb[0].mxu0
  %v300 = vadd.f32 %v166, %v299
  %v301 = vpop.f32.mrb[0].mxu0
  %302 = vmatprep.mubr.f32.mxu0 %v74
  %303 = vmatmul.mubr.f32.gmra.mrb[0].mxu0 %v73
  %v304 = vpop.f32.mrb[0].mxu0
  %v305 = vadd.f32 %v166, %v304
  %v306 = vpop.f32.mrb[0].mxu0
  %307 = vmatprep.mubr.f32.mxu0 %v78
  %308 = vmatmul.mubr.f32.gmra.mrb[0].mxu0 %v77
  %v309 = vpop.f32.mrb[0].mxu0
  %v310 = vadd.f32 %v166, %v309
  %v311 = vpop.f32.mrb[0].mxu0
  %312 = vmatprep.mubr.f32.mxu0 %v82
  %313 = vmatmul.mubr.f32.gmra.mrb[0].mxu0 %v81
  %v314 = vpop.f32.mrb[0].mxu0
  %v315 = vadd.f32 %v166, %v314
  %v316 = vpop.f32.mrb[0].mxu0
  %317 = vmatprep.mubr.f32.mxu0 %v86
  %318 = vmatmul.mubr.f32.gmra.mrb[0].mxu0 %v85
  %v319 = vpop.f32.mrb[0].mxu0
  %v320 = vadd.f32 %v166, %v319
  %v321 = vpop.f32.mrb[0].mxu0
  %322 = vmatprep.mubr.f32.mxu0 %v90
  %323 = vmatmul.mubr.f32.gmra.mrb[0].mxu0 %v89
  %v324 = vpop.f32.mrb[0].mxu0
  %v325 = vadd.f32 %v166, %v324
  %v326 = vpop.f32.mrb[0].mxu0
  %327 = vmatprep.mubr.f32.mxu0 %v94
  %328 = vmatmul.mubr.f32.gmra.mrb[0].mxu0 %v93
  %v329 = vpop.f32.mrb[0].mxu0
  %v330 = vadd.f32 %v166, %v329
  %v331 = vpop.f32.mrb[0].mxu0
  %332 = vdwg.mxu0
  %333 = vmatprep.subr.mxu0 0.0
  %334 = vmatpush1.msra.mxu0 %v129
  %335 = vmatprep.subr.mxu0 0.0
  %336 = vmatpush1.msra.mxu0 %v130
  %337 = vmatprep.subr.mxu0 0.0
  %338 = vmatpush1.msra.mxu0 %v131
  %339 = vmatprep.subr.mxu0 0.0
  %340 = vmatpush1.msra.mxu0 %v132
  %341 = vmatprep.subr.mxu0 0.0
  %342 = vmatpush1.msra.mxu0 %v133
  %343 = vmatprep.subr.mxu0 0.0
  %344 = vmatpush1.msra.mxu0 %v134
  %345 = vmatprep.subr.mxu0 0.0
  %346 = vmatpush1.msra.mxu0 %v135
  %347 = vmatprep.subr.mxu0 0.0
  %348 = vmatpush1.msra.mxu0 %v136
  %349 = vmatprep.subr.mxu0 0.0
  %350 = vmatpush1.msra.mxu0 %v137
  %351 = vmatprep.subr.mxu0 0.0
  %352 = vmatpush1.msra.mxu0 %v138
  %353 = vmatprep.subr.mxu0 0.0
  %354 = vmatpush1.msra.mxu0 %v139
  %355 = vmatprep.subr.mxu0 0.0
  %356 = vmatpush1.msra.mxu0 %v140
  %357 = vmatprep.subr.mxu0 0.0
  %358 = vmatpush1.msra.mxu0 %v141
  %359 = vmatprep.subr.mxu0 0.0
  %360 = vmatpush1.msra.mxu0 %v142
  %361 = vmatprep.subr.mxu0 0.0
  %362 = vmatpush1.msra.mxu0 %v143
  %363 = vmatprep.subr.mxu0 0.0
  %364 = vmatpush1.msra.mxu0 %v144
  %365 = vmatprep.subr.mxu0 0.0
  %366 = vmatpush1.msra.mxu0 %v145
  %367 = vmatprep.subr.mxu0 0.0
  %368 = vmatpush1.msra.mxu0 %v146
  %369 = vmatprep.subr.mxu0 0.0
  %370 = vmatpush1.msra.mxu0 %v147
  %371 = vmatprep.subr.mxu0 0.0
  %372 = vmatpush1.msra.mxu0 %v148
  %373 = vmatprep.subr.mxu0 0.0
  %374 = vmatpush1.msra.mxu0 %v149
  %375 = vmatprep.subr.mxu0 0.0
  %376 = vmatpush1.msra.mxu0 %v150
  %377 = vmatprep.subr.mxu0 0.0
  %378 = vmatpush1.msra.mxu0 %v151
  %379 = vmatprep.subr.mxu0 0.0
  %380 = vmatpush1.msra.mxu0 %v152
  %381 = vmatprep.subr.mxu0 0.0
  %382 = vmatpush1.msra.mxu0 %v153
  %383 = vmatprep.subr.mxu0 0.0
  %384 = vmatpush1.msra.mxu0 %v154
  %385 = vmatprep.subr.mxu0 0.0
  %386 = vmatpush1.msra.mxu0 %v155
  %387 = vmatprep.subr.mxu0 0.0
  %388 = vmatpush1.msra.mxu0 %v156
  %389 = vmatprep.subr.mxu0 0.0
  %390 = vmatpush1.msra.mxu0 %v157
  %391 = vmatprep.subr.mxu0 0.0
  %392 = vmatpush1.msra.mxu0 %v158
  %393 = vmatprep.subr.mxu0 0.0
  %394 = vmatpush1.msra.mxu0 %v159
  %395 = vmatprep.subr.mxu0 0.0
  %396 = vmatpush1.msra.mxu0 %v160
  %397 = vmatprep.mubr.f32.mxu0 %v20
  %398 = vmatmul.mubr.f32.gmra.mrb[0].mxu0 %v19
  %v399 = vpop.f32.mrb[0].mxu0
  %v400 = vadd.f32 %v235, %v399
  %v401 = vpop.f32.mrb[0].mxu0
  %402 = vmatprep.mubr.f32.mxu0 %v24
  %403 = vmatmul.mubr.f32.gmra.mrb[0].mxu0 %v23
  %v404 = vpop.f32.mrb[0].mxu0
  %v405 = vadd.f32 %v240, %v404
  %v406 = vpop.f32.mrb[0].mxu0
  %407 = vmatprep.mubr.f32.mxu0 %v28
  %408 = vmatmul.mubr.f32.gmra.mrb[0].mxu0 %v27
  %v409 = vpop.f32.mrb[0].mxu0
  %v410 = vadd.f32 %v245, %v409
  %v411 = vpop.f32.mrb[0].mxu0
  %412 = vmatprep.mubr.f32.mxu0 %v32
  %413 = vmatmul.mubr.f32.gmra.mrb[0].mxu0 %v31
  %v414 = vpop.f32.mrb[0].mxu0
  %v415 = vadd.f32 %v250, %v414
  %v416 = vpop.f32.mrb[0].mxu0
  %417 = vmatprep.mubr.f32.mxu0 %v36
  %418 = vmatmul.mubr.f32.gmra.mrb[0].mxu0 %v35
  %v419 = vpop.f32.mrb[0].mxu0
  %v420 = vadd.f32 %v255, %v419
  %v421 = vpop.f32.mrb[0].mxu0
  %422 = vmatprep.mubr.f32.mxu0 %v40
  %423 = vmatmul.mubr.f32.gmra.mrb[0].mxu0 %v39
  %v424 = vpop.f32.mrb[0].mxu0
  %v425 = vadd.f32 %v260, %v424
  %v426 = vpop.f32.mrb[0].mxu0
  %427 = vmatprep.mubr.f32.mxu0 %v44
  %428 = vmatmul.mubr.f32.gmra.mrb[0].mxu0 %v43
  %v429 = vpop.f32.mrb[0].mxu0
  %v430 = vadd.f32 %v265, %v429
  %v431 = vpop.f32.mrb[0].mxu0
  %432 = vmatprep.mubr.f32.mxu0 %v48
  %433 = vmatmul.mubr.f32.gmra.mrb[0].mxu0 %v47
  %v434 = vpop.f32.mrb[0].mxu0
  %v435 = vadd.f32 %v270, %v434
  %v436 = vpop.f32.mrb[0].mxu0
  %437 = vmatprep.mubr.f32.mxu0 %v52
  %438 = vmatmul.mubr.f32.gmra.mrb[0].mxu0 %v51
  %v439 = vpop.f32.mrb[0].mxu0
  %v440 = vadd.f32 %v275, %v439
  %v441 = vpop.f32.mrb[0].mxu0
  %442 = vmatprep.mubr.f32.mxu0 %v56
  %443 = vmatmul.mubr.f32.gmra.mrb[0].mxu0 %v55
  %v444 = vpop.f32.mrb[0].mxu0
  %v445 = vadd.f32 %v280, %v444
  %v446 = vpop.f32.mrb[0].mxu0
  %447 = vmatprep.mubr.f32.mxu0 %v60
  %448 = vmatmul.mubr.f32.gmra.mrb[0].mxu0 %v59
  %v449 = vpop.f32.mrb[0].mxu0
  %v450 = vadd.f32 %v285, %v449
  %v451 = vpop.f32.mrb[0].mxu0
  %452 = vmatprep.mubr.f32.mxu0 %v64
  %453 = vmatmul.mubr.f32.gmra.mrb[0].mxu0 %v63
  %v454 = vpop.f32.mrb[0].mxu0
  %v455 = vadd.f32 %v290, %v454
  %v456 = vpop.f32.mrb[0].mxu0
  %457 = vmatprep.mubr.f32.mxu0 %v68
  %458 = vmatmul.mubr.f32.gmra.mrb[0].mxu0 %v67
  %v459 = vpop.f32.mrb[0].mxu0
  %v460 = vadd.f32 %v295, %v459
  %v461 = vpop.f32.mrb[0].mxu0
  %462 = vmatprep.mubr.f32.mxu0 %v72
  %463 = vmatmul.mubr.f32.gmra.mrb[0].mxu0 %v71
  %v464 = vpop.f32.mrb[0].mxu0
  %v465 = vadd.f32 %v300, %v464
  %v466 = vpop.f32.mrb[0].mxu0
  %467 = vmatprep.mubr.f32.mxu0 %v76
  %468 = vmatmul.mubr.f32.gmra.mrb[0].mxu0 %v75
  %v469 = vpop.f32.mrb[0].mxu0
  %v470 = vadd.f32 %v305, %v469
  %v471 = vpop.f32.mrb[0].mxu0
  %472 = vmatprep.mubr.f32.mxu0 %v80
  %473 = vmatmul.mubr.f32.gmra.mrb[0].mxu0 %v79
  %v474 = vpop.f32.mrb[0].mxu0
  %v475 = vadd.f32 %v310, %v474
  %v476 = vpop.f32.mrb[0].mxu0
  %477 = vmatprep.mubr.f32.mxu0 %v84
  %478 = vmatmul.mubr.f32.gmra.mrb[0].mxu0 %v83
  %v479 = vpop.f32.mrb[0].mxu0
  %v480 = vadd.f32 %v315, %v479
  %v481 = vpop.f32.mrb[0].mxu0
  %482 = vmatprep.mubr.f32.mxu0 %v88
  %483 = vmatmul.mubr.f32.gmra.mrb[0].mxu0 %v87
  %v484 = vpop.f32.mrb[0].mxu0
  %v485 = vadd.f32 %v320, %v484
  %v486 = vpop.f32.mrb[0].mxu0
  %487 = vmatprep.mubr.f32.mxu0 %v92
  %488 = vmatmul.mubr.f32.gmra.mrb[0].mxu0 %v91
  %v489 = vpop.f32.mrb[0].mxu0
  %v490 = vadd.f32 %v325, %v489
  %v491 = vpop.f32.mrb[0].mxu0
  %492 = vmatprep.mubr.f32.mxu0 %v96
  %493 = vmatmul.mubr.f32.gmra.mrb[0].mxu0 %v95
  %v494 = vpop.f32.mrb[0].mxu0
  %v495 = vadd.f32 %v330, %v494
  %v496 = vpop.f32.mrb[0].mxu0
  %497 = vdwg.mxu0
  %v498 = vld [vmem:[%s3] sm:$0xff]
  %v499 = vld [vmem:[%s3 + $0x8] sm:$0xff]
  %v500 = vld [vmem:[%s3 + $0x10] sm:$0xff]
  %v501 = vld [vmem:[%s3 + $0x18] sm:$0xff]
  %v502 = vld [vmem:[%s3 + $0x20] sm:$0xff]
  %v503 = vld [vmem:[%s3 + $0x28] sm:$0xff]
  %v504 = vld [vmem:[%s3 + $0x30] sm:$0xff]
  %v505 = vld [vmem:[%s3 + $0x38] sm:$0xff]
  %v506 = vld [vmem:[%s3 + $0x40] sm:$0xff]
  %v507 = vld [vmem:[%s3 + $0x48] sm:$0xff]
  %v508 = vld [vmem:[%s3 + $0x50] sm:$0xff]
  %v509 = vld [vmem:[%s3 + $0x58] sm:$0xff]
  %v510 = vld [vmem:[%s3 + $0x60] sm:$0xff]
  %v511 = vld [vmem:[%s3 + $0x68] sm:$0xff]
  %v512 = vld [vmem:[%s3 + $0x70] sm:$0xff]
  %v513 = vld [vmem:[%s3 + $0x78] sm:$0xff]
  %v514 = vld [vmem:[%s3 + $0x80] sm:$0xff]
  %v515 = vld [vmem:[%s3 + $0x88] sm:$0xff]
  %v516 = vld [vmem:[%s3 + $0x90] sm:$0xff]
  %v517 = vld [vmem:[%s3 + $0x98] sm:$0x3]
  %v518 = vadd.f32 %v400, %v498
  %v519 = vadd.f32 %v405, %v499
  %v520 = vadd.f32 %v410, %v500
  %v521 = vadd.f32 %v415, %v501
  %v522 = vadd.f32 %v420, %v502
  %v523 = vadd.f32 %v425, %v503
  %v524 = vadd.f32 %v430, %v504
  %v525 = vadd.f32 %v435, %v505
  %v526 = vadd.f32 %v440, %v506
  %v527 = vadd.f32 %v445, %v507
  %v528 = vadd.f32 %v450, %v508
  %v529 = vadd.f32 %v455, %v509
  %v530 = vadd.f32 %v460, %v510
  %v531 = vadd.f32 %v465, %v511
  %v532 = vadd.f32 %v470, %v512
  %v533 = vadd.f32 %v475, %v513
  %v534 = vadd.f32 %v480, %v514
  %v535 = vadd.f32 %v485, %v515
  %v536 = vadd.f32 %v490, %v516
  %v537 = vadd.f32 %v495, %v517
  %538 = vst [vmem:[%s4] sm:$0xff] %v518
  %539 = vst [vmem:[%s4 + $0x8] sm:$0xff] %v519
  %540 = vst [vmem:[%s4 + $0x10] sm:$0xff] %v520
  %541 = vst [vmem:[%s4 + $0x18] sm:$0xff] %v521
  %542 = vst [vmem:[%s4 + $0x20] sm:$0xff] %v522
  %543 = vst [vmem:[%s4 + $0x28] sm:$0xff] %v523
  %544 = vst [vmem:[%s4 + $0x30] sm:$0xff] %v524
  %545 = vst [vmem:[%s4 + $0x38] sm:$0xff] %v525
  %546 = vst [vmem:[%s4 + $0x40] sm:$0xff] %v526
  %547 = vst [vmem:[%s4 + $0x48] sm:$0xff] %v527
  %548 = vst [vmem:[%s4 + $0x50] sm:$0xff] %v528
  %549 = vst [vmem:[%s4 + $0x58] sm:$0xff] %v529
  %550 = vst [vmem:[%s4 + $0x60] sm:$0xff] %v530
  %551 = vst [vmem:[%s4 + $0x68] sm:$0xff] %v531
  %552 = vst [vmem:[%s4 + $0x70] sm:$0xff] %v532
  %553 = vst [vmem:[%s4 + $0x78] sm:$0xff] %v533
  %554 = vst [vmem:[%s4 + $0x80] sm:$0xff] %v534
  %555 = vst [vmem:[%s4 + $0x88] sm:$0xff] %v535
  %556 = vst [vmem:[%s4 + $0x90] sm:$0xff] %v536
  %557 = vst [vmem:[%s4 + $0x98] sm:$0x3] %v537
  // Predicated region
  $region18: #{_clip_text_forward.23} parent=0 // pred_check
    _
  $region19: #{_clip_text_forward.23} parent=0 // pred_check_branch
    %559 = sbr.rel (0) target = $region21
  $region20: #{_clip_text_forward.23} parent=0 // pred_region
    _
  $region21: #{_clip_text_forward.23} parent=0 // pred_fallthru
    _
  // Predicated region
  $region22: #{_clip_text_forward.23} parent=0 // pred_check
    _
  $region23: #{_clip_text_forward.23} parent=0 // pred_check_branch
    %561 = sbr.rel (0) target = $region25
  $region24: #{_clip_text_forward.23} parent=0 // pred_region
    _
  $region25: #{_clip_text_forward.23} parent=0 // pred_fallthru
    _

</llo_original>
